<compile_context>
chip_gen: v6e
topology: v6e:2x2x1
jax: 0.10.0
libtpu: 0.0.40
codegen_flags: <defaults>
</compile_context>

<pallas_src>
import functools

import jax
import jax.numpy as jnp
from jax.experimental import pallas as pl
from jax.experimental.pallas import tpu as pltpu

EPS = 1e-5
ACT_DTYPE = jnp.bfloat16      # storage / MXU-input dtype for activations & weights
_ROW_TILE_MAX = 512           # row tile cap; halve if porting huge shapes to v7x (64 MiB VMEM)


def _row_tile(m):
    for t in (_ROW_TILE_MAX, 256, 128, 64, 32, 16, 8):
        if m % t == 0:
            return t
    return m


_PARALLEL = pltpu.CompilerParams(dimension_semantics=("parallel",))


# ---------------------------------------------------------------------------
# Pallas kernels
# ---------------------------------------------------------------------------
def conv3x3_stats_kernel(x_ref, w_ref, y_ref, sum_ref, ssq_ref):
    # x_ref:   (1, H, W*Cin)   one image, lane-dense slab (bf16)
    # w_ref:   (3, W*Cin, W*Cout) banded weights (kh-major; kw + W-padding folded in)
    # y_ref:   (1, H, W*Cout)  pre-BN conv output (bf16)
    # sum/ssq: (1, 1, W*Cout)  per-image per-lane partial BN statistics (f32)
    x = x_ref[0]
    h = x.shape[0]
    zrow = jnp.zeros((1, x.shape[1]), x.dtype)
    x_up = jnp.concatenate([zrow, x[:h - 1, :]], axis=0)   # input row h-1 (kh=0), zero halo
    x_dn = jnp.concatenate([x[1:, :], zrow], axis=0)       # input row h+1 (kh=2), zero halo
    acc = jnp.dot(x_up, w_ref[0], preferred_element_type=jnp.float32)
    acc = acc + jnp.dot(x, w_ref[1], preferred_element_type=jnp.float32)
    acc = acc + jnp.dot(x_dn, w_ref[2], preferred_element_type=jnp.float32)
    y_ref[0] = acc.astype(y_ref.dtype)
    sum_ref[0] = jnp.sum(acc, axis=0, keepdims=True)
    ssq_ref[0] = jnp.sum(acc * acc, axis=0, keepdims=True)


def matmul_stats_kernel(x_ref, w_ref, y_ref, sum_ref, ssq_ref):
    # Generic row-tiled matmul + per-lane partial BN statistics.
    # x_ref: (TM, K)  w_ref: (K, L)  y_ref: (TM, L)  sum/ssq: (1, 1, L)
    acc = jnp.dot(x_ref[...], w_ref[...], preferred_element_type=jnp.float32)
    y_ref[...] = acc.astype(y_ref.dtype)
    sum_ref[0] = jnp.sum(acc, axis=0, keepdims=True)
    ssq_ref[0] = jnp.sum(acc * acc, axis=0, keepdims=True)


def bn_relu_kernel(y_ref, mean_ref, scale_ref, o_ref):
    # Lane-dense normalize + ReLU.  All math in f32 (v5e-friendly).
    y = y_ref[...].astype(jnp.float32)
    o = jnp.maximum((y - mean_ref[...]) * scale_ref[...], 0.0)
    o_ref[...] = o.astype(o_ref.dtype)


# ---------------------------------------------------------------------------
# Banded-weight construction (wrapper-side, tiny)
# ---------------------------------------------------------------------------
def _conv3_band(w, width):
    # w: (3, 3, Cin, Cout) taps (kh, kw, ci, co)  ->  (3, W*Cin, W*Cout)
    # Zero padding along W is encoded by simply omitting out-of-range taps.
    kw = jnp.arange(3)
    win = jnp.arange(width)
    wout = jnp.arange(width)
    sel = (win[None, :, None] == (wout[None, None, :] + kw[:, None, None] - 1))
    band = jnp.einsum('bvw,abio->aviwo', sel.astype(w.dtype), w)   # (3, W, Cin, W, Cout)
    cin, cout = w.shape[2], w.shape[3]
    return band.reshape(3, width * cin, width * cout)


def _down_band(w, width):
    # w: (2, 2, Cin, Cout) taps (dh, dw, ci, co); input rows pre-merged in pairs so
    # lane index = (dh, w_in, ci).  ->  (2*W*Cin, (W/2)*Cout)
    wo_n = width // 2
    dw = jnp.arange(2)
    win = jnp.arange(width)
    wo = jnp.arange(wo_n)
    sel = (win[None, :, None] == (2 * wo[None, None, :] + dw[:, None, None]))
    band = jnp.einsum('bvw,abio->aviwo', sel.astype(w.dtype), w)   # (2, W, Cin, Wo, Cout)
    cin, cout = w.shape[2], w.shape[3]
    return band.reshape(2 * width * cin, wo_n * cout)


def _up_band(w, ws_n):
    # w: (Cin, Cout, 2, 2)  PyTorch ConvTranspose2d layout (ci, co, dh, dw)
    # output lane index = (dh, w_out, co); the wrapper's free reshape then folds dh
    # into the output rows (the 2x spatial interleave).  ->  (Ws*Cin, 2*(2*Ws)*Cout)
    wout_n = 2 * ws_n
    dw = jnp.arange(2)
    ws = jnp.arange(ws_n)
    wout = jnp.arange(wout_n)
    sel = (wout[None, None, :] == (2 * ws[None, :, None] + dw[:, None, None]))
    band = jnp.einsum('bsw,ioab->siawo', sel.astype(w.dtype), w)   # (Ws, Cin, 2, Wout, Cout)
    cin, cout = w.shape[0], w.shape[1]
    return band.reshape(ws_n * cin, 2 * wout_n * cout)


# ---------------------------------------------------------------------------
# pallas_call wrappers
# ---------------------------------------------------------------------------
def _matmul_stats(x, w):
    m, k = x.shape
    l = w.shape[-1]
    tm = _row_tile(m)
    g = m // tm
    return pl.pallas_call(
        matmul_stats_kernel,
        grid=(g,),
        in_specs=[pl.BlockSpec((tm, k), lambda i: (i, 0)),
                  pl.BlockSpec((k, l), lambda i: (0, 0))],
        out_specs=(pl.BlockSpec((tm, l), lambda i: (i, 0)),
                   pl.BlockSpec((1, 1, l), lambda i: (i, 0, 0)),
                   pl.BlockSpec((1, 1, l), lambda i: (i, 0, 0))),
        out_shape=(jax.ShapeDtypeStruct((m, l), ACT_DTYPE),
                   jax.ShapeDtypeStruct((g, 1, l), jnp.float32),
                   jax.ShapeDtypeStruct((g, 1, l), jnp.float32)),
        compiler_params=_PARALLEL,
    )(x, w)


def _finalize_stats(sum_parts, ssq_parts, cout, count):
    # Tiny per-channel reduction of the per-tile lane statistics (XLA glue).
    l = sum_parts.shape[-1]
    rep = l // cout
    s = sum_parts.reshape(-1, l).sum(0).reshape(rep, cout).sum(0)
    q = ssq_parts.reshape(-1, l).sum(0).reshape(rep, cout).sum(0)
    mean = s / count
    var = jnp.maximum(q / count - mean * mean, 0.0)      # biased batch variance (PyTorch)
    return mean, jax.lax.rsqrt(var + EPS)


def _bn_relu(y, mean_c, scale_c):
    # y: (M, L) lane-dense slab; mean/scale per channel, tiled to per-lane vectors.
    m, l = y.shape
    rep = l // mean_c.shape[0]
    mean_l = jnp.tile(mean_c, rep)[None, :].astype(jnp.float32)
    scale_l = jnp.tile(scale_c, rep)[None, :].astype(jnp.float32)
    tm = _row_tile(m)
    return pl.pallas_call(
        bn_relu_kernel,
        grid=(m // tm,),
        in_specs=[pl.BlockSpec((tm, l), lambda i: (i, 0)),
                  pl.BlockSpec((1, l), lambda i: (0, 0)),
                  pl.BlockSpec((1, l), lambda i: (0, 0))],
        out_specs=pl.BlockSpec((tm, l), lambda i: (i, 0)),
        out_shape=jax.ShapeDtypeStruct((m, l), ACT_DTYPE),
        compiler_params=_PARALLEL,
    )(y, mean_l, scale_l)


# ---------------------------------------------------------------------------
# Layer wrappers (activations flow as (N*H, W*C) slabs)
# ---------------------------------------------------------------------------
def conv3x3_bn_relu(slab, n, h, w, cin, w_taps):
    cout = w_taps.shape[-1]
    k, l = w * cin, w * cout
    band = _conv3_band(w_taps, w).astype(ACT_DTYPE)
    x3 = slab.reshape(n, h, k)                       # free reshape
    y, s_p, q_p = pl.pallas_call(
        conv3x3_stats_kernel,
        grid=(n,),
        in_specs=[pl.BlockSpec((1, h, k), lambda i: (i, 0, 0)),
                  pl.BlockSpec((3, k, l), lambda i: (0, 0, 0))],
        out_specs=(pl.BlockSpec((1, h, l), lambda i: (i, 0, 0)),
                   pl.BlockSpec((1, 1, l), lambda i: (i, 0, 0)),
                   pl.BlockSpec((1, 1, l), lambda i: (i, 0, 0))),
        out_shape=(jax.ShapeDtypeStruct((n, h, l), ACT_DTYPE),
                   jax.ShapeDtypeStruct((n, 1, l), jnp.float32),
                   jax.ShapeDtypeStruct((n, 1, l), jnp.float32)),
        compiler_params=_PARALLEL,
    )(x3, band)
    mean_c, scale_c = _finalize_stats(s_p, q_p, cout, n * h * w)
    return _bn_relu(y.reshape(n * h, l), mean_c, scale_c)


def conv_down_bn_relu(slab, n, h, w, c, w_taps):
    # Conv2d(k=2, stride=2) + BN + ReLU.  Non-overlapping rows: merging row pairs is
    # a free contiguous reshape, then a single banded matmul.
    cout = w_taps.shape[-1]
    ho, wo = h // 2, w // 2
    band = _down_band(w_taps, w).astype(ACT_DTYPE)           # (2*W*C, Wo*Cout)
    x = slab.reshape(n * ho, 2 * w * c)                      # free reshape
    y, s_p, q_p = _matmul_stats(x, band)
    mean_c, scale_c = _finalize_stats(s_p, q_p, cout, n * ho * wo)
    return _bn_relu(y, mean_c, scale_c)


def convt_up_bn_relu(slab, n, hs, ws, cin, w_t):
    # ConvTranspose2d(k=2, stride=2) + BN + ReLU.  One banded matmul; the 2x spatial
    # interleave is a free contiguous reshape of the lane-dense result.
    cout = w_t.shape[1]
    hout, wout = 2 * hs, 2 * ws
    band = _up_band(w_t, ws).astype(ACT_DTYPE)               # (Ws*Cin, 2*Wout*Cout)
    y, s_p, q_p = _matmul_stats(slab, band)                  # slab: (N*Hs, Ws*Cin)
    mean_c, scale_c = _finalize_stats(s_p, q_p, cout, n * hout * wout)
    y = y.reshape(n * hout, wout * cout)                     # free interleave reshape
    return _bn_relu(y, mean_c, scale_c)


# ---------------------------------------------------------------------------
# Parameter init (deterministic, synthetic; biases omitted - exactly cancelled by BN)
# ---------------------------------------------------------------------------
def _normal(key, shape):
    return 0.1 * jax.random.normal(key, shape, jnp.float32)


def init_subnet2conv(key, cin, cout):
    k1, k2 = jax.random.split(key)
    return dict(w1=_normal(k1, (3, 3, cin, cout)),
                w2=_normal(k2, (3, 3, cout, cout)))


def init_net_recurse(key, n_in_channels, mult_chan=2, depth=0):
    n_out = n_in_channels * mult_chan
    ks = jax.random.split(key, 5)
    p = dict(depth=depth, more=init_subnet2conv(ks[0], n_in_channels, n_out))
    if depth > 0:
        p['down_w'] = _normal(ks[1], (2, 2, n_out, n_out))           # (dh, dw, ci, co)
        p['up_w'] = _normal(ks[2], (2 * n_out, n_out, 2, 2))         # (ci, co, kh, kw)
        p['less'] = init_subnet2conv(ks[3], 2 * n_out, n_out)
        p['sub'] = init_net_recurse(ks[4], n_out, mult_chan=2, depth=depth - 1)
    return p


# ---------------------------------------------------------------------------
# Forward pass (mirrors _Net_recurse.forward)
# ---------------------------------------------------------------------------
def subnet2conv_forward(p, slab, n, h, w, cin):
    c1 = p['w1'].shape[-1]
    slab = conv3x3_bn_relu(slab, n, h, w, cin, p['w1'])
    slab = conv3x3_bn_relu(slab, n, h, w, c1, p['w2'])
    return slab


def net_recurse_forward(p, slab, n, h, w, cin):
    cout = p['more']['w2'].shape[-1]
    x_more = subnet2conv_forward(p['more'], slab, n, h, w, cin)
    if p['depth'] == 0:
        return x_more
    x_down = conv_down_bn_relu(x_more, n, h, w, cout, p['down_w'])
    x_sub = net_recurse_forward(p['sub'], x_down, n, h // 2, w // 2, cout)
    x_up = convt_up_bn_relu(x_sub, n, h // 2, w // 2, 2 * cout, p['up_w'])
    # torch.cat(dim=1): per-pixel channel interleave of the two slabs (XLA glue)
    a = x_more.reshape(n * h, w, cout)
    b = x_up.reshape(n * h, w, cout)
    x_cat = jnp.concatenate([a, b], axis=-1).reshape(n * h, w * 2 * cout)
    return subnet2conv_forward(p['less'], x_cat, n, h, w, 2 * cout)


def forward_nchw(params, x_nchw):
    n, c, h, w = x_nchw.shape
    slab = (jnp.transpose(x_nchw, (0, 2, 3, 1))      # NCHW -> NHWC
            .reshape(n * h, w * c)                   # -> lane-dense slab (free)
            .astype(ACT_DTYPE))
    y = net_recurse_forward(params, slab, n, h, w, c)
    cout = params['more']['w2'].shape[-1]
    y = y.reshape(n, h, w, cout).astype(jnp.float32)
    return jnp.transpose(y, (0, 3, 1, 2))            # back to NCHW


# ---------------------------------------------------------------------------
if __name__ == "__main__":
    key = jax.random.PRNGKey(0)
    kp, kx = jax.random.split(key)

    N, C_IN, H, W = 2, 4, 16, 16
    DEPTH, MULT = 1, 2

    params = init_net_recurse(kp, C_IN, mult_chan=MULT, depth=DEPTH)
    x_nchw = jax.random.normal(kx, (N, C_IN, H, W), jnp.float32)

    fwd = jax.jit(functools.partial(forward_nchw, params))
    y_nchw = fwd(x_nchw)
    jax.block_until_ready(y_nchw)

    assert y_nchw.shape == (N, C_IN * MULT, H, W), y_nchw.shape
    assert bool(jnp.all(jnp.isfinite(y_nchw)))
    print("KERNEL_OK")
</pallas_src>

<mosaic_0001>
module attributes {stable_mosaic.version = 11 : i64} {
  func.func @conv3x3_stats_kernel(%arg0: i32, %arg1: memref<1x16x64xbf16, #tpu.memory_space<vmem>>, %arg2: memref<3x64x128xbf16, #tpu.memory_space<vmem>>, %arg3: memref<1x16x128xbf16, #tpu.memory_space<vmem>>, %arg4: memref<1x1x128xf32, #tpu.memory_space<vmem>>, %arg5: memref<1x1x128xf32, #tpu.memory_space<vmem>>) attributes {dimension_semantics = [#tpu.dimension_semantics<parallel>], iteration_bounds = array<i64: 2>, scalar_prefetch = 0 : i64, scratch_operands = 0 : i64, tpu.core_type = #tpu.core_type<tc>, window_params = [{transform_indices = @transform_0, window_bounds = array<i64: 1, 16, 64>}, {pipeline_mode = #tpu.pipeline_mode<synchronous>, transform_indices = @transform_1, window_bounds = array<i64: 3, 64, 128>}, {transform_indices = @transform_2, window_bounds = array<i64: 1, 16, 128>}, {transform_indices = @transform_3, window_bounds = array<i64: 1, 1, 128>}, {transform_indices = @transform_4, window_bounds = array<i64: 1, 1, 128>}]} {
    %c0 = arith.constant 0 : index
    %c0_0 = arith.constant 0 : index
    %c0_1 = arith.constant 0 : index
    %0 = vector.load %arg1[%c0, %c0_0, %c0_1] : memref<1x16x64xbf16, #tpu.memory_space<vmem>>, vector<1x16x64xbf16>
    %1 = vector.shape_cast %0 : vector<1x16x64xbf16> to vector<16x64xbf16>
    %cst = arith.constant 0.000000e+00 : bf16
    %2 = vector.broadcast %cst : bf16 to vector<1x64xbf16>
    %3 = vector.extract_strided_slice %1 {offsets = [0, 0], sizes = [15, 64], strides = [1, 1]} : vector<16x64xbf16> to vector<15x64xbf16>
    %4 = tpu.concatenate %2, %3 in 0 : vector<1x64xbf16>, vector<15x64xbf16> -> vector<16x64xbf16>
    %5 = vector.extract_strided_slice %1 {offsets = [1, 0], sizes = [15, 64], strides = [1, 1]} : vector<16x64xbf16> to vector<15x64xbf16>
    %6 = tpu.concatenate %5, %2 in 0 : vector<15x64xbf16>, vector<1x64xbf16> -> vector<16x64xbf16>
    %c0_2 = arith.constant 0 : index
    %c0_3 = arith.constant 0 : index
    %c0_4 = arith.constant 0 : index
    %7 = vector.load %arg2[%c0_2, %c0_3, %c0_4] : memref<3x64x128xbf16, #tpu.memory_space<vmem>>, vector<1x64x128xbf16>
    %8 = vector.shape_cast %7 : vector<1x64x128xbf16> to vector<64x128xbf16>
    %cst_5 = arith.constant dense<0.000000e+00> : vector<16x128xf32>
    %9 = tpu.matmul %4, %8, %cst_5 {dimension_numbers = #tpu.dot_dimension_numbers<[1], [0], [0], [1], [0, 0, 1, 1], [], []>} : vector<16x64xbf16>, vector<64x128xbf16>, vector<16x128xf32> -> vector<16x128xf32>
    %c1 = arith.constant 1 : index
    %c0_6 = arith.constant 0 : index
    %c0_7 = arith.constant 0 : index
    %10 = vector.load %arg2[%c1, %c0_6, %c0_7] : memref<3x64x128xbf16, #tpu.memory_space<vmem>>, vector<1x64x128xbf16>
    %11 = vector.shape_cast %10 : vector<1x64x128xbf16> to vector<64x128xbf16>
    %cst_8 = arith.constant dense<0.000000e+00> : vector<16x128xf32>
    %12 = tpu.matmul %1, %11, %cst_8 {dimension_numbers = #tpu.dot_dimension_numbers<[1], [0], [0], [1], [0, 0, 1, 1], [], []>} : vector<16x64xbf16>, vector<64x128xbf16>, vector<16x128xf32> -> vector<16x128xf32>
    %13 = arith.addf %9, %12 : vector<16x128xf32>
    %c2 = arith.constant 2 : index
    %c0_9 = arith.constant 0 : index
    %c0_10 = arith.constant 0 : index
    %14 = vector.load %arg2[%c2, %c0_9, %c0_10] : memref<3x64x128xbf16, #tpu.memory_space<vmem>>, vector<1x64x128xbf16>
    %15 = vector.shape_cast %14 : vector<1x64x128xbf16> to vector<64x128xbf16>
    %cst_11 = arith.constant dense<0.000000e+00> : vector<16x128xf32>
    %16 = tpu.matmul %6, %15, %cst_11 {dimension_numbers = #tpu.dot_dimension_numbers<[1], [0], [0], [1], [0, 0, 1, 1], [], []>} : vector<16x64xbf16>, vector<64x128xbf16>, vector<16x128xf32> -> vector<16x128xf32>
    %17 = arith.addf %13, %16 : vector<16x128xf32>
    %18 = arith.truncf %17 : vector<16x128xf32> to vector<16x128xbf16>
    %c0_12 = arith.constant 0 : index
    %c0_13 = arith.constant 0 : index
    %c0_14 = arith.constant 0 : index
    %19 = vector.load %arg3[%c0_12, %c0_13, %c0_14] : memref<1x16x128xbf16, #tpu.memory_space<vmem>>, vector<1x16x128xbf16>
    %20 = vector.shape_cast %19 : vector<1x16x128xbf16> to vector<16x128xbf16>
    %21 = vector.shape_cast %18 : vector<16x128xbf16> to vector<1x16x128xbf16>
    tpu.vector_store %arg3[%c0_12, %c0_13, %c0_14], %21 {strides = array<i32>} : memref<1x16x128xbf16, #tpu.memory_space<vmem>>, vector<1x16x128xbf16>,
    %cst_15 = arith.constant dense<0.000000e+00> : vector<128xf32>
    %22 = vector.multi_reduction <add>, %17, %cst_15 [0] : vector<16x128xf32> to vector<128xf32>
    %23 = vector.shape_cast %22 : vector<128xf32> to vector<1x128xf32>
    %c0_16 = arith.constant 0 : index
    %c0_17 = arith.constant 0 : index
    %c0_18 = arith.constant 0 : index
    %24 = vector.load %arg4[%c0_16, %c0_17, %c0_18] : memref<1x1x128xf32, #tpu.memory_space<vmem>>, vector<1x1x128xf32>
    %25 = vector.shape_cast %24 : vector<1x1x128xf32> to vector<1x128xf32>
    %26 = vector.shape_cast %23 : vector<1x128xf32> to vector<1x1x128xf32>
    tpu.vector_store %arg4[%c0_16, %c0_17, %c0_18], %26 {strides = array<i32>} : memref<1x1x128xf32, #tpu.memory_space<vmem>>, vector<1x1x128xf32>,
    %27 = arith.mulf %17, %17 : vector<16x128xf32>
    %cst_19 = arith.constant dense<0.000000e+00> : vector<128xf32>
    %28 = vector.multi_reduction <add>, %27, %cst_19 [0] : vector<16x128xf32> to vector<128xf32>
    %29 = vector.shape_cast %28 : vector<128xf32> to vector<1x128xf32>
    %c0_20 = arith.constant 0 : index
    %c0_21 = arith.constant 0 : index
    %c0_22 = arith.constant 0 : index
    %30 = vector.load %arg5[%c0_20, %c0_21, %c0_22] : memref<1x1x128xf32, #tpu.memory_space<vmem>>, vector<1x1x128xf32>
    %31 = vector.shape_cast %30 : vector<1x1x128xf32> to vector<1x128xf32>
    %32 = vector.shape_cast %29 : vector<1x128xf32> to vector<1x1x128xf32>
    tpu.vector_store %arg5[%c0_20, %c0_21, %c0_22], %32 {strides = array<i32>} : memref<1x1x128xf32, #tpu.memory_space<vmem>>, vector<1x1x128xf32>,
    return
  }
  func.func @transform_0(%arg0: i32) -> (i32, i32, i32) {
    %c0_i32 = arith.constant 0 : i32
    %c0_i32_0 = arith.constant 0 : i32
    %c0_i32_1 = arith.constant 0 : i32
    return %arg0, %c0_i32, %c0_i32_0 : i32, i32, i32
  }
  func.func @transform_1(%arg0: i32) -> (i32, i32, i32) {
    %c0_i32 = arith.constant 0 : i32
    %c0_i32_0 = arith.constant 0 : i32
    %c0_i32_1 = arith.constant 0 : i32
    %c0_i32_2 = arith.constant 0 : i32
    return %c0_i32, %c0_i32_0, %c0_i32_1 : i32, i32, i32
  }
  func.func @transform_2(%arg0: i32) -> (i32, i32, i32) {
    %c0_i32 = arith.constant 0 : i32
    %c0_i32_0 = arith.constant 0 : i32
    %c0_i32_1 = arith.constant 0 : i32
    return %arg0, %c0_i32, %c0_i32_0 : i32, i32, i32
  }
  func.func @transform_3(%arg0: i32) -> (i32, i32, i32) {
    %c0_i32 = arith.constant 0 : i32
    %c0_i32_0 = arith.constant 0 : i32
    %c0_i32_1 = arith.constant 0 : i32
    return %arg0, %c0_i32, %c0_i32_0 : i32, i32, i32
  }
  func.func @transform_4(%arg0: i32) -> (i32, i32, i32) {
    %c0_i32 = arith.constant 0 : i32
    %c0_i32_0 = arith.constant 0 : i32
    %c0_i32_1 = arith.constant 0 : i32
    return %arg0, %c0_i32, %c0_i32_0 : i32, i32, i32
  }
}

module attributes {stable_mosaic.version = 11 : i64} {
  func.func @bn_relu_kernel(%arg0: i32, %arg1: memref<32x128xbf16, #tpu.memory_space<vmem>>, %arg2: memref<1x128xf32, #tpu.memory_space<vmem>>, %arg3: memref<1x128xf32, #tpu.memory_space<vmem>>, %arg4: memref<32x128xbf16, #tpu.memory_space<vmem>>) attributes {dimension_semantics = [#tpu.dimension_semantics<parallel>], iteration_bounds = array<i64: 1>, scalar_prefetch = 0 : i64, scratch_operands = 0 : i64, tpu.core_type = #tpu.core_type<tc>, window_params = [{transform_indices = @transform_0, window_bounds = array<i64: 32, 128>}, {pipeline_mode = #tpu.pipeline_mode<synchronous>, transform_indices = @transform_1, window_bounds = array<i64: 1, 128>}, {pipeline_mode = #tpu.pipeline_mode<synchronous>, transform_indices = @transform_2, window_bounds = array<i64: 1, 128>}, {transform_indices = @transform_3, window_bounds = array<i64: 32, 128>}]} {
    %c0 = arith.constant 0 : index
    %c0_0 = arith.constant 0 : index
    %0 = vector.load %arg1[%c0, %c0_0] : memref<32x128xbf16, #tpu.memory_space<vmem>>, vector<32x128xbf16>
    %1 = arith.extf %0 : vector<32x128xbf16> to vector<32x128xf32>
    %c0_1 = arith.constant 0 : index
    %c0_2 = arith.constant 0 : index
    %2 = vector.load %arg2[%c0_1, %c0_2] : memref<1x128xf32, #tpu.memory_space<vmem>>, vector<1x128xf32>
    %3 = vector.broadcast %2 : vector<1x128xf32> to vector<32x128xf32>
    %4 = arith.subf %1, %3 : vector<32x128xf32>
    %c0_3 = arith.constant 0 : index
    %c0_4 = arith.constant 0 : index
    %5 = vector.load %arg3[%c0_3, %c0_4] : memref<1x128xf32, #tpu.memory_space<vmem>>, vector<1x128xf32>
    %6 = vector.broadcast %5 : vector<1x128xf32> to vector<32x128xf32>
    %7 = arith.mulf %4, %6 : vector<32x128xf32>
    %cst = arith.constant 0.000000e+00 : f32
    %8 = vector.broadcast %cst : f32 to vector<32x128xf32>
    %9 = arith.maximumf %7, %8 : vector<32x128xf32>
    %10 = arith.truncf %9 : vector<32x128xf32> to vector<32x128xbf16>
    %c0_5 = arith.constant 0 : index
    %c0_6 = arith.constant 0 : index
    %11 = vector.load %arg4[%c0_5, %c0_6] : memref<32x128xbf16, #tpu.memory_space<vmem>>, vector<32x128xbf16>
    tpu.vector_store %arg4[%c0_5, %c0_6], %10 {strides = array<i32>} : memref<32x128xbf16, #tpu.memory_space<vmem>>, vector<32x128xbf16>,
    return
  }
  func.func @transform_0(%arg0: i32) -> (i32, i32) {
    %c0_i32 = arith.constant 0 : i32
    %c0_i32_0 = arith.constant 0 : i32
    return %arg0, %c0_i32 : i32, i32
  }
  func.func @transform_1(%arg0: i32) -> (i32, i32) {
    %c0_i32 = arith.constant 0 : i32
    %c0_i32_0 = arith.constant 0 : i32
    %c0_i32_1 = arith.constant 0 : i32
    return %c0_i32, %c0_i32_0 : i32, i32
  }
  func.func @transform_2(%arg0: i32) -> (i32, i32) {
    %c0_i32 = arith.constant 0 : i32
    %c0_i32_0 = arith.constant 0 : i32
    %c0_i32_1 = arith.constant 0 : i32
    return %c0_i32, %c0_i32_0 : i32, i32
  }
  func.func @transform_3(%arg0: i32) -> (i32, i32) {
    %c0_i32 = arith.constant 0 : i32
    %c0_i32_0 = arith.constant 0 : i32
    return %arg0, %c0_i32 : i32, i32
  }
}

module attributes {stable_mosaic.version = 11 : i64} {
  func.func @conv3x3_stats_kernel(%arg0: i32, %arg1: memref<1x16x128xbf16, #tpu.memory_space<vmem>>, %arg2: memref<3x128x128xbf16, #tpu.memory_space<vmem>>, %arg3: memref<1x16x128xbf16, #tpu.memory_space<vmem>>, %arg4: memref<1x1x128xf32, #tpu.memory_space<vmem>>, %arg5: memref<1x1x128xf32, #tpu.memory_space<vmem>>) attributes {dimension_semantics = [#tpu.dimension_semantics<parallel>], iteration_bounds = array<i64: 2>, scalar_prefetch = 0 : i64, scratch_operands = 0 : i64, tpu.core_type = #tpu.core_type<tc>, window_params = [{transform_indices = @transform_0, window_bounds = array<i64: 1, 16, 128>}, {pipeline_mode = #tpu.pipeline_mode<synchronous>, transform_indices = @transform_1, window_bounds = array<i64: 3, 128, 128>}, {transform_indices = @transform_2, window_bounds = array<i64: 1, 16, 128>}, {transform_indices = @transform_3, window_bounds = array<i64: 1, 1, 128>}, {transform_indices = @transform_4, window_bounds = array<i64: 1, 1, 128>}]} {
    %c0 = arith.constant 0 : index
    %c0_0 = arith.constant 0 : index
    %c0_1 = arith.constant 0 : index
    %0 = vector.load %arg1[%c0, %c0_0, %c0_1] : memref<1x16x128xbf16, #tpu.memory_space<vmem>>, vector<1x16x128xbf16>
    %1 = vector.shape_cast %0 : vector<1x16x128xbf16> to vector<16x128xbf16>
    %cst = arith.constant 0.000000e+00 : bf16
    %2 = vector.broadcast %cst : bf16 to vector<1x128xbf16>
    %3 = vector.extract_strided_slice %1 {offsets = [0, 0], sizes = [15, 128], strides = [1, 1]} : vector<16x128xbf16> to vector<15x128xbf16>
    %4 = tpu.concatenate %2, %3 in 0 : vector<1x128xbf16>, vector<15x128xbf16> -> vector<16x128xbf16>
    %5 = vector.extract_strided_slice %1 {offsets = [1, 0], sizes = [15, 128], strides = [1, 1]} : vector<16x128xbf16> to vector<15x128xbf16>
    %6 = tpu.concatenate %5, %2 in 0 : vector<15x128xbf16>, vector<1x128xbf16> -> vector<16x128xbf16>
    %c0_2 = arith.constant 0 : index
    %c0_3 = arith.constant 0 : index
    %c0_4 = arith.constant 0 : index
    %7 = vector.load %arg2[%c0_2, %c0_3, %c0_4] : memref<3x128x128xbf16, #tpu.memory_space<vmem>>, vector<1x128x128xbf16>
    %8 = vector.shape_cast %7 : vector<1x128x128xbf16> to vector<128x128xbf16>
    %cst_5 = arith.constant dense<0.000000e+00> : vector<16x128xf32>
    %9 = tpu.matmul %4, %8, %cst_5 {dimension_numbers = #tpu.dot_dimension_numbers<[1], [0], [0], [1], [0, 0, 1, 1], [], []>} : vector<16x128xbf16>, vector<128x128xbf16>, vector<16x128xf32> -> vector<16x128xf32>
    %c1 = arith.constant 1 : index
    %c0_6 = arith.constant 0 : index
    %c0_7 = arith.constant 0 : index
    %10 = vector.load %arg2[%c1, %c0_6, %c0_7] : memref<3x128x128xbf16, #tpu.memory_space<vmem>>, vector<1x128x128xbf16>
    %11 = vector.shape_cast %10 : vector<1x128x128xbf16> to vector<128x128xbf16>
    %cst_8 = arith.constant dense<0.000000e+00> : vector<16x128xf32>
    %12 = tpu.matmul %1, %11, %cst_8 {dimension_numbers = #tpu.dot_dimension_numbers<[1], [0], [0], [1], [0, 0, 1, 1], [], []>} : vector<16x128xbf16>, vector<128x128xbf16>, vector<16x128xf32> -> vector<16x128xf32>
    %13 = arith.addf %9, %12 : vector<16x128xf32>
    %c2 = arith.constant 2 : index
    %c0_9 = arith.constant 0 : index
    %c0_10 = arith.constant 0 : index
    %14 = vector.load %arg2[%c2, %c0_9, %c0_10] : memref<3x128x128xbf16, #tpu.memory_space<vmem>>, vector<1x128x128xbf16>
    %15 = vector.shape_cast %14 : vector<1x128x128xbf16> to vector<128x128xbf16>
    %cst_11 = arith.constant dense<0.000000e+00> : vector<16x128xf32>
    %16 = tpu.matmul %6, %15, %cst_11 {dimension_numbers = #tpu.dot_dimension_numbers<[1], [0], [0], [1], [0, 0, 1, 1], [], []>} : vector<16x128xbf16>, vector<128x128xbf16>, vector<16x128xf32> -> vector<16x128xf32>
    %17 = arith.addf %13, %16 : vector<16x128xf32>
    %18 = arith.truncf %17 : vector<16x128xf32> to vector<16x128xbf16>
    %c0_12 = arith.constant 0 : index
    %c0_13 = arith.constant 0 : index
    %c0_14 = arith.constant 0 : index
    %19 = vector.load %arg3[%c0_12, %c0_13, %c0_14] : memref<1x16x128xbf16, #tpu.memory_space<vmem>>, vector<1x16x128xbf16>
    %20 = vector.shape_cast %19 : vector<1x16x128xbf16> to vector<16x128xbf16>
    %21 = vector.shape_cast %18 : vector<16x128xbf16> to vector<1x16x128xbf16>
    tpu.vector_store %arg3[%c0_12, %c0_13, %c0_14], %21 {strides = array<i32>} : memref<1x16x128xbf16, #tpu.memory_space<vmem>>, vector<1x16x128xbf16>,
    %cst_15 = arith.constant dense<0.000000e+00> : vector<128xf32>
    %22 = vector.multi_reduction <add>, %17, %cst_15 [0] : vector<16x128xf32> to vector<128xf32>
    %23 = vector.shape_cast %22 : vector<128xf32> to vector<1x128xf32>
    %c0_16 = arith.constant 0 : index
    %c0_17 = arith.constant 0 : index
    %c0_18 = arith.constant 0 : index
    %24 = vector.load %arg4[%c0_16, %c0_17, %c0_18] : memref<1x1x128xf32, #tpu.memory_space<vmem>>, vector<1x1x128xf32>
    %25 = vector.shape_cast %24 : vector<1x1x128xf32> to vector<1x128xf32>
    %26 = vector.shape_cast %23 : vector<1x128xf32> to vector<1x1x128xf32>
    tpu.vector_store %arg4[%c0_16, %c0_17, %c0_18], %26 {strides = array<i32>} : memref<1x1x128xf32, #tpu.memory_space<vmem>>, vector<1x1x128xf32>,
    %27 = arith.mulf %17, %17 : vector<16x128xf32>
    %cst_19 = arith.constant dense<0.000000e+00> : vector<128xf32>
    %28 = vector.multi_reduction <add>, %27, %cst_19 [0] : vector<16x128xf32> to vector<128xf32>
    %29 = vector.shape_cast %28 : vector<128xf32> to vector<1x128xf32>
    %c0_20 = arith.constant 0 : index
    %c0_21 = arith.constant 0 : index
    %c0_22 = arith.constant 0 : index
    %30 = vector.load %arg5[%c0_20, %c0_21, %c0_22] : memref<1x1x128xf32, #tpu.memory_space<vmem>>, vector<1x1x128xf32>
    %31 = vector.shape_cast %30 : vector<1x1x128xf32> to vector<1x128xf32>
    %32 = vector.shape_cast %29 : vector<1x128xf32> to vector<1x1x128xf32>
    tpu.vector_store %arg5[%c0_20, %c0_21, %c0_22], %32 {strides = array<i32>} : memref<1x1x128xf32, #tpu.memory_space<vmem>>, vector<1x1x128xf32>,
    return
  }
  func.func @transform_0(%arg0: i32) -> (i32, i32, i32) {
    %c0_i32 = arith.constant 0 : i32
    %c0_i32_0 = arith.constant 0 : i32
    %c0_i32_1 = arith.constant 0 : i32
    return %arg0, %c0_i32, %c0_i32_0 : i32, i32, i32
  }
  func.func @transform_1(%arg0: i32) -> (i32, i32, i32) {
    %c0_i32 = arith.constant 0 : i32
    %c0_i32_0 = arith.constant 0 : i32
    %c0_i32_1 = arith.constant 0 : i32
    %c0_i32_2 = arith.constant 0 : i32
    return %c0_i32, %c0_i32_0, %c0_i32_1 : i32, i32, i32
  }
  func.func @transform_2(%arg0: i32) -> (i32, i32, i32) {
    %c0_i32 = arith.constant 0 : i32
    %c0_i32_0 = arith.constant 0 : i32
    %c0_i32_1 = arith.constant 0 : i32
    return %arg0, %c0_i32, %c0_i32_0 : i32, i32, i32
  }
  func.func @transform_3(%arg0: i32) -> (i32, i32, i32) {
    %c0_i32 = arith.constant 0 : i32
    %c0_i32_0 = arith.constant 0 : i32
    %c0_i32_1 = arith.constant 0 : i32
    return %arg0, %c0_i32, %c0_i32_0 : i32, i32, i32
  }
  func.func @transform_4(%arg0: i32) -> (i32, i32, i32) {
    %c0_i32 = arith.constant 0 : i32
    %c0_i32_0 = arith.constant 0 : i32
    %c0_i32_1 = arith.constant 0 : i32
    return %arg0, %c0_i32, %c0_i32_0 : i32, i32, i32
  }
}

module attributes {stable_mosaic.version = 11 : i64} {
  func.func @matmul_stats_kernel(%arg0: i32, %arg1: memref<16x256xbf16, #tpu.memory_space<vmem>>, %arg2: memref<256x64xbf16, #tpu.memory_space<vmem>>, %arg3: memref<16x64xbf16, #tpu.memory_space<vmem>>, %arg4: memref<1x1x64xf32, #tpu.memory_space<vmem>>, %arg5: memref<1x1x64xf32, #tpu.memory_space<vmem>>) attributes {dimension_semantics = [#tpu.dimension_semantics<parallel>], iteration_bounds = array<i64: 1>, scalar_prefetch = 0 : i64, scratch_operands = 0 : i64, tpu.core_type = #tpu.core_type<tc>, window_params = [{transform_indices = @transform_0, window_bounds = array<i64: 16, 256>}, {pipeline_mode = #tpu.pipeline_mode<synchronous>, transform_indices = @transform_1, window_bounds = array<i64: 256, 64>}, {transform_indices = @transform_2, window_bounds = array<i64: 16, 64>}, {transform_indices = @transform_3, window_bounds = array<i64: 1, 1, 64>}, {transform_indices = @transform_4, window_bounds = array<i64: 1, 1, 64>}]} {
    %c0 = arith.constant 0 : index
    %c0_0 = arith.constant 0 : index
    %0 = vector.load %arg1[%c0, %c0_0] : memref<16x256xbf16, #tpu.memory_space<vmem>>, vector<16x256xbf16>
    %c0_1 = arith.constant 0 : index
    %c0_2 = arith.constant 0 : index
    %1 = vector.load %arg2[%c0_1, %c0_2] : memref<256x64xbf16, #tpu.memory_space<vmem>>, vector<256x64xbf16>
    %cst = arith.constant dense<0.000000e+00> : vector<16x64xf32>
    %2 = tpu.matmul %0, %1, %cst {dimension_numbers = #tpu.dot_dimension_numbers<[1], [0], [0], [1], [0, 0, 1, 1], [], []>} : vector<16x256xbf16>, vector<256x64xbf16>, vector<16x64xf32> -> vector<16x64xf32>
    %3 = arith.truncf %2 : vector<16x64xf32> to vector<16x64xbf16>
    %c0_3 = arith.constant 0 : index
    %c0_4 = arith.constant 0 : index
    %4 = vector.load %arg3[%c0_3, %c0_4] : memref<16x64xbf16, #tpu.memory_space<vmem>>, vector<16x64xbf16>
    tpu.vector_store %arg3[%c0_3, %c0_4], %3 {strides = array<i32>} : memref<16x64xbf16, #tpu.memory_space<vmem>>, vector<16x64xbf16>,
    %cst_5 = arith.constant dense<0.000000e+00> : vector<64xf32>
    %5 = vector.multi_reduction <add>, %2, %cst_5 [0] : vector<16x64xf32> to vector<64xf32>
    %6 = vector.shape_cast %5 : vector<64xf32> to vector<1x64xf32>
    %c0_6 = arith.constant 0 : index
    %c0_7 = arith.constant 0 : index
    %c0_8 = arith.constant 0 : index
    %7 = vector.load %arg4[%c0_6, %c0_7, %c0_8] : memref<1x1x64xf32, #tpu.memory_space<vmem>>, vector<1x1x64xf32>
    %8 = vector.shape_cast %7 : vector<1x1x64xf32> to vector<1x64xf32>
    %9 = vector.shape_cast %6 : vector<1x64xf32> to vector<1x1x64xf32>
    tpu.vector_store %arg4[%c0_6, %c0_7, %c0_8], %9 {strides = array<i32>} : memref<1x1x64xf32, #tpu.memory_space<vmem>>, vector<1x1x64xf32>,
    %10 = arith.mulf %2, %2 : vector<16x64xf32>
    %cst_9 = arith.constant dense<0.000000e+00> : vector<64xf32>
    %11 = vector.multi_reduction <add>, %10, %cst_9 [0] : vector<16x64xf32> to vector<64xf32>
    %12 = vector.shape_cast %11 : vector<64xf32> to vector<1x64xf32>
    %c0_10 = arith.constant 0 : index
    %c0_11 = arith.constant 0 : index
    %c0_12 = arith.constant 0 : index
    %13 = vector.load %arg5[%c0_10, %c0_11, %c0_12] : memref<1x1x64xf32, #tpu.memory_space<vmem>>, vector<1x1x64xf32>
    %14 = vector.shape_cast %13 : vector<1x1x64xf32> to vector<1x64xf32>
    %15 = vector.shape_cast %12 : vector<1x64xf32> to vector<1x1x64xf32>
    tpu.vector_store %arg5[%c0_10, %c0_11, %c0_12], %15 {strides = array<i32>} : memref<1x1x64xf32, #tpu.memory_space<vmem>>, vector<1x1x64xf32>,
    return
  }
  func.func @transform_0(%arg0: i32) -> (i32, i32) {
    %c0_i32 = arith.constant 0 : i32
    %c0_i32_0 = arith.constant 0 : i32
    return %arg0, %c0_i32 : i32, i32
  }
  func.func @transform_1(%arg0: i32) -> (i32, i32) {
    %c0_i32 = arith.constant 0 : i32
    %c0_i32_0 = arith.constant 0 : i32
    %c0_i32_1 = arith.constant 0 : i32
    return %c0_i32, %c0_i32_0 : i32, i32
  }
  func.func @transform_2(%arg0: i32) -> (i32, i32) {
    %c0_i32 = arith.constant 0 : i32
    %c0_i32_0 = arith.constant 0 : i32
    return %arg0, %c0_i32 : i32, i32
  }
  func.func @transform_3(%arg0: i32) -> (i32, i32, i32) {
    %c0_i32 = arith.constant 0 : i32
    %c0_i32_0 = arith.constant 0 : i32
    %c0_i32_1 = arith.constant 0 : i32
    return %arg0, %c0_i32, %c0_i32_0 : i32, i32, i32
  }
  func.func @transform_4(%arg0: i32) -> (i32, i32, i32) {
    %c0_i32 = arith.constant 0 : i32
    %c0_i32_0 = arith.constant 0 : i32
    %c0_i32_1 = arith.constant 0 : i32
    return %arg0, %c0_i32, %c0_i32_0 : i32, i32, i32
  }
}

module attributes {stable_mosaic.version = 11 : i64} {
  func.func @bn_relu_kernel(%arg0: i32, %arg1: memref<16x64xbf16, #tpu.memory_space<vmem>>, %arg2: memref<1x64xf32, #tpu.memory_space<vmem>>, %arg3: memref<1x64xf32, #tpu.memory_space<vmem>>, %arg4: memref<16x64xbf16, #tpu.memory_space<vmem>>) attributes {dimension_semantics = [#tpu.dimension_semantics<parallel>], iteration_bounds = array<i64: 1>, scalar_prefetch = 0 : i64, scratch_operands = 0 : i64, tpu.core_type = #tpu.core_type<tc>, window_params = [{transform_indices = @transform_0, window_bounds = array<i64: 16, 64>}, {pipeline_mode = #tpu.pipeline_mode<synchronous>, transform_indices = @transform_1, window_bounds = array<i64: 1, 64>}, {pipeline_mode = #tpu.pipeline_mode<synchronous>, transform_indices = @transform_2, window_bounds = array<i64: 1, 64>}, {transform_indices = @transform_3, window_bounds = array<i64: 16, 64>}]} {
    %c0 = arith.constant 0 : index
    %c0_0 = arith.constant 0 : index
    %0 = vector.load %arg1[%c0, %c0_0] : memref<16x64xbf16, #tpu.memory_space<vmem>>, vector<16x64xbf16>
    %1 = arith.extf %0 : vector<16x64xbf16> to vector<16x64xf32>
    %c0_1 = arith.constant 0 : index
    %c0_2 = arith.constant 0 : index
    %2 = vector.load %arg2[%c0_1, %c0_2] : memref<1x64xf32, #tpu.memory_space<vmem>>, vector<1x64xf32>
    %3 = vector.broadcast %2 : vector<1x64xf32> to vector<16x64xf32>
    %4 = arith.subf %1, %3 : vector<16x64xf32>
    %c0_3 = arith.constant 0 : index
    %c0_4 = arith.constant 0 : index
    %5 = vector.load %arg3[%c0_3, %c0_4] : memref<1x64xf32, #tpu.memory_space<vmem>>, vector<1x64xf32>
    %6 = vector.broadcast %5 : vector<1x64xf32> to vector<16x64xf32>
    %7 = arith.mulf %4, %6 : vector<16x64xf32>
    %cst = arith.constant 0.000000e+00 : f32
    %8 = vector.broadcast %cst : f32 to vector<16x64xf32>
    %9 = arith.maximumf %7, %8 : vector<16x64xf32>
    %10 = arith.truncf %9 : vector<16x64xf32> to vector<16x64xbf16>
    %c0_5 = arith.constant 0 : index
    %c0_6 = arith.constant 0 : index
    %11 = vector.load %arg4[%c0_5, %c0_6] : memref<16x64xbf16, #tpu.memory_space<vmem>>, vector<16x64xbf16>
    tpu.vector_store %arg4[%c0_5, %c0_6], %10 {strides = array<i32>} : memref<16x64xbf16, #tpu.memory_space<vmem>>, vector<16x64xbf16>,
    return
  }
  func.func @transform_0(%arg0: i32) -> (i32, i32) {
    %c0_i32 = arith.constant 0 : i32
    %c0_i32_0 = arith.constant 0 : i32
    return %arg0, %c0_i32 : i32, i32
  }
  func.func @transform_1(%arg0: i32) -> (i32, i32) {
    %c0_i32 = arith.constant 0 : i32
    %c0_i32_0 = arith.constant 0 : i32
    %c0_i32_1 = arith.constant 0 : i32
    return %c0_i32, %c0_i32_0 : i32, i32
  }
  func.func @transform_2(%arg0: i32) -> (i32, i32) {
    %c0_i32 = arith.constant 0 : i32
    %c0_i32_0 = arith.constant 0 : i32
    %c0_i32_1 = arith.constant 0 : i32
    return %c0_i32, %c0_i32_0 : i32, i32
  }
  func.func @transform_3(%arg0: i32) -> (i32, i32) {
    %c0_i32 = arith.constant 0 : i32
    %c0_i32_0 = arith.constant 0 : i32
    return %arg0, %c0_i32 : i32, i32
  }
}

module attributes {stable_mosaic.version = 11 : i64} {
  func.func @conv3x3_stats_kernel(%arg0: i32, %arg1: memref<1x8x64xbf16, #tpu.memory_space<vmem>>, %arg2: memref<3x64x128xbf16, #tpu.memory_space<vmem>>, %arg3: memref<1x8x128xbf16, #tpu.memory_space<vmem>>, %arg4: memref<1x1x128xf32, #tpu.memory_space<vmem>>, %arg5: memref<1x1x128xf32, #tpu.memory_space<vmem>>) attributes {dimension_semantics = [#tpu.dimension_semantics<parallel>], iteration_bounds = array<i64: 2>, scalar_prefetch = 0 : i64, scratch_operands = 0 : i64, tpu.core_type = #tpu.core_type<tc>, window_params = [{transform_indices = @transform_0, window_bounds = array<i64: 1, 8, 64>}, {pipeline_mode = #tpu.pipeline_mode<synchronous>, transform_indices = @transform_1, window_bounds = array<i64: 3, 64, 128>}, {transform_indices = @transform_2, window_bounds = array<i64: 1, 8, 128>}, {transform_indices = @transform_3, window_bounds = array<i64: 1, 1, 128>}, {transform_indices = @transform_4, window_bounds = array<i64: 1, 1, 128>}]} {
    %c0 = arith.constant 0 : index
    %c0_0 = arith.constant 0 : index
    %c0_1 = arith.constant 0 : index
    %0 = vector.load %arg1[%c0, %c0_0, %c0_1] : memref<1x8x64xbf16, #tpu.memory_space<vmem>>, vector<1x8x64xbf16>
    %1 = vector.shape_cast %0 : vector<1x8x64xbf16> to vector<8x64xbf16>
    %cst = arith.constant 0.000000e+00 : bf16
    %2 = vector.broadcast %cst : bf16 to vector<1x64xbf16>
    %3 = vector.extract_strided_slice %1 {offsets = [0, 0], sizes = [7, 64], strides = [1, 1]} : vector<8x64xbf16> to vector<7x64xbf16>
    %4 = tpu.concatenate %2, %3 in 0 : vector<1x64xbf16>, vector<7x64xbf16> -> vector<8x64xbf16>
    %5 = vector.extract_strided_slice %1 {offsets = [1, 0], sizes = [7, 64], strides = [1, 1]} : vector<8x64xbf16> to vector<7x64xbf16>
    %6 = tpu.concatenate %5, %2 in 0 : vector<7x64xbf16>, vector<1x64xbf16> -> vector<8x64xbf16>
    %c0_2 = arith.constant 0 : index
    %c0_3 = arith.constant 0 : index
    %c0_4 = arith.constant 0 : index
    %7 = vector.load %arg2[%c0_2, %c0_3, %c0_4] : memref<3x64x128xbf16, #tpu.memory_space<vmem>>, vector<1x64x128xbf16>
    %8 = vector.shape_cast %7 : vector<1x64x128xbf16> to vector<64x128xbf16>
    %cst_5 = arith.constant dense<0.000000e+00> : vector<8x128xf32>
    %9 = tpu.matmul %4, %8, %cst_5 {dimension_numbers = #tpu.dot_dimension_numbers<[1], [0], [0], [1], [0, 0, 1, 1], [], []>} : vector<8x64xbf16>, vector<64x128xbf16>, vector<8x128xf32> -> vector<8x128xf32>
    %c1 = arith.constant 1 : index
    %c0_6 = arith.constant 0 : index
    %c0_7 = arith.constant 0 : index
    %10 = vector.load %arg2[%c1, %c0_6, %c0_7] : memref<3x64x128xbf16, #tpu.memory_space<vmem>>, vector<1x64x128xbf16>
    %11 = vector.shape_cast %10 : vector<1x64x128xbf16> to vector<64x128xbf16>
    %cst_8 = arith.constant dense<0.000000e+00> : vector<8x128xf32>
    %12 = tpu.matmul %1, %11, %cst_8 {dimension_numbers = #tpu.dot_dimension_numbers<[1], [0], [0], [1], [0, 0, 1, 1], [], []>} : vector<8x64xbf16>, vector<64x128xbf16>, vector<8x128xf32> -> vector<8x128xf32>
    %13 = arith.addf %9, %12 : vector<8x128xf32>
    %c2 = arith.constant 2 : index
    %c0_9 = arith.constant 0 : index
    %c0_10 = arith.constant 0 : index
    %14 = vector.load %arg2[%c2, %c0_9, %c0_10] : memref<3x64x128xbf16, #tpu.memory_space<vmem>>, vector<1x64x128xbf16>
    %15 = vector.shape_cast %14 : vector<1x64x128xbf16> to vector<64x128xbf16>
    %cst_11 = arith.constant dense<0.000000e+00> : vector<8x128xf32>
    %16 = tpu.matmul %6, %15, %cst_11 {dimension_numbers = #tpu.dot_dimension_numbers<[1], [0], [0], [1], [0, 0, 1, 1], [], []>} : vector<8x64xbf16>, vector<64x128xbf16>, vector<8x128xf32> -> vector<8x128xf32>
    %17 = arith.addf %13, %16 : vector<8x128xf32>
    %18 = arith.truncf %17 : vector<8x128xf32> to vector<8x128xbf16>
    %c0_12 = arith.constant 0 : index
    %c0_13 = arith.constant 0 : index
    %c0_14 = arith.constant 0 : index
    %19 = vector.load %arg3[%c0_12, %c0_13, %c0_14] : memref<1x8x128xbf16, #tpu.memory_space<vmem>>, vector<1x8x128xbf16>
    %20 = vector.shape_cast %19 : vector<1x8x128xbf16> to vector<8x128xbf16>
    %21 = vector.shape_cast %18 : vector<8x128xbf16> to vector<1x8x128xbf16>
    tpu.vector_store %arg3[%c0_12, %c0_13, %c0_14], %21 {strides = array<i32>} : memref<1x8x128xbf16, #tpu.memory_space<vmem>>, vector<1x8x128xbf16>,
    %cst_15 = arith.constant dense<0.000000e+00> : vector<128xf32>
    %22 = vector.multi_reduction <add>, %17, %cst_15 [0] : vector<8x128xf32> to vector<128xf32>
    %23 = vector.shape_cast %22 : vector<128xf32> to vector<1x128xf32>
    %c0_16 = arith.constant 0 : index
    %c0_17 = arith.constant 0 : index
    %c0_18 = arith.constant 0 : index
    %24 = vector.load %arg4[%c0_16, %c0_17, %c0_18] : memref<1x1x128xf32, #tpu.memory_space<vmem>>, vector<1x1x128xf32>
    %25 = vector.shape_cast %24 : vector<1x1x128xf32> to vector<1x128xf32>
    %26 = vector.shape_cast %23 : vector<1x128xf32> to vector<1x1x128xf32>
    tpu.vector_store %arg4[%c0_16, %c0_17, %c0_18], %26 {strides = array<i32>} : memref<1x1x128xf32, #tpu.memory_space<vmem>>, vector<1x1x128xf32>,
    %27 = arith.mulf %17, %17 : vector<8x128xf32>
    %cst_19 = arith.constant dense<0.000000e+00> : vector<128xf32>
    %28 = vector.multi_reduction <add>, %27, %cst_19 [0] : vector<8x128xf32> to vector<128xf32>
    %29 = vector.shape_cast %28 : vector<128xf32> to vector<1x128xf32>
    %c0_20 = arith.constant 0 : index
    %c0_21 = arith.constant 0 : index
    %c0_22 = arith.constant 0 : index
    %30 = vector.load %arg5[%c0_20, %c0_21, %c0_22] : memref<1x1x128xf32, #tpu.memory_space<vmem>>, vector<1x1x128xf32>
    %31 = vector.shape_cast %30 : vector<1x1x128xf32> to vector<1x128xf32>
    %32 = vector.shape_cast %29 : vector<1x128xf32> to vector<1x1x128xf32>
    tpu.vector_store %arg5[%c0_20, %c0_21, %c0_22], %32 {strides = array<i32>} : memref<1x1x128xf32, #tpu.memory_space<vmem>>, vector<1x1x128xf32>,
    return
  }
  func.func @transform_0(%arg0: i32) -> (i32, i32, i32) {
    %c0_i32 = arith.constant 0 : i32
    %c0_i32_0 = arith.constant 0 : i32
    %c0_i32_1 = arith.constant 0 : i32
    return %arg0, %c0_i32, %c0_i32_0 : i32, i32, i32
  }
  func.func @transform_1(%arg0: i32) -> (i32, i32, i32) {
    %c0_i32 = arith.constant 0 : i32
    %c0_i32_0 = arith.constant 0 : i32
    %c0_i32_1 = arith.constant 0 : i32
    %c0_i32_2 = arith.constant 0 : i32
    return %c0_i32, %c0_i32_0, %c0_i32_1 : i32, i32, i32
  }
  func.func @transform_2(%arg0: i32) -> (i32, i32, i32) {
    %c0_i32 = arith.constant 0 : i32
    %c0_i32_0 = arith.constant 0 : i32
    %c0_i32_1 = arith.constant 0 : i32
    return %arg0, %c0_i32, %c0_i32_0 : i32, i32, i32
  }
  func.func @transform_3(%arg0: i32) -> (i32, i32, i32) {
    %c0_i32 = arith.constant 0 : i32
    %c0_i32_0 = arith.constant 0 : i32
    %c0_i32_1 = arith.constant 0 : i32
    return %arg0, %c0_i32, %c0_i32_0 : i32, i32, i32
  }
  func.func @transform_4(%arg0: i32) -> (i32, i32, i32) {
    %c0_i32 = arith.constant 0 : i32
    %c0_i32_0 = arith.constant 0 : i32
    %c0_i32_1 = arith.constant 0 : i32
    return %arg0, %c0_i32, %c0_i32_0 : i32, i32, i32
  }
}

module attributes {stable_mosaic.version = 11 : i64} {
  func.func @bn_relu_kernel(%arg0: i32, %arg1: memref<16x128xbf16, #tpu.memory_space<vmem>>, %arg2: memref<1x128xf32, #tpu.memory_space<vmem>>, %arg3: memref<1x128xf32, #tpu.memory_space<vmem>>, %arg4: memref<16x128xbf16, #tpu.memory_space<vmem>>) attributes {dimension_semantics = [#tpu.dimension_semantics<parallel>], iteration_bounds = array<i64: 1>, scalar_prefetch = 0 : i64, scratch_operands = 0 : i64, tpu.core_type = #tpu.core_type<tc>, window_params = [{transform_indices = @transform_0, window_bounds = array<i64: 16, 128>}, {pipeline_mode = #tpu.pipeline_mode<synchronous>, transform_indices = @transform_1, window_bounds = array<i64: 1, 128>}, {pipeline_mode = #tpu.pipeline_mode<synchronous>, transform_indices = @transform_2, window_bounds = array<i64: 1, 128>}, {transform_indices = @transform_3, window_bounds = array<i64: 16, 128>}]} {
    %c0 = arith.constant 0 : index
    %c0_0 = arith.constant 0 : index
    %0 = vector.load %arg1[%c0, %c0_0] : memref<16x128xbf16, #tpu.memory_space<vmem>>, vector<16x128xbf16>
    %1 = arith.extf %0 : vector<16x128xbf16> to vector<16x128xf32>
    %c0_1 = arith.constant 0 : index
    %c0_2 = arith.constant 0 : index
    %2 = vector.load %arg2[%c0_1, %c0_2] : memref<1x128xf32, #tpu.memory_space<vmem>>, vector<1x128xf32>
    %3 = vector.broadcast %2 : vector<1x128xf32> to vector<16x128xf32>
    %4 = arith.subf %1, %3 : vector<16x128xf32>
    %c0_3 = arith.constant 0 : index
    %c0_4 = arith.constant 0 : index
    %5 = vector.load %arg3[%c0_3, %c0_4] : memref<1x128xf32, #tpu.memory_space<vmem>>, vector<1x128xf32>
    %6 = vector.broadcast %5 : vector<1x128xf32> to vector<16x128xf32>
    %7 = arith.mulf %4, %6 : vector<16x128xf32>
    %cst = arith.constant 0.000000e+00 : f32
    %8 = vector.broadcast %cst : f32 to vector<16x128xf32>
    %9 = arith.maximumf %7, %8 : vector<16x128xf32>
    %10 = arith.truncf %9 : vector<16x128xf32> to vector<16x128xbf16>
    %c0_5 = arith.constant 0 : index
    %c0_6 = arith.constant 0 : index
    %11 = vector.load %arg4[%c0_5, %c0_6] : memref<16x128xbf16, #tpu.memory_space<vmem>>, vector<16x128xbf16>
    tpu.vector_store %arg4[%c0_5, %c0_6], %10 {strides = array<i32>} : memref<16x128xbf16, #tpu.memory_space<vmem>>, vector<16x128xbf16>,
    return
  }
  func.func @transform_0(%arg0: i32) -> (i32, i32) {
    %c0_i32 = arith.constant 0 : i32
    %c0_i32_0 = arith.constant 0 : i32
    return %arg0, %c0_i32 : i32, i32
  }
  func.func @transform_1(%arg0: i32) -> (i32, i32) {
    %c0_i32 = arith.constant 0 : i32
    %c0_i32_0 = arith.constant 0 : i32
    %c0_i32_1 = arith.constant 0 : i32
    return %c0_i32, %c0_i32_0 : i32, i32
  }
  func.func @transform_2(%arg0: i32) -> (i32, i32) {
    %c0_i32 = arith.constant 0 : i32
    %c0_i32_0 = arith.constant 0 : i32
    %c0_i32_1 = arith.constant 0 : i32
    return %c0_i32, %c0_i32_0 : i32, i32
  }
  func.func @transform_3(%arg0: i32) -> (i32, i32) {
    %c0_i32 = arith.constant 0 : i32
    %c0_i32_0 = arith.constant 0 : i32
    return %arg0, %c0_i32 : i32, i32
  }
}

module attributes {stable_mosaic.version = 11 : i64} {
  func.func @conv3x3_stats_kernel(%arg0: i32, %arg1: memref<1x8x128xbf16, #tpu.memory_space<vmem>>, %arg2: memref<3x128x128xbf16, #tpu.memory_space<vmem>>, %arg3: memref<1x8x128xbf16, #tpu.memory_space<vmem>>, %arg4: memref<1x1x128xf32, #tpu.memory_space<vmem>>, %arg5: memref<1x1x128xf32, #tpu.memory_space<vmem>>) attributes {dimension_semantics = [#tpu.dimension_semantics<parallel>], iteration_bounds = array<i64: 2>, scalar_prefetch = 0 : i64, scratch_operands = 0 : i64, tpu.core_type = #tpu.core_type<tc>, window_params = [{transform_indices = @transform_0, window_bounds = array<i64: 1, 8, 128>}, {pipeline_mode = #tpu.pipeline_mode<synchronous>, transform_indices = @transform_1, window_bounds = array<i64: 3, 128, 128>}, {transform_indices = @transform_2, window_bounds = array<i64: 1, 8, 128>}, {transform_indices = @transform_3, window_bounds = array<i64: 1, 1, 128>}, {transform_indices = @transform_4, window_bounds = array<i64: 1, 1, 128>}]} {
    %c0 = arith.constant 0 : index
    %c0_0 = arith.constant 0 : index
    %c0_1 = arith.constant 0 : index
    %0 = vector.load %arg1[%c0, %c0_0, %c0_1] : memref<1x8x128xbf16, #tpu.memory_space<vmem>>, vector<1x8x128xbf16>
    %1 = vector.shape_cast %0 : vector<1x8x128xbf16> to vector<8x128xbf16>
    %cst = arith.constant 0.000000e+00 : bf16
    %2 = vector.broadcast %cst : bf16 to vector<1x128xbf16>
    %3 = vector.extract_strided_slice %1 {offsets = [0, 0], sizes = [7, 128], strides = [1, 1]} : vector<8x128xbf16> to vector<7x128xbf16>
    %4 = tpu.concatenate %2, %3 in 0 : vector<1x128xbf16>, vector<7x128xbf16> -> vector<8x128xbf16>
    %5 = vector.extract_strided_slice %1 {offsets = [1, 0], sizes = [7, 128], strides = [1, 1]} : vector<8x128xbf16> to vector<7x128xbf16>
    %6 = tpu.concatenate %5, %2 in 0 : vector<7x128xbf16>, vector<1x128xbf16> -> vector<8x128xbf16>
    %c0_2 = arith.constant 0 : index
    %c0_3 = arith.constant 0 : index
    %c0_4 = arith.constant 0 : index
    %7 = vector.load %arg2[%c0_2, %c0_3, %c0_4] : memref<3x128x128xbf16, #tpu.memory_space<vmem>>, vector<1x128x128xbf16>
    %8 = vector.shape_cast %7 : vector<1x128x128xbf16> to vector<128x128xbf16>
    %cst_5 = arith.constant dense<0.000000e+00> : vector<8x128xf32>
    %9 = tpu.matmul %4, %8, %cst_5 {dimension_numbers = #tpu.dot_dimension_numbers<[1], [0], [0], [1], [0, 0, 1, 1], [], []>} : vector<8x128xbf16>, vector<128x128xbf16>, vector<8x128xf32> -> vector<8x128xf32>
    %c1 = arith.constant 1 : index
    %c0_6 = arith.constant 0 : index
    %c0_7 = arith.constant 0 : index
    %10 = vector.load %arg2[%c1, %c0_6, %c0_7] : memref<3x128x128xbf16, #tpu.memory_space<vmem>>, vector<1x128x128xbf16>
    %11 = vector.shape_cast %10 : vector<1x128x128xbf16> to vector<128x128xbf16>
    %cst_8 = arith.constant dense<0.000000e+00> : vector<8x128xf32>
    %12 = tpu.matmul %1, %11, %cst_8 {dimension_numbers = #tpu.dot_dimension_numbers<[1], [0], [0], [1], [0, 0, 1, 1], [], []>} : vector<8x128xbf16>, vector<128x128xbf16>, vector<8x128xf32> -> vector<8x128xf32>
    %13 = arith.addf %9, %12 : vector<8x128xf32>
    %c2 = arith.constant 2 : index
    %c0_9 = arith.constant 0 : index
    %c0_10 = arith.constant 0 : index
    %14 = vector.load %arg2[%c2, %c0_9, %c0_10] : memref<3x128x128xbf16, #tpu.memory_space<vmem>>, vector<1x128x128xbf16>
    %15 = vector.shape_cast %14 : vector<1x128x128xbf16> to vector<128x128xbf16>
    %cst_11 = arith.constant dense<0.000000e+00> : vector<8x128xf32>
    %16 = tpu.matmul %6, %15, %cst_11 {dimension_numbers = #tpu.dot_dimension_numbers<[1], [0], [0], [1], [0, 0, 1, 1], [], []>} : vector<8x128xbf16>, vector<128x128xbf16>, vector<8x128xf32> -> vector<8x128xf32>
    %17 = arith.addf %13, %16 : vector<8x128xf32>
    %18 = arith.truncf %17 : vector<8x128xf32> to vector<8x128xbf16>
    %c0_12 = arith.constant 0 : index
    %c0_13 = arith.constant 0 : index
    %c0_14 = arith.constant 0 : index
    %19 = vector.load %arg3[%c0_12, %c0_13, %c0_14] : memref<1x8x128xbf16, #tpu.memory_space<vmem>>, vector<1x8x128xbf16>
    %20 = vector.shape_cast %19 : vector<1x8x128xbf16> to vector<8x128xbf16>
    %21 = vector.shape_cast %18 : vector<8x128xbf16> to vector<1x8x128xbf16>
    tpu.vector_store %arg3[%c0_12, %c0_13, %c0_14], %21 {strides = array<i32>} : memref<1x8x128xbf16, #tpu.memory_space<vmem>>, vector<1x8x128xbf16>,
    %cst_15 = arith.constant dense<0.000000e+00> : vector<128xf32>
    %22 = vector.multi_reduction <add>, %17, %cst_15 [0] : vector<8x128xf32> to vector<128xf32>
    %23 = vector.shape_cast %22 : vector<128xf32> to vector<1x128xf32>
    %c0_16 = arith.constant 0 : index
    %c0_17 = arith.constant 0 : index
    %c0_18 = arith.constant 0 : index
    %24 = vector.load %arg4[%c0_16, %c0_17, %c0_18] : memref<1x1x128xf32, #tpu.memory_space<vmem>>, vector<1x1x128xf32>
    %25 = vector.shape_cast %24 : vector<1x1x128xf32> to vector<1x128xf32>
    %26 = vector.shape_cast %23 : vector<1x128xf32> to vector<1x1x128xf32>
    tpu.vector_store %arg4[%c0_16, %c0_17, %c0_18], %26 {strides = array<i32>} : memref<1x1x128xf32, #tpu.memory_space<vmem>>, vector<1x1x128xf32>,
    %27 = arith.mulf %17, %17 : vector<8x128xf32>
    %cst_19 = arith.constant dense<0.000000e+00> : vector<128xf32>
    %28 = vector.multi_reduction <add>, %27, %cst_19 [0] : vector<8x128xf32> to vector<128xf32>
    %29 = vector.shape_cast %28 : vector<128xf32> to vector<1x128xf32>
    %c0_20 = arith.constant 0 : index
    %c0_21 = arith.constant 0 : index
    %c0_22 = arith.constant 0 : index
    %30 = vector.load %arg5[%c0_20, %c0_21, %c0_22] : memref<1x1x128xf32, #tpu.memory_space<vmem>>, vector<1x1x128xf32>
    %31 = vector.shape_cast %30 : vector<1x1x128xf32> to vector<1x128xf32>
    %32 = vector.shape_cast %29 : vector<1x128xf32> to vector<1x1x128xf32>
    tpu.vector_store %arg5[%c0_20, %c0_21, %c0_22], %32 {strides = array<i32>} : memref<1x1x128xf32, #tpu.memory_space<vmem>>, vector<1x1x128xf32>,
    return
  }
  func.func @transform_0(%arg0: i32) -> (i32, i32, i32) {
    %c0_i32 = arith.constant 0 : i32
    %c0_i32_0 = arith.constant 0 : i32
    %c0_i32_1 = arith.constant 0 : i32
    return %arg0, %c0_i32, %c0_i32_0 : i32, i32, i32
  }
  func.func @transform_1(%arg0: i32) -> (i32, i32, i32) {
    %c0_i32 = arith.constant 0 : i32
    %c0_i32_0 = arith.constant 0 : i32
    %c0_i32_1 = arith.constant 0 : i32
    %c0_i32_2 = arith.constant 0 : i32
    return %c0_i32, %c0_i32_0, %c0_i32_1 : i32, i32, i32
  }
  func.func @transform_2(%arg0: i32) -> (i32, i32, i32) {
    %c0_i32 = arith.constant 0 : i32
    %c0_i32_0 = arith.constant 0 : i32
    %c0_i32_1 = arith.constant 0 : i32
    return %arg0, %c0_i32, %c0_i32_0 : i32, i32, i32
  }
  func.func @transform_3(%arg0: i32) -> (i32, i32, i32) {
    %c0_i32 = arith.constant 0 : i32
    %c0_i32_0 = arith.constant 0 : i32
    %c0_i32_1 = arith.constant 0 : i32
    return %arg0, %c0_i32, %c0_i32_0 : i32, i32, i32
  }
  func.func @transform_4(%arg0: i32) -> (i32, i32, i32) {
    %c0_i32 = arith.constant 0 : i32
    %c0_i32_0 = arith.constant 0 : i32
    %c0_i32_1 = arith.constant 0 : i32
    return %arg0, %c0_i32, %c0_i32_0 : i32, i32, i32
  }
}

module attributes {stable_mosaic.version = 11 : i64} {
  func.func @matmul_stats_kernel(%arg0: i32, %arg1: memref<16x128xbf16, #tpu.memory_space<vmem>>, %arg2: memref<128x256xbf16, #tpu.memory_space<vmem>>, %arg3: memref<16x256xbf16, #tpu.memory_space<vmem>>, %arg4: memref<1x1x256xf32, #tpu.memory_space<vmem>>, %arg5: memref<1x1x256xf32, #tpu.memory_space<vmem>>) attributes {dimension_semantics = [#tpu.dimension_semantics<parallel>], iteration_bounds = array<i64: 1>, scalar_prefetch = 0 : i64, scratch_operands = 0 : i64, tpu.core_type = #tpu.core_type<tc>, window_params = [{transform_indices = @transform_0, window_bounds = array<i64: 16, 128>}, {pipeline_mode = #tpu.pipeline_mode<synchronous>, transform_indices = @transform_1, window_bounds = array<i64: 128, 256>}, {transform_indices = @transform_2, window_bounds = array<i64: 16, 256>}, {transform_indices = @transform_3, window_bounds = array<i64: 1, 1, 256>}, {transform_indices = @transform_4, window_bounds = array<i64: 1, 1, 256>}]} {
    %c0 = arith.constant 0 : index
    %c0_0 = arith.constant 0 : index
    %0 = vector.load %arg1[%c0, %c0_0] : memref<16x128xbf16, #tpu.memory_space<vmem>>, vector<16x128xbf16>
    %c0_1 = arith.constant 0 : index
    %c0_2 = arith.constant 0 : index
    %1 = vector.load %arg2[%c0_1, %c0_2] : memref<128x256xbf16, #tpu.memory_space<vmem>>, vector<128x256xbf16>
    %cst = arith.constant dense<0.000000e+00> : vector<16x256xf32>
    %2 = tpu.matmul %0, %1, %cst {dimension_numbers = #tpu.dot_dimension_numbers<[1], [0], [0], [1], [0, 0, 1, 1], [], []>} : vector<16x128xbf16>, vector<128x256xbf16>, vector<16x256xf32> -> vector<16x256xf32>
    %3 = arith.truncf %2 : vector<16x256xf32> to vector<16x256xbf16>
    %c0_3 = arith.constant 0 : index
    %c0_4 = arith.constant 0 : index
    %4 = vector.load %arg3[%c0_3, %c0_4] : memref<16x256xbf16, #tpu.memory_space<vmem>>, vector<16x256xbf16>
    tpu.vector_store %arg3[%c0_3, %c0_4], %3 {strides = array<i32>} : memref<16x256xbf16, #tpu.memory_space<vmem>>, vector<16x256xbf16>,
    %cst_5 = arith.constant dense<0.000000e+00> : vector<256xf32>
    %5 = vector.multi_reduction <add>, %2, %cst_5 [0] : vector<16x256xf32> to vector<256xf32>
    %6 = vector.shape_cast %5 : vector<256xf32> to vector<1x256xf32>
    %c0_6 = arith.constant 0 : index
    %c0_7 = arith.constant 0 : index
    %c0_8 = arith.constant 0 : index
    %7 = vector.load %arg4[%c0_6, %c0_7, %c0_8] : memref<1x1x256xf32, #tpu.memory_space<vmem>>, vector<1x1x256xf32>
    %8 = vector.shape_cast %7 : vector<1x1x256xf32> to vector<1x256xf32>
    %9 = vector.shape_cast %6 : vector<1x256xf32> to vector<1x1x256xf32>
    tpu.vector_store %arg4[%c0_6, %c0_7, %c0_8], %9 {strides = array<i32>} : memref<1x1x256xf32, #tpu.memory_space<vmem>>, vector<1x1x256xf32>,
    %10 = arith.mulf %2, %2 : vector<16x256xf32>
    %cst_9 = arith.constant dense<0.000000e+00> : vector<256xf32>
    %11 = vector.multi_reduction <add>, %10, %cst_9 [0] : vector<16x256xf32> to vector<256xf32>
    %12 = vector.shape_cast %11 : vector<256xf32> to vector<1x256xf32>
    %c0_10 = arith.constant 0 : index
    %c0_11 = arith.constant 0 : index
    %c0_12 = arith.constant 0 : index
    %13 = vector.load %arg5[%c0_10, %c0_11, %c0_12] : memref<1x1x256xf32, #tpu.memory_space<vmem>>, vector<1x1x256xf32>
    %14 = vector.shape_cast %13 : vector<1x1x256xf32> to vector<1x256xf32>
    %15 = vector.shape_cast %12 : vector<1x256xf32> to vector<1x1x256xf32>
    tpu.vector_store %arg5[%c0_10, %c0_11, %c0_12], %15 {strides = array<i32>} : memref<1x1x256xf32, #tpu.memory_space<vmem>>, vector<1x1x256xf32>,
    return
  }
  func.func @transform_0(%arg0: i32) -> (i32, i32) {
    %c0_i32 = arith.constant 0 : i32
    %c0_i32_0 = arith.constant 0 : i32
    return %arg0, %c0_i32 : i32, i32
  }
  func.func @transform_1(%arg0: i32) -> (i32, i32) {
    %c0_i32 = arith.constant 0 : i32
    %c0_i32_0 = arith.constant 0 : i32
    %c0_i32_1 = arith.constant 0 : i32
    return %c0_i32, %c0_i32_0 : i32, i32
  }
  func.func @transform_2(%arg0: i32) -> (i32, i32) {
    %c0_i32 = arith.constant 0 : i32
    %c0_i32_0 = arith.constant 0 : i32
    return %arg0, %c0_i32 : i32, i32
  }
  func.func @transform_3(%arg0: i32) -> (i32, i32, i32) {
    %c0_i32 = arith.constant 0 : i32
    %c0_i32_0 = arith.constant 0 : i32
    %c0_i32_1 = arith.constant 0 : i32
    return %arg0, %c0_i32, %c0_i32_0 : i32, i32, i32
  }
  func.func @transform_4(%arg0: i32) -> (i32, i32, i32) {
    %c0_i32 = arith.constant 0 : i32
    %c0_i32_0 = arith.constant 0 : i32
    %c0_i32_1 = arith.constant 0 : i32
    return %arg0, %c0_i32, %c0_i32_0 : i32, i32, i32
  }
}

module attributes {stable_mosaic.version = 11 : i64} {
  func.func @conv3x3_stats_kernel(%arg0: i32, %arg1: memref<1x16x256xbf16, #tpu.memory_space<vmem>>, %arg2: memref<3x256x128xbf16, #tpu.memory_space<vmem>>, %arg3: memref<1x16x128xbf16, #tpu.memory_space<vmem>>, %arg4: memref<1x1x128xf32, #tpu.memory_space<vmem>>, %arg5: memref<1x1x128xf32, #tpu.memory_space<vmem>>) attributes {dimension_semantics = [#tpu.dimension_semantics<parallel>], iteration_bounds = array<i64: 2>, scalar_prefetch = 0 : i64, scratch_operands = 0 : i64, tpu.core_type = #tpu.core_type<tc>, window_params = [{transform_indices = @transform_0, window_bounds = array<i64: 1, 16, 256>}, {pipeline_mode = #tpu.pipeline_mode<synchronous>, transform_indices = @transform_1, window_bounds = array<i64: 3, 256, 128>}, {transform_indices = @transform_2, window_bounds = array<i64: 1, 16, 128>}, {transform_indices = @transform_3, window_bounds = array<i64: 1, 1, 128>}, {transform_indices = @transform_4, window_bounds = array<i64: 1, 1, 128>}]} {
    %c0 = arith.constant 0 : index
    %c0_0 = arith.constant 0 : index
    %c0_1 = arith.constant 0 : index
    %0 = vector.load %arg1[%c0, %c0_0, %c0_1] : memref<1x16x256xbf16, #tpu.memory_space<vmem>>, vector<1x16x256xbf16>
    %1 = vector.shape_cast %0 : vector<1x16x256xbf16> to vector<16x256xbf16>
    %cst = arith.constant 0.000000e+00 : bf16
    %2 = vector.broadcast %cst : bf16 to vector<1x256xbf16>
    %3 = vector.extract_strided_slice %1 {offsets = [0, 0], sizes = [15, 256], strides = [1, 1]} : vector<16x256xbf16> to vector<15x256xbf16>
    %4 = tpu.concatenate %2, %3 in 0 : vector<1x256xbf16>, vector<15x256xbf16> -> vector<16x256xbf16>
    %5 = vector.extract_strided_slice %1 {offsets = [1, 0], sizes = [15, 256], strides = [1, 1]} : vector<16x256xbf16> to vector<15x256xbf16>
    %6 = tpu.concatenate %5, %2 in 0 : vector<15x256xbf16>, vector<1x256xbf16> -> vector<16x256xbf16>
    %c0_2 = arith.constant 0 : index
    %c0_3 = arith.constant 0 : index
    %c0_4 = arith.constant 0 : index
    %7 = vector.load %arg2[%c0_2, %c0_3, %c0_4] : memref<3x256x128xbf16, #tpu.memory_space<vmem>>, vector<1x256x128xbf16>
    %8 = vector.shape_cast %7 : vector<1x256x128xbf16> to vector<256x128xbf16>
    %cst_5 = arith.constant dense<0.000000e+00> : vector<16x128xf32>
    %9 = tpu.matmul %4, %8, %cst_5 {dimension_numbers = #tpu.dot_dimension_numbers<[1], [0], [0], [1], [0, 0, 1, 1], [], []>} : vector<16x256xbf16>, vector<256x128xbf16>, vector<16x128xf32> -> vector<16x128xf32>
    %c1 = arith.constant 1 : index
    %c0_6 = arith.constant 0 : index
    %c0_7 = arith.constant 0 : index
    %10 = vector.load %arg2[%c1, %c0_6, %c0_7] : memref<3x256x128xbf16, #tpu.memory_space<vmem>>, vector<1x256x128xbf16>
    %11 = vector.shape_cast %10 : vector<1x256x128xbf16> to vector<256x128xbf16>
    %cst_8 = arith.constant dense<0.000000e+00> : vector<16x128xf32>
    %12 = tpu.matmul %1, %11, %cst_8 {dimension_numbers = #tpu.dot_dimension_numbers<[1], [0], [0], [1], [0, 0, 1, 1], [], []>} : vector<16x256xbf16>, vector<256x128xbf16>, vector<16x128xf32> -> vector<16x128xf32>
    %13 = arith.addf %9, %12 : vector<16x128xf32>
    %c2 = arith.constant 2 : index
    %c0_9 = arith.constant 0 : index
    %c0_10 = arith.constant 0 : index
    %14 = vector.load %arg2[%c2, %c0_9, %c0_10] : memref<3x256x128xbf16, #tpu.memory_space<vmem>>, vector<1x256x128xbf16>
    %15 = vector.shape_cast %14 : vector<1x256x128xbf16> to vector<256x128xbf16>
    %cst_11 = arith.constant dense<0.000000e+00> : vector<16x128xf32>
    %16 = tpu.matmul %6, %15, %cst_11 {dimension_numbers = #tpu.dot_dimension_numbers<[1], [0], [0], [1], [0, 0, 1, 1], [], []>} : vector<16x256xbf16>, vector<256x128xbf16>, vector<16x128xf32> -> vector<16x128xf32>
    %17 = arith.addf %13, %16 : vector<16x128xf32>
    %18 = arith.truncf %17 : vector<16x128xf32> to vector<16x128xbf16>
    %c0_12 = arith.constant 0 : index
    %c0_13 = arith.constant 0 : index
    %c0_14 = arith.constant 0 : index
    %19 = vector.load %arg3[%c0_12, %c0_13, %c0_14] : memref<1x16x128xbf16, #tpu.memory_space<vmem>>, vector<1x16x128xbf16>
    %20 = vector.shape_cast %19 : vector<1x16x128xbf16> to vector<16x128xbf16>
    %21 = vector.shape_cast %18 : vector<16x128xbf16> to vector<1x16x128xbf16>
    tpu.vector_store %arg3[%c0_12, %c0_13, %c0_14], %21 {strides = array<i32>} : memref<1x16x128xbf16, #tpu.memory_space<vmem>>, vector<1x16x128xbf16>,
    %cst_15 = arith.constant dense<0.000000e+00> : vector<128xf32>
    %22 = vector.multi_reduction <add>, %17, %cst_15 [0] : vector<16x128xf32> to vector<128xf32>
    %23 = vector.shape_cast %22 : vector<128xf32> to vector<1x128xf32>
    %c0_16 = arith.constant 0 : index
    %c0_17 = arith.constant 0 : index
    %c0_18 = arith.constant 0 : index
    %24 = vector.load %arg4[%c0_16, %c0_17, %c0_18] : memref<1x1x128xf32, #tpu.memory_space<vmem>>, vector<1x1x128xf32>
    %25 = vector.shape_cast %24 : vector<1x1x128xf32> to vector<1x128xf32>
    %26 = vector.shape_cast %23 : vector<1x128xf32> to vector<1x1x128xf32>
    tpu.vector_store %arg4[%c0_16, %c0_17, %c0_18], %26 {strides = array<i32>} : memref<1x1x128xf32, #tpu.memory_space<vmem>>, vector<1x1x128xf32>,
    %27 = arith.mulf %17, %17 : vector<16x128xf32>
    %cst_19 = arith.constant dense<0.000000e+00> : vector<128xf32>
    %28 = vector.multi_reduction <add>, %27, %cst_19 [0] : vector<16x128xf32> to vector<128xf32>
    %29 = vector.shape_cast %28 : vector<128xf32> to vector<1x128xf32>
    %c0_20 = arith.constant 0 : index
    %c0_21 = arith.constant 0 : index
    %c0_22 = arith.constant 0 : index
    %30 = vector.load %arg5[%c0_20, %c0_21, %c0_22] : memref<1x1x128xf32, #tpu.memory_space<vmem>>, vector<1x1x128xf32>
    %31 = vector.shape_cast %30 : vector<1x1x128xf32> to vector<1x128xf32>
    %32 = vector.shape_cast %29 : vector<1x128xf32> to vector<1x1x128xf32>
    tpu.vector_store %arg5[%c0_20, %c0_21, %c0_22], %32 {strides = array<i32>} : memref<1x1x128xf32, #tpu.memory_space<vmem>>, vector<1x1x128xf32>,
    return
  }
  func.func @transform_0(%arg0: i32) -> (i32, i32, i32) {
    %c0_i32 = arith.constant 0 : i32
    %c0_i32_0 = arith.constant 0 : i32
    %c0_i32_1 = arith.constant 0 : i32
    return %arg0, %c0_i32, %c0_i32_0 : i32, i32, i32
  }
  func.func @transform_1(%arg0: i32) -> (i32, i32, i32) {
    %c0_i32 = arith.constant 0 : i32
    %c0_i32_0 = arith.constant 0 : i32
    %c0_i32_1 = arith.constant 0 : i32
    %c0_i32_2 = arith.constant 0 : i32
    return %c0_i32, %c0_i32_0, %c0_i32_1 : i32, i32, i32
  }
  func.func @transform_2(%arg0: i32) -> (i32, i32, i32) {
    %c0_i32 = arith.constant 0 : i32
    %c0_i32_0 = arith.constant 0 : i32
    %c0_i32_1 = arith.constant 0 : i32
    return %arg0, %c0_i32, %c0_i32_0 : i32, i32, i32
  }
  func.func @transform_3(%arg0: i32) -> (i32, i32, i32) {
    %c0_i32 = arith.constant 0 : i32
    %c0_i32_0 = arith.constant 0 : i32
    %c0_i32_1 = arith.constant 0 : i32
    return %arg0, %c0_i32, %c0_i32_0 : i32, i32, i32
  }
  func.func @transform_4(%arg0: i32) -> (i32, i32, i32) {
    %c0_i32 = arith.constant 0 : i32
    %c0_i32_0 = arith.constant 0 : i32
    %c0_i32_1 = arith.constant 0 : i32
    return %arg0, %c0_i32, %c0_i32_0 : i32, i32, i32
  }
}

</mosaic_0001>

<llo_original>
// kernel: tile.83
$region0: #{tile.83}
  #allocation0 [shape = 's32[1]{0}', space=sflag, size = 0x4, scoped, tag = 'scoped memory for tile.83']
  %s0 = inlined_call_operand.vmem [shape: f32[8], index: 0, kind: input, shape index: {}]
  %s1 = inlined_call_operand.vmem [shape: f32[16,8], index: 1, kind: output, shape index: {}]
  // Predicated region
  $region2: #{tile.83} parent=0 // pred_check
    _
  $region3: #{tile.83} parent=0 // pred_check_branch
    %3 = sbr.rel (0) target = $region5
  $region4: #{tile.83} parent=0 // pred_region
    _
  $region5: #{tile.83} parent=0 // pred_fallthru
    _
  %v4 = vld [vmem:[%s0] ss:$0 sm:$0xff]
  %5 = vst [vmem:[%s1] sm:$0xff] %v4
  %s6 = scalar_lea.vmem %s1, 8
  %7 = vst [vmem:[%s6] sm:$0xff] %v4

// kernel: tile.84
$region0: #{tile.84}
  %s0 = inlined_call_operand.vmem [shape: f32[16,8], index: 0, kind: input, shape index: {}]
  %s1 = inlined_call_operand.vmem [shape: f32[1,128], index: 1, kind: output, shape index: {}]
  $region1: #{tile.84} parent=0
    #allocation0 [shape = 'u8[4096]{0}', space=vmem, size = 0x1000, scoped, tag = 'scoped mem for output reshape']
    %v2 = vld [vmem:[%s0] sm:$0x1]
    %vm3 = vcmask 64512
    %4 = vst.msk [vmem:[#allocation0] sm:$0x1] %vm3, %v2
    %s5 = scalar_lea.vmem %s0, 15
    %v6 = vld [vmem:[%s5] sm:$0x1]
    %7 = vrot.lane.b32.xlu0 %v6, 120
    %v8 = vpop.permute.xlu0 %7
    %vm9 = vcmask 1048512
    %10 = vst.msk [vmem:[#allocation0] sm:$0x1] %vm9, %v8
    %s11 = scalar_lea.vmem %s0, 14
    %v12 = vld [vmem:[%s11] sm:$0x1]
    %13 = vrot.lane.b32.xlu0 %v12, 112
    %v14 = vpop.permute.xlu0 %13
    %vm15 = vcmask 982912
    %16 = vst.msk [vmem:[#allocation0] sm:$0x1] %vm15, %v14
    %s17 = scalar_lea.vmem %s0, 13
    %v18 = vld [vmem:[%s17] sm:$0x1]
    %19 = vrot.lane.b32.xlu0 %v18, 104
    %v20 = vpop.permute.xlu0 %19
    %vm21 = vcmask 917312
    %22 = vst.msk [vmem:[#allocation0] sm:$0x1] %vm21, %v20
    %s23 = scalar_lea.vmem %s0, 12
    %v24 = vld [vmem:[%s23] sm:$0x1]
    %25 = vrot.lane.b32.xlu0 %v24, 96
    %v26 = vpop.permute.xlu0 %25
    %vm27 = vcmask 851712
    %28 = vst.msk [vmem:[#allocation0] sm:$0x1] %vm27, %v26
    %s29 = scalar_lea.vmem %s0, 11
    %v30 = vld [vmem:[%s29] sm:$0x1]
    %31 = vrot.lane.b32.xlu0 %v30, 88
    %v32 = vpop.permute.xlu0 %31
    %vm33 = vcmask 786112
    %34 = vst.msk [vmem:[#allocation0] sm:$0x1] %vm33, %v32
    %s35 = scalar_lea.vmem %s0, 10
    %v36 = vld [vmem:[%s35] sm:$0x1]
    %37 = vrot.lane.b32.xlu0 %v36, 80
    %v38 = vpop.permute.xlu0 %37
    %vm39 = vcmask 720512
    %40 = vst.msk [vmem:[#allocation0] sm:$0x1] %vm39, %v38
    %s41 = scalar_lea.vmem %s0, 9
    %v42 = vld [vmem:[%s41] sm:$0x1]
    %43 = vrot.lane.b32.xlu0 %v42, 72
    %v44 = vpop.permute.xlu0 %43
    %vm45 = vcmask 654912
    %46 = vst.msk [vmem:[#allocation0] sm:$0x1] %vm45, %v44
    %s47 = scalar_lea.vmem %s0, 8
    %v48 = vld [vmem:[%s47] sm:$0x1]
    %49 = vrot.lane.b32.xlu0 %v48, 64
    %v50 = vpop.permute.xlu0 %49
    %vm51 = vcmask 589312
    %52 = vst.msk [vmem:[#allocation0] sm:$0x1] %vm51, %v50
    %s53 = scalar_lea.vmem %s0, 7
    %v54 = vld [vmem:[%s53] sm:$0x1]
    %55 = vrot.lane.b32.xlu0 %v54, 56
    %v56 = vpop.permute.xlu0 %55
    %vm57 = vcmask 523712
    %58 = vst.msk [vmem:[#allocation0] sm:$0x1] %vm57, %v56
    %s59 = scalar_lea.vmem %s0, 6
    %v60 = vld [vmem:[%s59] sm:$0x1]
    %61 = vrot.lane.b32.xlu0 %v60, 48
    %v62 = vpop.permute.xlu0 %61
    %vm63 = vcmask 458112
    %64 = vst.msk [vmem:[#allocation0] sm:$0x1] %vm63, %v62
    %s65 = scalar_lea.vmem %s0, 5
    %v66 = vld [vmem:[%s65] sm:$0x1]
    %67 = vrot.lane.b32.xlu0 %v66, 40
    %v68 = vpop.permute.xlu0 %67
    %vm69 = vcmask 392512
    %70 = vst.msk [vmem:[#allocation0] sm:$0x1] %vm69, %v68
    %s71 = scalar_lea.vmem %s0, 4
    %v72 = vld [vmem:[%s71] sm:$0x1]
    %73 = vrot.lane.b32.xlu0 %v72, 32
    %v74 = vpop.permute.xlu0 %73
    %vm75 = vcmask 326912
    %76 = vst.msk [vmem:[#allocation0] sm:$0x1] %vm75, %v74
    %s77 = scalar_lea.vmem %s0, 3
    %v78 = vld [vmem:[%s77] sm:$0x1]
    %79 = vrot.lane.b32.xlu0 %v78, 24
    %v80 = vpop.permute.xlu0 %79
    %vm81 = vcmask 261312
    %82 = vst.msk [vmem:[#allocation0] sm:$0x1] %vm81, %v80
    %s83 = scalar_lea.vmem %s0, 2
    %v84 = vld [vmem:[%s83] sm:$0x1]
    %85 = vrot.lane.b32.xlu0 %v84, 16
    %v86 = vpop.permute.xlu0 %85
    %vm87 = vcmask 195712
    %88 = vst.msk [vmem:[#allocation0] sm:$0x1] %vm87, %v86
    %s89 = scalar_lea.vmem %s0, 1
    %v90 = vld [vmem:[%s89] sm:$0x1]
    %91 = vrot.lane.b32.xlu0 %v90, 8
    %v92 = vpop.permute.xlu0 %91
    %vm93 = vcmask 130112
    %94 = vst.msk [vmem:[#allocation0] sm:$0x1] %vm93, %v92
    %s96 = sshll.u32 1, 1
    %s97 = ssub.s32 %s96, 1
    %v99 = vld [vmem:[#allocation0] sm:%s97]
    %s100 = sshll.u32 1, 1
    %s101 = ssub.s32 %s100, 1
    %102 = vst [vmem:[%s1] sm:%s101] %v99

// kernel: forward_nchw.17
$region0: #{forward_nchw.17}
  #allocation0 [shape = 'u32[]', space=smem, size = 0x4, offset = 0x4, fixed_abs, tag = 'smem constant byte address 0x4 - core index']
  #allocation1 [shape = 'u32[144,128]{1,0:T(1,128)}', space=vmem, size = 0x12000, scoped, tag = 'internal scratch']
  %s0 = inlined_call_operand.vmem [shape: bf16[32,128], index: 0, kind: input, shape index: {}]
  %s1 = inlined_call_operand.vmem [shape: f32[1,128], index: 1, kind: input, shape index: {}]
  %s2 = inlined_call_operand.vmem [shape: f32[1,128], index: 2, kind: input, shape index: {}]
  %s3 = inlined_call_operand.vmem [shape: bf16[32,128], index: 3, kind: output, shape index: {}]
  %s4 = sld [smem:[#allocation0]]
  $region22: #{forward_nchw.17} parent=0
    _
  %s6 = ssub.s32 1, %s4
  %s7 = scalar_select 0, %s6, %s4
  // Predicated region
  $region2: #{forward_nchw.17} parent=0 // pred_check
    _
  $region3: #{forward_nchw.17} parent=0 // pred_check_branch
    %9 = sbr.rel (0) target = $region5
  $region4: #{forward_nchw.17} parent=0 // pred_region
    _
  $region5: #{forward_nchw.17} parent=0 // pred_fallthru
    _
  // Predicated region
  $region6: #{forward_nchw.17} parent=0 // pred_check
    _
  $region7: #{forward_nchw.17} parent=0 // pred_check_branch
    %11 = sbr.rel (0) target = $region9
  $region8: #{forward_nchw.17} parent=0 // pred_region
    _
  $region9: #{forward_nchw.17} parent=0 // pred_fallthru
    _
  // Predicated region
  $region10: #{forward_nchw.17} parent=0 // pred_check
    _
  $region11: #{forward_nchw.17} parent=0 // pred_check_branch
    %13 = sbr.rel (0) target = $region13
  $region12: #{forward_nchw.17} parent=0 // pred_region
    _
  $region13: #{forward_nchw.17} parent=0 // pred_fallthru
    _
  %v14 = vld [vmem:[%s0] sm:$0xf]
  %v15 = vld [vmem:[%s0 + $0x4] sm:$0xf]
  %v16 = vld [vmem:[%s0 + $0x8] sm:$0xf]
  %v17 = vld [vmem:[%s0 + $0xc] sm:$0xf]
  %v18 = vunpack.c.l.bf16 %v14
  %v19 = vunpack.c.l.bf16 %v15
  %v20 = vunpack.c.l.bf16 %v16
  %v21 = vunpack.c.l.bf16 %v17
  %v22 = vld [vmem:[%s1] sm:$0x1]
  %v24 = vlaneseq
  %v25 = vshrl.u32 %v24, 7
  %v26 = vsub.s32 0, %v25
  %v27 = vrot.slane %v22, %v26
  %v29 = vsub.f32 %v18, %v27
  %v30 = vsub.f32 %v19, %v27
  %v31 = vsub.f32 %v20, %v27
  %v32 = vsub.f32 %v21, %v27
  %v33 = vld [vmem:[%s2] sm:$0x1]
  %v35 = vlaneseq
  %v36 = vshrl.u32 %v35, 7
  %v37 = vsub.s32 0, %v36
  %v38 = vrot.slane %v33, %v37
  %v40 = vmul.f32 %v29, %v38
  %v41 = vmul.f32 %v30, %v38
  %v42 = vmul.f32 %v31, %v38
  %v43 = vmul.f32 %v32, %v38
  %v44 = vmax.f32 %v40, 0.0
  %v45 = vmax.f32 %v41, 0.0
  %v46 = vmax.f32 %v42, 0.0
  %v47 = vmax.f32 %v43, 0.0
  %v48 = vpack.c.bf16 %v45, %v44
  %v49 = vpack.c.bf16 %v47, %v46
  %v52 = vunpack.c.l.b16 %v48
  %v53 = vunpack.c.h.b16 %v48
  %v54 = vunpack.c.l.b16 %v49
  %v55 = vunpack.c.h.b16 %v49
  %v56 = vpack.c.b16 %v52, %v52
  %v57 = vpack.c.b16 %v53, %v53
  %v58 = vpack.c.b16 %v54, %v54
  %v59 = vpack.c.b16 %v55, %v55
  %64 = vst [vmem:[%s3] sm:$0xf] %v56
  %65 = vst [vmem:[%s3 + $0x4] sm:$0xf] %v57
  %66 = vst [vmem:[%s3 + $0x8] sm:$0xf] %v58
  %67 = vst [vmem:[%s3 + $0xc] sm:$0xf] %v59
  // Predicated region
  $region14: #{forward_nchw.17} parent=0 // pred_check
    _
  $region15: #{forward_nchw.17} parent=0 // pred_check_branch
    %69 = sbr.rel (0) target = $region17
  $region16: #{forward_nchw.17} parent=0 // pred_region
    _
  $region17: #{forward_nchw.17} parent=0 // pred_fallthru
    _
  // Predicated region
  $region18: #{forward_nchw.17} parent=0 // pred_check
    _
  $region19: #{forward_nchw.17} parent=0 // pred_check_branch
    %71 = sbr.rel (0) target = $region21
  $region20: #{forward_nchw.17} parent=0 // pred_region
    _
  $region21: #{forward_nchw.17} parent=0 // pred_fallthru
    _

// kernel: forward_nchw.16
$region0: #{forward_nchw.16}
  #allocation0 [shape = 'u32[]', space=smem, size = 0x4, offset = 0x4, fixed_abs, tag = 'smem constant byte address 0x4 - core index']
  #allocation1 [shape = 'u32[144,128]{1,0:T(1,128)}', space=vmem, size = 0x12000, scoped, tag = 'internal scratch']
  %s0 = inlined_call_operand.vmem [shape: bf16[2,16,64], index: 0, kind: input, shape index: {}]
  %s1 = inlined_call_operand.vmem [shape: bf16[3,64,128], index: 1, kind: input, shape index: {}]
  %s2 = inlined_call_operand.vmem [shape: bf16[2,16,128], index: 2, kind: output, shape index: {0}]
  %s3 = inlined_call_operand.vmem [shape: f32[2,1,128], index: 3, kind: output, shape index: {1}]
  %s4 = inlined_call_operand.vmem [shape: f32[2,1,128], index: 4, kind: output, shape index: {2}]
  %5 = xla_tuple %s2, %s3, %s4
  %s6 = sld [smem:[#allocation0]]
  $region57: #{forward_nchw.16} parent=0
    _
  %s8 = ssub.s32 1, %s6
  %s9 = scalar_select 0, %s8, %s6
  loop: start=0, step=1, limit=4
  $region2: #{forward_nchw.16} parent=0 // loop_pre_header
    _
  $region3: #{forward_nchw.16} parent=0 // loop_header
    %s11 = sphi 0, %s15
    %p12 = scmp.ge.s32.totalorder %s11, 4
    %s21 = sphi 0, %s23
    %s24 = sphi 0, %s21
    %s25 = sphi 0, %s24
    %s41 = sphi 0, %s25
    %s45 = sphi 0, %s45
    %s47 = sphi 0, %s45
    %s48 = sphi 0, %s47
    %s62 = sphi 0, %s48
    %s68 = sphi 0, %s70
    %s71 = sphi 0, %s68
    %s72 = sphi 0, %s71
    %s88 = sphi 0, %s72
    %s94 = sphi 0, %s96
    %s97 = sphi 0, %s94
    %s98 = sphi 0, %s97
    %s114 = sphi 0, %s98
    %s120 = sphi 0, %s122
    %s123 = sphi 0, %s120
    %s124 = sphi 0, %s123
    %s140 = sphi 0, %s124
  $region4: #{forward_nchw.16} parent=0 // loop_header_branch
    %14 = sbr.rel (%p12) target = $region8
  $region5: #{forward_nchw.16} parent=0 // loop_body
    %s16 = ssub.s32 %s11, 1
    %s17 = ssub.s32 %s11, 2
    %s18 = sadd.s32 %s11, 1
    %s19 = ssub.s32 %s11, %s18
    %p20 = scmp.eq.s32.totalorder %s19, 0
    %s22 = sadd.s32 %s21, 1
    %s23 = scalar_select %p20, %s21, %s22
    %p26 = pneg %p20
    %p27 = scmp.eq.s32.totalorder %s11, 1
    %p28 = por %p26, %p27
    %p29 = scmp.ne.s32.totalorder %s21, %s24
    %p30 = scmp.eq.s32.totalorder %s11, 0
    %p31 = por %p29, %p30
    %p32 = scmp.ne.s32.totalorder %s21, %s24
    %p33 = scmp.eq.s32.totalorder %s16, 1
    %p34 = por %p32, %p33
    %p35 = scmp.ne.s32.totalorder %s24, %s25
    %p36 = scmp.eq.s32.totalorder %s16, 0
    %p37 = por %p35, %p36
    %p38 = scmp.ne.s32.totalorder %s24, %s25
    %p39 = scmp.eq.s32.totalorder %s17, 1
    %p40 = por %p38, %p39
    %p42 = scmp.ne.s32.totalorder %s25, %s41
    %p43 = scmp.eq.s32.totalorder %s17, 0
    %p44 = por %p42, %p43
    %s46 = sadd.s32 %s45, 1
    %p49 = scmp.eq.s32.totalorder %s11, 1
    %p50 = scmp.ne.s32.totalorder %s45, %s47
    %p51 = scmp.eq.s32.totalorder %s11, 0
    %p52 = por %p50, %p51
    %p53 = scmp.ne.s32.totalorder %s45, %s47
    %p54 = scmp.eq.s32.totalorder %s16, 1
    %p55 = por %p53, %p54
    %p56 = scmp.ne.s32.totalorder %s47, %s48
    %p57 = scmp.eq.s32.totalorder %s16, 0
    %p58 = por %p56, %p57
    %p59 = scmp.ne.s32.totalorder %s47, %s48
    %p60 = scmp.eq.s32.totalorder %s17, 1
    %p61 = por %p59, %p60
    %p63 = scmp.ne.s32.totalorder %s48, %s62
    %p64 = scmp.eq.s32.totalorder %s17, 0
    %p65 = por %p63, %p64
    %s66 = ssub.s32 %s11, %s18
    %p67 = scmp.eq.s32.totalorder %s66, 0
    %s69 = sadd.s32 %s68, 1
    %s70 = scalar_select %p67, %s68, %s69
    %p73 = pneg %p67
    %p74 = scmp.eq.s32.totalorder %s11, 1
    %p75 = por %p73, %p74
    %p76 = scmp.ne.s32.totalorder %s68, %s71
    %p77 = scmp.eq.s32.totalorder %s11, 0
    %p78 = por %p76, %p77
    %p79 = scmp.ne.s32.totalorder %s68, %s71
    %p80 = scmp.eq.s32.totalorder %s16, 1
    %p81 = por %p79, %p80
    %p82 = scmp.ne.s32.totalorder %s71, %s72
    %p83 = scmp.eq.s32.totalorder %s16, 0
    %p84 = por %p82, %p83
    %p85 = scmp.ne.s32.totalorder %s71, %s72
    %p86 = scmp.eq.s32.totalorder %s17, 1
    %p87 = por %p85, %p86
    %p89 = scmp.ne.s32.totalorder %s72, %s88
    %p90 = scmp.eq.s32.totalorder %s17, 0
    %p91 = por %p89, %p90
    %s92 = ssub.s32 %s11, %s18
    %p93 = scmp.eq.s32.totalorder %s92, 0
    %s95 = sadd.s32 %s94, 1
    %s96 = scalar_select %p93, %s94, %s95
    %p99 = pneg %p93
    %p100 = scmp.eq.s32.totalorder %s11, 1
    %p101 = por %p99, %p100
    %p102 = scmp.ne.s32.totalorder %s94, %s97
    %p103 = scmp.eq.s32.totalorder %s11, 0
    %p104 = por %p102, %p103
    %p105 = scmp.ne.s32.totalorder %s94, %s97
    %p106 = scmp.eq.s32.totalorder %s16, 1
    %p107 = por %p105, %p106
    %p108 = scmp.ne.s32.totalorder %s97, %s98
    %p109 = scmp.eq.s32.totalorder %s16, 0
    %p110 = por %p108, %p109
    %p111 = scmp.ne.s32.totalorder %s97, %s98
    %p112 = scmp.eq.s32.totalorder %s17, 1
    %p113 = por %p111, %p112
    %p115 = scmp.ne.s32.totalorder %s98, %s114
    %p116 = scmp.eq.s32.totalorder %s17, 0
    %p117 = por %p115, %p116
    %s118 = ssub.s32 %s11, %s18
    %p119 = scmp.eq.s32.totalorder %s118, 0
    %s121 = sadd.s32 %s120, 1
    %s122 = scalar_select %p119, %s120, %s121
    %p125 = pneg %p119
    %p126 = scmp.eq.s32.totalorder %s11, 1
    %p127 = por %p125, %p126
    %p128 = scmp.ne.s32.totalorder %s120, %s123
    %p129 = scmp.eq.s32.totalorder %s11, 0
    %p130 = por %p128, %p129
    %p131 = scmp.ne.s32.totalorder %s120, %s123
    %p132 = scmp.eq.s32.totalorder %s16, 1
    %p133 = por %p131, %p132
    %p134 = scmp.ne.s32.totalorder %s123, %s124
    %p135 = scmp.eq.s32.totalorder %s16, 0
    %p136 = por %p134, %p135
    %p137 = scmp.ne.s32.totalorder %s123, %s124
    %p138 = scmp.eq.s32.totalorder %s17, 1
    %p139 = por %p137, %p138
    %p141 = scmp.ne.s32.totalorder %s124, %s140
    %p142 = scmp.eq.s32.totalorder %s17, 0
    %p143 = por %p141, %p142
    %p144 = scmp.le.s32.totalorder 1, %s11
    %p145 = scmp.lt.s32.totalorder %s11, 3
    %p146 = pnand %p144, %p145
    %p147 = pneg %p146
    // Predicated region
    $region9: #{forward_nchw.16} parent=5 // pred_check
      _
    $region10: #{forward_nchw.16} parent=5 // pred_check_branch
      %149 = sbr.rel (%p146) target = $region12
    $region11: #{forward_nchw.16} parent=5 // pred_region
      %s150 = ssub.s32 %s11, 1
      // Predicated region
      $region13: #{forward_nchw.16} parent=11 // pred_check
        %p151 = pneg %p58
      $region14: #{forward_nchw.16} parent=11 // pred_check_branch
        %153 = sbr.rel (%p151) target = $region16
      $region15: #{forward_nchw.16} parent=11 // pred_region
        _
      $region16: #{forward_nchw.16} parent=11 // pred_fallthru
        _
    $region12: #{forward_nchw.16} parent=5 // pred_fallthru
      _
    %p154 = scmp.lt.s32.totalorder %s11, 2
    // Predicated region
    $region17: #{forward_nchw.16} parent=5 // pred_check
      %p155 = pneg %p154
    $region18: #{forward_nchw.16} parent=5 // pred_check_branch
      %157 = sbr.rel (%p155) target = $region20
    $region19: #{forward_nchw.16} parent=5 // pred_region
      // Predicated region
      $region21: #{forward_nchw.16} parent=19 // pred_check
        %p158 = pneg %p31
      $region22: #{forward_nchw.16} parent=19 // pred_check_branch
        %160 = sbr.rel (%p158) target = $region24
      $region23: #{forward_nchw.16} parent=19 // pred_region
        %p161 = scmp.lt.s32.totalorder %s11, 1
        %s162 = scalar_select %p161, %s11, 1
        %s163 = smul.addr %s162, 2
        %s164 = smul.addr %s163, 4
        %s165 = scalar_lea.vmem %s0, %s164
      $region24: #{forward_nchw.16} parent=19 // pred_fallthru
        _
    $region20: #{forward_nchw.16} parent=5 // pred_fallthru
      _
    %p166 = scmp.le.s32.totalorder 1, %s11
    %p167 = scmp.lt.s32.totalorder %s11, 3
    %p168 = pnand %p166, %p167
    %p169 = pneg %p168
    // Predicated region
    $region25: #{forward_nchw.16} parent=5 // pred_check
      _
    $region26: #{forward_nchw.16} parent=5 // pred_check_branch
      %171 = sbr.rel (%p168) target = $region28
    $region27: #{forward_nchw.16} parent=5 // pred_region
      %s172 = ssub.s32 %s11, 1
      %p173 = scmp.lt.s32.totalorder %s16, 1
      %s174 = scalar_select %p173, %s16, 1
      %s175 = smul.addr %s174, 2
      %s176 = smul.addr %s175, 4
      %s177 = scalar_lea.vmem %s0, %s176
      %p178 = pneg %p37
      %p179 = pneg %p34
      %p180 = pneg %p58
      %p181 = pneg %p55
      %p182 = pneg %p84
      %p183 = pneg %p81
      %p184 = scmp.lt.s32.totalorder %s16, 1
      %s185 = scalar_select %p184, %s16, 1
      %s186 = smul.addr %s185, 2
      %s187 = smul.addr %s186, 4
      %s188 = scalar_lea.vmem %s2, %s187
      %p189 = pneg %p110
      %p190 = pneg %p107
      %p191 = scmp.lt.s32.totalorder %s16, 1
      %s192 = scalar_select %p191, %s16, 1
      %s193 = scalar_lea.vmem %s3, %s192
      %p194 = pneg %p136
      %p195 = pneg %p133
      %p196 = scmp.lt.s32.totalorder %s16, 1
      %s197 = scalar_select %p196, %s16, 1
      %s198 = scalar_lea.vmem %s4, %s197
      %p199 = scmp.lt.s32.totalorder %s16, 1
      %s200 = scalar_select %p199, %s16, 1
      %s201 = smul.addr %s200, 2
      %s202 = smul.addr %s201, 4
      %s203 = scalar_lea.vmem %s0, %s202
      %p204 = scmp.lt.s32.totalorder %s16, 1
      %s205 = scalar_select %p204, %s16, 1
      %s206 = smul.addr %s205, 2
      %s207 = smul.addr %s206, 4
      %s208 = scalar_lea.vmem %s2, %s207
      %p209 = scmp.lt.s32.totalorder %s16, 1
      %s210 = scalar_select %p209, %s16, 1
      %s211 = scalar_lea.vmem %s3, %s210
      %p212 = scmp.lt.s32.totalorder %s16, 1
      %s213 = scalar_select %p212, %s16, 1
      %s214 = scalar_lea.vmem %s4, %s213
      %v216 = vld [vmem:[%s203] sm:$0xf]
      %v217 = vld [vmem:[%s203 + $0x4] sm:$0xf]
      %v220 = vunpack.c.l.b16 %v216
      %v221 = vunpack.c.l.b16 %v217
      %v222 = vpack.c.b16 %v221, %v220
      %v224 = vshrl.u32 %v222, 16
      %v226 = vrot.slane %v224, 7
      %v227 = vshll.u32 %v222, 16
      %v229 = vor.u32 %v226, %v227
      %vm231 = vcmask 1040384
      %vm232 = vsmask.f32 256
      %vm233 = vmand %vm231, %vm232
      %v234 = vsel %vm233, 0, %v229
      %v235 = vrot.slane %v227, 1
      %v236 = vor.u32 %v224, %v235
      %vm238 = vcmask 1047552
      %vm239 = vsmask.f32 7424
      %vm240 = vmand %vm238, %vm239
      %v241 = vsel %vm240, %v236, 0
      %v242 = vld [vmem:[%s1] sm:$0xf]
      %v243 = vld [vmem:[%s1 + $0x4] sm:$0xf]
      %v244 = vld [vmem:[%s1 + $0x8] sm:$0xf]
      %v245 = vld [vmem:[%s1 + $0xc] sm:$0xf]
      %v246 = vld [vmem:[%s1 + $0x10] sm:$0xf]
      %v247 = vld [vmem:[%s1 + $0x14] sm:$0xf]
      %v248 = vld [vmem:[%s1 + $0x18] sm:$0xf]
      %v249 = vld [vmem:[%s1 + $0x1c] sm:$0xf]
      %s250 = scalar_lea.vmem %s1, 32
      %v251 = vld [vmem:[%s250] sm:$0xf]
      %v252 = vld [vmem:[%s250 + $0x4] sm:$0xf]
      %v253 = vld [vmem:[%s250 + $0x8] sm:$0xf]
      %v254 = vld [vmem:[%s250 + $0xc] sm:$0xf]
      %v255 = vld [vmem:[%s250 + $0x10] sm:$0xf]
      %v256 = vld [vmem:[%s250 + $0x14] sm:$0xf]
      %v257 = vld [vmem:[%s250 + $0x18] sm:$0xf]
      %v258 = vld [vmem:[%s250 + $0x1c] sm:$0xf]
      %v267 = vunpack.c.l.b16 %v251
      %v268 = vunpack.c.l.b16 %v252
      %v269 = vunpack.c.l.b16 %v253
      %v270 = vunpack.c.l.b16 %v254
      %v271 = vunpack.c.l.b16 %v255
      %v272 = vunpack.c.l.b16 %v256
      %v273 = vunpack.c.l.b16 %v257
      %v274 = vunpack.c.l.b16 %v258
      %v275 = vpack.c.b16 %v268, %v267
      %v276 = vpack.c.b16 %v270, %v269
      %v277 = vpack.c.b16 %v272, %v271
      %v278 = vpack.c.b16 %v274, %v273
      %vm283 = vcmask 523264
      %v284 = vsel %vm283, %v222, 0
      %286 = vmatprep.subr.bf16.mxu0 0
      %287 = vmatpush1.bf16.msra.mxu0 0
      %288 = vmatprep.subr.bf16.mxu0 0
      %289 = vmatpush1.bf16.msra.mxu0 0
      %290 = vmatprep.subr.bf16.mxu0 0
      %291 = vmatpush1.bf16.msra.mxu0 0
      %292 = vmatprep.subr.bf16.mxu0 0
      %293 = vmatpush1.bf16.msra.mxu0 0
      %294 = vmatprep.subr.bf16.mxu0 0
      %295 = vmatpush1.bf16.msra.mxu0 %v278
      %296 = vmatprep.subr.bf16.mxu0 0
      %297 = vmatpush1.bf16.msra.mxu0 %v277
      %298 = vmatprep.subr.bf16.mxu0 0
      %299 = vmatpush1.bf16.msra.mxu0 %v276
      %300 = vmatprep.subr.bf16.mxu0 0
      %301 = vmatpush1.bf16.msra.mxu0 %v275
      %302 = vmatprep.subr.bf16.mxu0 0
      %303 = vmatpush2.bf16.msra.mxu0 0
      %304 = vmatprep.subr.bf16.mxu0 0
      %305 = vmatpush2.bf16.msra.mxu0 0
      %306 = vmatprep.subr.bf16.mxu0 0
      %307 = vmatpush2.bf16.msra.mxu0 0
      %308 = vmatprep.subr.bf16.mxu0 0
      %309 = vmatpush2.bf16.msra.mxu0 0
      %310 = vmatprep.subr.bf16.mxu0 0
      %311 = vmatpush2.bf16.msra.mxu0 0
      %312 = vmatprep.subr.bf16.mxu0 0
      %313 = vmatpush2.bf16.msra.mxu0 0
      %314 = vmatprep.subr.bf16.mxu0 0
      %315 = vmatpush2.bf16.msra.mxu0 0
      %316 = vmatprep.subr.bf16.mxu0 0
      %317 = vmatpush2.bf16.msra.mxu0 0
      %318 = vmatprep.mubr.bf16.mxu0 0
      %319 = vmatmul.mubr.bf16.gmra.mxu0 %v284
      %v320 = vpop.f32.mrf.mxu0
      %v321 = vadd.f32 0.0, %v320
      %v322 = vpop.f32.mrf.mxu0
      %v323 = vpop.f32.mrf.mxu0
      %v324 = vadd.f32 0.0, %v323
      %v325 = vpop.f32.mrf.mxu0
      %326 = vdwg.mxu0
      %v335 = vunpack.c.l.b16 %v242
      %v336 = vunpack.c.l.b16 %v243
      %v337 = vunpack.c.l.b16 %v244
      %v338 = vunpack.c.l.b16 %v245
      %v339 = vunpack.c.l.b16 %v246
      %v340 = vunpack.c.l.b16 %v247
      %v341 = vunpack.c.l.b16 %v248
      %v342 = vunpack.c.l.b16 %v249
      %v343 = vpack.c.b16 %v336, %v335
      %v344 = vpack.c.b16 %v338, %v337
      %v345 = vpack.c.b16 %v340, %v339
      %v346 = vpack.c.b16 %v342, %v341
      %v352 = vsel %vm283, %v234, 0
      %354 = vmatprep.subr.bf16.mxu0 0
      %355 = vmatpush1.bf16.msra.mxu0 0
      %356 = vmatprep.subr.bf16.mxu0 0
      %357 = vmatpush1.bf16.msra.mxu0 0
      %358 = vmatprep.subr.bf16.mxu0 0
      %359 = vmatpush1.bf16.msra.mxu0 0
      %360 = vmatprep.subr.bf16.mxu0 0
      %361 = vmatpush1.bf16.msra.mxu0 0
      %362 = vmatprep.subr.bf16.mxu0 0
      %363 = vmatpush1.bf16.msra.mxu0 %v346
      %364 = vmatprep.subr.bf16.mxu0 0
      %365 = vmatpush1.bf16.msra.mxu0 %v345
      %366 = vmatprep.subr.bf16.mxu0 0
      %367 = vmatpush1.bf16.msra.mxu0 %v344
      %368 = vmatprep.subr.bf16.mxu0 0
      %369 = vmatpush1.bf16.msra.mxu0 %v343
      %370 = vmatprep.subr.bf16.mxu0 0
      %371 = vmatpush2.bf16.msra.mxu0 0
      %372 = vmatprep.subr.bf16.mxu0 0
      %373 = vmatpush2.bf16.msra.mxu0 0
      %374 = vmatprep.subr.bf16.mxu0 0
      %375 = vmatpush2.bf16.msra.mxu0 0
      %376 = vmatprep.subr.bf16.mxu0 0
      %377 = vmatpush2.bf16.msra.mxu0 0
      %378 = vmatprep.subr.bf16.mxu0 0
      %379 = vmatpush2.bf16.msra.mxu0 0
      %380 = vmatprep.subr.bf16.mxu0 0
      %381 = vmatpush2.bf16.msra.mxu0 0
      %382 = vmatprep.subr.bf16.mxu0 0
      %383 = vmatpush2.bf16.msra.mxu0 0
      %384 = vmatprep.subr.bf16.mxu0 0
      %385 = vmatpush2.bf16.msra.mxu0 0
      %386 = vmatprep.mubr.bf16.mxu0 0
      %387 = vmatmul.mubr.bf16.gmra.mxu0 %v352
      %v388 = vpop.f32.mrf.mxu0
      %v389 = vadd.f32 %v321, %v388
      %v390 = vpop.f32.mrf.mxu0
      %v391 = vpop.f32.mrf.mxu0
      %v392 = vadd.f32 %v324, %v391
      %v393 = vpop.f32.mrf.mxu0
      %394 = vdwg.mxu0
      %s395 = scalar_lea.vmem %s1, 64
      %v396 = vld [vmem:[%s395] sm:$0xf]
      %v397 = vld [vmem:[%s395 + $0x4] sm:$0xf]
      %v398 = vld [vmem:[%s395 + $0x8] sm:$0xf]
      %v399 = vld [vmem:[%s395 + $0xc] sm:$0xf]
      %v400 = vld [vmem:[%s395 + $0x10] sm:$0xf]
      %v401 = vld [vmem:[%s395 + $0x14] sm:$0xf]
      %v402 = vld [vmem:[%s395 + $0x18] sm:$0xf]
      %v403 = vld [vmem:[%s395 + $0x1c] sm:$0xf]
      %v412 = vunpack.c.l.b16 %v396
      %v413 = vunpack.c.l.b16 %v397
      %v414 = vunpack.c.l.b16 %v398
      %v415 = vunpack.c.l.b16 %v399
      %v416 = vunpack.c.l.b16 %v400
      %v417 = vunpack.c.l.b16 %v401
      %v418 = vunpack.c.l.b16 %v402
      %v419 = vunpack.c.l.b16 %v403
      %v420 = vpack.c.b16 %v413, %v412
      %v421 = vpack.c.b16 %v415, %v414
      %v422 = vpack.c.b16 %v417, %v416
      %v423 = vpack.c.b16 %v419, %v418
      %v429 = vsel %vm283, %v241, 0
      %431 = vmatprep.subr.bf16.mxu0 0
      %432 = vmatpush1.bf16.msra.mxu0 0
      %433 = vmatprep.subr.bf16.mxu0 0
      %434 = vmatpush1.bf16.msra.mxu0 0
      %435 = vmatprep.subr.bf16.mxu0 0
      %436 = vmatpush1.bf16.msra.mxu0 0
      %437 = vmatprep.subr.bf16.mxu0 0
      %438 = vmatpush1.bf16.msra.mxu0 0
      %439 = vmatprep.subr.bf16.mxu0 0
      %440 = vmatpush1.bf16.msra.mxu0 %v423
      %441 = vmatprep.subr.bf16.mxu0 0
      %442 = vmatpush1.bf16.msra.mxu0 %v422
      %443 = vmatprep.subr.bf16.mxu0 0
      %444 = vmatpush1.bf16.msra.mxu0 %v421
      %445 = vmatprep.subr.bf16.mxu0 0
      %446 = vmatpush1.bf16.msra.mxu0 %v420
      %447 = vmatprep.subr.bf16.mxu0 0
      %448 = vmatpush2.bf16.msra.mxu0 0
      %449 = vmatprep.subr.bf16.mxu0 0
      %450 = vmatpush2.bf16.msra.mxu0 0
      %451 = vmatprep.subr.bf16.mxu0 0
      %452 = vmatpush2.bf16.msra.mxu0 0
      %453 = vmatprep.subr.bf16.mxu0 0
      %454 = vmatpush2.bf16.msra.mxu0 0
      %455 = vmatprep.subr.bf16.mxu0 0
      %456 = vmatpush2.bf16.msra.mxu0 0
      %457 = vmatprep.subr.bf16.mxu0 0
      %458 = vmatpush2.bf16.msra.mxu0 0
      %459 = vmatprep.subr.bf16.mxu0 0
      %460 = vmatpush2.bf16.msra.mxu0 0
      %461 = vmatprep.subr.bf16.mxu0 0
      %462 = vmatpush2.bf16.msra.mxu0 0
      %463 = vmatprep.mubr.bf16.mxu0 0
      %464 = vmatmul.mubr.bf16.gmra.mxu0 %v429
      %v465 = vpop.f32.mrf.mxu0
      %v466 = vadd.f32 0.0, %v465
      %v467 = vpop.f32.mrf.mxu0
      %v468 = vpop.f32.mrf.mxu0
      %v469 = vadd.f32 0.0, %v468
      %v470 = vpop.f32.mrf.mxu0
      %471 = vdwg.mxu0
      %v472 = vadd.f32 %v389, %v466
      %v473 = vadd.f32 %v392, %v469
      %v474 = vpack.c.bf16 %v473, %v472
      %v476 = vunpack.c.l.b16 %v474
      %v477 = vunpack.c.h.b16 %v474
      %v478 = vpack.c.b16 %v476, %v476
      %v479 = vpack.c.b16 %v477, %v477
      %482 = vst [vmem:[%s208] sm:$0xf] %v478
      %483 = vst [vmem:[%s208 + $0x4] sm:$0xf] %v479
      %v484 = vadd.f32 %v472, %v473
      %v485 = vrot.slane %v484, 4
      %v486 = vadd.f32 %v484, %v485
      %v487 = vrot.slane %v486, 2
      %v488 = vadd.f32 %v486, %v487
      %v489 = vrot.slane %v488, 1
      %v490 = vadd.f32 %v488, %v489
      %491 = vst [vmem:[%s211] sm:$0x1] %v490
      %v492 = vmul.f32 %v472, %v472
      %v493 = vmul.f32 %v473, %v473
      %v494 = vadd.f32 %v492, %v493
      %v495 = vrot.slane %v494, 4
      %v496 = vadd.f32 %v494, %v495
      %v497 = vrot.slane %v496, 2
      %v498 = vadd.f32 %v496, %v497
      %v499 = vrot.slane %v498, 1
      %v500 = vadd.f32 %v498, %v499
      %501 = vst [vmem:[%s214] sm:$0x1] %v500
      %p502 = scmp.lt.s32.totalorder %s16, 1
      %s503 = scalar_select %p502, %s16, 1
      %s504 = smul.addr %s503, 2
      %s505 = smul.addr %s504, 4
      %s506 = scalar_lea.vmem %s2, %s505
      %p507 = scmp.lt.s32.totalorder %s16, 1
      %s508 = scalar_select %p507, %s16, 1
      %s509 = scalar_lea.vmem %s3, %s508
      %p510 = scmp.lt.s32.totalorder %s16, 1
      %s511 = scalar_select %p510, %s16, 1
      %s512 = scalar_lea.vmem %s4, %s511
      // Predicated region
      $region29: #{forward_nchw.16} parent=27 // pred_check
        %p513 = pneg %p81
      $region30: #{forward_nchw.16} parent=27 // pred_check_branch
        %515 = sbr.rel (%p513) target = $region32
      $region31: #{forward_nchw.16} parent=27 // pred_region
        _
      $region32: #{forward_nchw.16} parent=27 // pred_fallthru
        _
      // Predicated region
      $region33: #{forward_nchw.16} parent=27 // pred_check
        %p516 = pneg %p107
      $region34: #{forward_nchw.16} parent=27 // pred_check_branch
        %518 = sbr.rel (%p516) target = $region36
      $region35: #{forward_nchw.16} parent=27 // pred_region
        _
      $region36: #{forward_nchw.16} parent=27 // pred_fallthru
        _
      // Predicated region
      $region37: #{forward_nchw.16} parent=27 // pred_check
        %p519 = pneg %p133
      $region38: #{forward_nchw.16} parent=27 // pred_check_branch
        %521 = sbr.rel (%p519) target = $region40
      $region39: #{forward_nchw.16} parent=27 // pred_region
        _
      $region40: #{forward_nchw.16} parent=27 // pred_fallthru
        _
    $region28: #{forward_nchw.16} parent=5 // pred_fallthru
      _
    %p522 = scmp.le.s32.totalorder 2, %s11
    // Predicated region
    $region41: #{forward_nchw.16} parent=5 // pred_check
      %p523 = pneg %p522
    $region42: #{forward_nchw.16} parent=5 // pred_check_branch
      %525 = sbr.rel (%p523) target = $region44
    $region43: #{forward_nchw.16} parent=5 // pred_region
      %s526 = ssub.s32 %s11, 2
      // Predicated region
      $region45: #{forward_nchw.16} parent=43 // pred_check
        %p527 = pneg %p87
      $region46: #{forward_nchw.16} parent=43 // pred_check_branch
        %529 = sbr.rel (%p527) target = $region48
      $region47: #{forward_nchw.16} parent=43 // pred_region
        %p530 = scmp.lt.s32.totalorder %s17, 1
        %s531 = scalar_select %p530, %s17, 1
        %s532 = smul.addr %s531, 2
        %s533 = smul.addr %s532, 4
        %s534 = scalar_lea.vmem %s2, %s533
      $region48: #{forward_nchw.16} parent=43 // pred_fallthru
        _
      // Predicated region
      $region49: #{forward_nchw.16} parent=43 // pred_check
        %p535 = pneg %p113
      $region50: #{forward_nchw.16} parent=43 // pred_check_branch
        %537 = sbr.rel (%p535) target = $region52
      $region51: #{forward_nchw.16} parent=43 // pred_region
        %p538 = scmp.lt.s32.totalorder %s17, 1
        %s539 = scalar_select %p538, %s17, 1
        %s540 = scalar_lea.vmem %s3, %s539
      $region52: #{forward_nchw.16} parent=43 // pred_fallthru
        _
      // Predicated region
      $region53: #{forward_nchw.16} parent=43 // pred_check
        %p541 = pneg %p139
      $region54: #{forward_nchw.16} parent=43 // pred_check_branch
        %543 = sbr.rel (%p541) target = $region56
      $region55: #{forward_nchw.16} parent=43 // pred_region
        %p544 = scmp.lt.s32.totalorder %s17, 1
        %s545 = scalar_select %p544, %s17, 1
        %s546 = scalar_lea.vmem %s4, %s545
      $region56: #{forward_nchw.16} parent=43 // pred_fallthru
        _
    $region44: #{forward_nchw.16} parent=5 // pred_fallthru
      _
  $region6: #{forward_nchw.16} parent=0 // loop_footer
    %s15 = sadd.s32 1, %s11
  $region7: #{forward_nchw.16} parent=0 // loop_footer_branch
    %10 = sbr.rel target = $region3
  $region8: #{forward_nchw.16} parent=0 // loop_exit
    _

// kernel: forward_nchw.18
$region0: #{forward_nchw.18}
  #allocation0 [shape = 'u32[]', space=smem, size = 0x4, offset = 0x4, fixed_abs, tag = 'smem constant byte address 0x4 - core index']
  #allocation1 [shape = 'u32[144,128]{1,0:T(1,128)}', space=vmem, size = 0x12000, scoped, tag = 'internal scratch']
  %s0 = inlined_call_operand.vmem [shape: bf16[2,16,128], index: 0, kind: input, shape index: {}]
  %s1 = inlined_call_operand.vmem [shape: bf16[3,128,128], index: 1, kind: input, shape index: {}]
  %s2 = inlined_call_operand.vmem [shape: bf16[2,16,128], index: 2, kind: output, shape index: {0}]
  %s3 = inlined_call_operand.vmem [shape: f32[2,1,128], index: 3, kind: output, shape index: {1}]
  %s4 = inlined_call_operand.vmem [shape: f32[2,1,128], index: 4, kind: output, shape index: {2}]
  %5 = xla_tuple %s2, %s3, %s4
  %s6 = sld [smem:[#allocation0]]
  $region57: #{forward_nchw.18} parent=0
    _
  %s8 = ssub.s32 1, %s6
  %s9 = scalar_select 0, %s8, %s6
  loop: start=0, step=1, limit=4
  $region2: #{forward_nchw.18} parent=0 // loop_pre_header
    _
  $region3: #{forward_nchw.18} parent=0 // loop_header
    %s11 = sphi 0, %s15
    %p12 = scmp.ge.s32.totalorder %s11, 4
    %s21 = sphi 0, %s23
    %s24 = sphi 0, %s21
    %s25 = sphi 0, %s24
    %s41 = sphi 0, %s25
    %s45 = sphi 0, %s45
    %s47 = sphi 0, %s45
    %s48 = sphi 0, %s47
    %s62 = sphi 0, %s48
    %s68 = sphi 0, %s70
    %s71 = sphi 0, %s68
    %s72 = sphi 0, %s71
    %s88 = sphi 0, %s72
    %s94 = sphi 0, %s96
    %s97 = sphi 0, %s94
    %s98 = sphi 0, %s97
    %s114 = sphi 0, %s98
    %s120 = sphi 0, %s122
    %s123 = sphi 0, %s120
    %s124 = sphi 0, %s123
    %s140 = sphi 0, %s124
  $region4: #{forward_nchw.18} parent=0 // loop_header_branch
    %14 = sbr.rel (%p12) target = $region8
  $region5: #{forward_nchw.18} parent=0 // loop_body
    %s16 = ssub.s32 %s11, 1
    %s17 = ssub.s32 %s11, 2
    %s18 = sadd.s32 %s11, 1
    %s19 = ssub.s32 %s11, %s18
    %p20 = scmp.eq.s32.totalorder %s19, 0
    %s22 = sadd.s32 %s21, 1
    %s23 = scalar_select %p20, %s21, %s22
    %p26 = pneg %p20
    %p27 = scmp.eq.s32.totalorder %s11, 1
    %p28 = por %p26, %p27
    %p29 = scmp.ne.s32.totalorder %s21, %s24
    %p30 = scmp.eq.s32.totalorder %s11, 0
    %p31 = por %p29, %p30
    %p32 = scmp.ne.s32.totalorder %s21, %s24
    %p33 = scmp.eq.s32.totalorder %s16, 1
    %p34 = por %p32, %p33
    %p35 = scmp.ne.s32.totalorder %s24, %s25
    %p36 = scmp.eq.s32.totalorder %s16, 0
    %p37 = por %p35, %p36
    %p38 = scmp.ne.s32.totalorder %s24, %s25
    %p39 = scmp.eq.s32.totalorder %s17, 1
    %p40 = por %p38, %p39
    %p42 = scmp.ne.s32.totalorder %s25, %s41
    %p43 = scmp.eq.s32.totalorder %s17, 0
    %p44 = por %p42, %p43
    %s46 = sadd.s32 %s45, 1
    %p49 = scmp.eq.s32.totalorder %s11, 1
    %p50 = scmp.ne.s32.totalorder %s45, %s47
    %p51 = scmp.eq.s32.totalorder %s11, 0
    %p52 = por %p50, %p51
    %p53 = scmp.ne.s32.totalorder %s45, %s47
    %p54 = scmp.eq.s32.totalorder %s16, 1
    %p55 = por %p53, %p54
    %p56 = scmp.ne.s32.totalorder %s47, %s48
    %p57 = scmp.eq.s32.totalorder %s16, 0
    %p58 = por %p56, %p57
    %p59 = scmp.ne.s32.totalorder %s47, %s48
    %p60 = scmp.eq.s32.totalorder %s17, 1
    %p61 = por %p59, %p60
    %p63 = scmp.ne.s32.totalorder %s48, %s62
    %p64 = scmp.eq.s32.totalorder %s17, 0
    %p65 = por %p63, %p64
    %s66 = ssub.s32 %s11, %s18
    %p67 = scmp.eq.s32.totalorder %s66, 0
    %s69 = sadd.s32 %s68, 1
    %s70 = scalar_select %p67, %s68, %s69
    %p73 = pneg %p67
    %p74 = scmp.eq.s32.totalorder %s11, 1
    %p75 = por %p73, %p74
    %p76 = scmp.ne.s32.totalorder %s68, %s71
    %p77 = scmp.eq.s32.totalorder %s11, 0
    %p78 = por %p76, %p77
    %p79 = scmp.ne.s32.totalorder %s68, %s71
    %p80 = scmp.eq.s32.totalorder %s16, 1
    %p81 = por %p79, %p80
    %p82 = scmp.ne.s32.totalorder %s71, %s72
    %p83 = scmp.eq.s32.totalorder %s16, 0
    %p84 = por %p82, %p83
    %p85 = scmp.ne.s32.totalorder %s71, %s72
    %p86 = scmp.eq.s32.totalorder %s17, 1
    %p87 = por %p85, %p86
    %p89 = scmp.ne.s32.totalorder %s72, %s88
    %p90 = scmp.eq.s32.totalorder %s17, 0
    %p91 = por %p89, %p90
    %s92 = ssub.s32 %s11, %s18
    %p93 = scmp.eq.s32.totalorder %s92, 0
    %s95 = sadd.s32 %s94, 1
    %s96 = scalar_select %p93, %s94, %s95
    %p99 = pneg %p93
    %p100 = scmp.eq.s32.totalorder %s11, 1
    %p101 = por %p99, %p100
    %p102 = scmp.ne.s32.totalorder %s94, %s97
    %p103 = scmp.eq.s32.totalorder %s11, 0
    %p104 = por %p102, %p103
    %p105 = scmp.ne.s32.totalorder %s94, %s97
    %p106 = scmp.eq.s32.totalorder %s16, 1
    %p107 = por %p105, %p106
    %p108 = scmp.ne.s32.totalorder %s97, %s98
    %p109 = scmp.eq.s32.totalorder %s16, 0
    %p110 = por %p108, %p109
    %p111 = scmp.ne.s32.totalorder %s97, %s98
    %p112 = scmp.eq.s32.totalorder %s17, 1
    %p113 = por %p111, %p112
    %p115 = scmp.ne.s32.totalorder %s98, %s114
    %p116 = scmp.eq.s32.totalorder %s17, 0
    %p117 = por %p115, %p116
    %s118 = ssub.s32 %s11, %s18
    %p119 = scmp.eq.s32.totalorder %s118, 0
    %s121 = sadd.s32 %s120, 1
    %s122 = scalar_select %p119, %s120, %s121
    %p125 = pneg %p119
    %p126 = scmp.eq.s32.totalorder %s11, 1
    %p127 = por %p125, %p126
    %p128 = scmp.ne.s32.totalorder %s120, %s123
    %p129 = scmp.eq.s32.totalorder %s11, 0
    %p130 = por %p128, %p129
    %p131 = scmp.ne.s32.totalorder %s120, %s123
    %p132 = scmp.eq.s32.totalorder %s16, 1
    %p133 = por %p131, %p132
    %p134 = scmp.ne.s32.totalorder %s123, %s124
    %p135 = scmp.eq.s32.totalorder %s16, 0
    %p136 = por %p134, %p135
    %p137 = scmp.ne.s32.totalorder %s123, %s124
    %p138 = scmp.eq.s32.totalorder %s17, 1
    %p139 = por %p137, %p138
    %p141 = scmp.ne.s32.totalorder %s124, %s140
    %p142 = scmp.eq.s32.totalorder %s17, 0
    %p143 = por %p141, %p142
    %p144 = scmp.le.s32.totalorder 1, %s11
    %p145 = scmp.lt.s32.totalorder %s11, 3
    %p146 = pnand %p144, %p145
    %p147 = pneg %p146
    // Predicated region
    $region9: #{forward_nchw.18} parent=5 // pred_check
      _
    $region10: #{forward_nchw.18} parent=5 // pred_check_branch
      %149 = sbr.rel (%p146) target = $region12
    $region11: #{forward_nchw.18} parent=5 // pred_region
      %s150 = ssub.s32 %s11, 1
      // Predicated region
      $region13: #{forward_nchw.18} parent=11 // pred_check
        %p151 = pneg %p58
      $region14: #{forward_nchw.18} parent=11 // pred_check_branch
        %153 = sbr.rel (%p151) target = $region16
      $region15: #{forward_nchw.18} parent=11 // pred_region
        _
      $region16: #{forward_nchw.18} parent=11 // pred_fallthru
        _
    $region12: #{forward_nchw.18} parent=5 // pred_fallthru
      _
    %p154 = scmp.lt.s32.totalorder %s11, 2
    // Predicated region
    $region17: #{forward_nchw.18} parent=5 // pred_check
      %p155 = pneg %p154
    $region18: #{forward_nchw.18} parent=5 // pred_check_branch
      %157 = sbr.rel (%p155) target = $region20
    $region19: #{forward_nchw.18} parent=5 // pred_region
      // Predicated region
      $region21: #{forward_nchw.18} parent=19 // pred_check
        %p158 = pneg %p31
      $region22: #{forward_nchw.18} parent=19 // pred_check_branch
        %160 = sbr.rel (%p158) target = $region24
      $region23: #{forward_nchw.18} parent=19 // pred_region
        %p161 = scmp.lt.s32.totalorder %s11, 1
        %s162 = scalar_select %p161, %s11, 1
        %s163 = smul.addr %s162, 2
        %s164 = smul.addr %s163, 4
        %s165 = scalar_lea.vmem %s0, %s164
      $region24: #{forward_nchw.18} parent=19 // pred_fallthru
        _
    $region20: #{forward_nchw.18} parent=5 // pred_fallthru
      _
    %p166 = scmp.le.s32.totalorder 1, %s11
    %p167 = scmp.lt.s32.totalorder %s11, 3
    %p168 = pnand %p166, %p167
    %p169 = pneg %p168
    // Predicated region
    $region25: #{forward_nchw.18} parent=5 // pred_check
      _
    $region26: #{forward_nchw.18} parent=5 // pred_check_branch
      %171 = sbr.rel (%p168) target = $region28
    $region27: #{forward_nchw.18} parent=5 // pred_region
      %s172 = ssub.s32 %s11, 1
      %p173 = scmp.lt.s32.totalorder %s16, 1
      %s174 = scalar_select %p173, %s16, 1
      %s175 = smul.addr %s174, 2
      %s176 = smul.addr %s175, 4
      %s177 = scalar_lea.vmem %s0, %s176
      %p178 = pneg %p37
      %p179 = pneg %p34
      %p180 = pneg %p58
      %p181 = pneg %p55
      %p182 = pneg %p84
      %p183 = pneg %p81
      %p184 = scmp.lt.s32.totalorder %s16, 1
      %s185 = scalar_select %p184, %s16, 1
      %s186 = smul.addr %s185, 2
      %s187 = smul.addr %s186, 4
      %s188 = scalar_lea.vmem %s2, %s187
      %p189 = pneg %p110
      %p190 = pneg %p107
      %p191 = scmp.lt.s32.totalorder %s16, 1
      %s192 = scalar_select %p191, %s16, 1
      %s193 = scalar_lea.vmem %s3, %s192
      %p194 = pneg %p136
      %p195 = pneg %p133
      %p196 = scmp.lt.s32.totalorder %s16, 1
      %s197 = scalar_select %p196, %s16, 1
      %s198 = scalar_lea.vmem %s4, %s197
      %p199 = scmp.lt.s32.totalorder %s16, 1
      %s200 = scalar_select %p199, %s16, 1
      %s201 = smul.addr %s200, 2
      %s202 = smul.addr %s201, 4
      %s203 = scalar_lea.vmem %s0, %s202
      %p204 = scmp.lt.s32.totalorder %s16, 1
      %s205 = scalar_select %p204, %s16, 1
      %s206 = smul.addr %s205, 2
      %s207 = smul.addr %s206, 4
      %s208 = scalar_lea.vmem %s2, %s207
      %p209 = scmp.lt.s32.totalorder %s16, 1
      %s210 = scalar_select %p209, %s16, 1
      %s211 = scalar_lea.vmem %s3, %s210
      %p212 = scmp.lt.s32.totalorder %s16, 1
      %s213 = scalar_select %p212, %s16, 1
      %s214 = scalar_lea.vmem %s4, %s213
      %v216 = vld [vmem:[%s203] sm:$0xf]
      %v217 = vld [vmem:[%s203 + $0x4] sm:$0xf]
      %v220 = vunpack.c.l.b16 %v216
      %v221 = vunpack.c.l.b16 %v217
      %v222 = vpack.c.b16 %v221, %v220
      %v224 = vshrl.u32 %v222, 16
      %v226 = vrot.slane %v224, 7
      %v227 = vshll.u32 %v222, 16
      %v229 = vor.u32 %v226, %v227
      %vm231 = vcmask 1040384
      %vm232 = vsmask.f32 256
      %vm233 = vmand %vm231, %vm232
      %v234 = vsel %vm233, 0, %v229
      %v235 = vrot.slane %v227, 1
      %v236 = vor.u32 %v224, %v235
      %vm238 = vcmask 1047552
      %vm239 = vsmask.f32 7424
      %vm240 = vmand %vm238, %vm239
      %v241 = vsel %vm240, %v236, 0
      %v242 = vld [vmem:[%s1] sm:$0xf]
      %v243 = vld [vmem:[%s1 + $0x4] sm:$0xf]
      %v244 = vld [vmem:[%s1 + $0x8] sm:$0xf]
      %v245 = vld [vmem:[%s1 + $0xc] sm:$0xf]
      %v246 = vld [vmem:[%s1 + $0x10] sm:$0xf]
      %v247 = vld [vmem:[%s1 + $0x14] sm:$0xf]
      %v248 = vld [vmem:[%s1 + $0x18] sm:$0xf]
      %v249 = vld [vmem:[%s1 + $0x1c] sm:$0xf]
      %v250 = vld [vmem:[%s1 + $0x20] sm:$0xf]
      %v251 = vld [vmem:[%s1 + $0x24] sm:$0xf]
      %v252 = vld [vmem:[%s1 + $0x28] sm:$0xf]
      %v253 = vld [vmem:[%s1 + $0x2c] sm:$0xf]
      %v254 = vld [vmem:[%s1 + $0x30] sm:$0xf]
      %v255 = vld [vmem:[%s1 + $0x34] sm:$0xf]
      %v256 = vld [vmem:[%s1 + $0x38] sm:$0xf]
      %v257 = vld [vmem:[%s1 + $0x3c] sm:$0xf]
      %s258 = scalar_lea.vmem %s1, 64
      %v259 = vld [vmem:[%s258] sm:$0xf]
      %v260 = vld [vmem:[%s258 + $0x4] sm:$0xf]
      %v261 = vld [vmem:[%s258 + $0x8] sm:$0xf]
      %v262 = vld [vmem:[%s258 + $0xc] sm:$0xf]
      %v263 = vld [vmem:[%s258 + $0x10] sm:$0xf]
      %v264 = vld [vmem:[%s258 + $0x14] sm:$0xf]
      %v265 = vld [vmem:[%s258 + $0x18] sm:$0xf]
      %v266 = vld [vmem:[%s258 + $0x1c] sm:$0xf]
      %v267 = vld [vmem:[%s258 + $0x20] sm:$0xf]
      %v268 = vld [vmem:[%s258 + $0x24] sm:$0xf]
      %v269 = vld [vmem:[%s258 + $0x28] sm:$0xf]
      %v270 = vld [vmem:[%s258 + $0x2c] sm:$0xf]
      %v271 = vld [vmem:[%s258 + $0x30] sm:$0xf]
      %v272 = vld [vmem:[%s258 + $0x34] sm:$0xf]
      %v273 = vld [vmem:[%s258 + $0x38] sm:$0xf]
      %v274 = vld [vmem:[%s258 + $0x3c] sm:$0xf]
      %v292 = vunpack.c.l.b16 %v259
      %v293 = vunpack.c.l.b16 %v260
      %v294 = vunpack.c.l.b16 %v261
      %v295 = vunpack.c.l.b16 %v262
      %v296 = vunpack.c.l.b16 %v263
      %v297 = vunpack.c.l.b16 %v264
      %v298 = vunpack.c.l.b16 %v265
      %v299 = vunpack.c.l.b16 %v266
      %v300 = vunpack.c.l.b16 %v267
      %v301 = vunpack.c.l.b16 %v268
      %v302 = vunpack.c.l.b16 %v269
      %v303 = vunpack.c.l.b16 %v270
      %v304 = vunpack.c.l.b16 %v271
      %v305 = vunpack.c.l.b16 %v272
      %v306 = vunpack.c.l.b16 %v273
      %v307 = vunpack.c.l.b16 %v274
      %v308 = vpack.c.b16 %v293, %v292
      %v309 = vpack.c.b16 %v295, %v294
      %v310 = vpack.c.b16 %v297, %v296
      %v311 = vpack.c.b16 %v299, %v298
      %v312 = vpack.c.b16 %v301, %v300
      %v313 = vpack.c.b16 %v303, %v302
      %v314 = vpack.c.b16 %v305, %v304
      %v315 = vpack.c.b16 %v307, %v306
      %324 = vmatprep.subr.bf16.mxu0 0
      %325 = vmatpush1.bf16.msra.mxu0 %v315
      %326 = vmatprep.subr.bf16.mxu0 0
      %327 = vmatpush1.bf16.msra.mxu0 %v314
      %328 = vmatprep.subr.bf16.mxu0 0
      %329 = vmatpush1.bf16.msra.mxu0 %v313
      %330 = vmatprep.subr.bf16.mxu0 0
      %331 = vmatpush1.bf16.msra.mxu0 %v312
      %332 = vmatprep.subr.bf16.mxu0 0
      %333 = vmatpush1.bf16.msra.mxu0 %v311
      %334 = vmatprep.subr.bf16.mxu0 0
      %335 = vmatpush1.bf16.msra.mxu0 %v310
      %336 = vmatprep.subr.bf16.mxu0 0
      %337 = vmatpush1.bf16.msra.mxu0 %v309
      %338 = vmatprep.subr.bf16.mxu0 0
      %339 = vmatpush1.bf16.msra.mxu0 %v308
      %340 = vmatprep.subr.bf16.mxu0 0
      %341 = vmatpush2.bf16.msra.mxu0 0
      %342 = vmatprep.subr.bf16.mxu0 0
      %343 = vmatpush2.bf16.msra.mxu0 0
      %344 = vmatprep.subr.bf16.mxu0 0
      %345 = vmatpush2.bf16.msra.mxu0 0
      %346 = vmatprep.subr.bf16.mxu0 0
      %347 = vmatpush2.bf16.msra.mxu0 0
      %348 = vmatprep.subr.bf16.mxu0 0
      %349 = vmatpush2.bf16.msra.mxu0 0
      %350 = vmatprep.subr.bf16.mxu0 0
      %351 = vmatpush2.bf16.msra.mxu0 0
      %352 = vmatprep.subr.bf16.mxu0 0
      %353 = vmatpush2.bf16.msra.mxu0 0
      %354 = vmatprep.subr.bf16.mxu0 0
      %355 = vmatpush2.bf16.msra.mxu0 0
      %356 = vmatprep.mubr.bf16.mxu0 0
      %357 = vmatmul.mubr.bf16.gmra.mxu0 %v222
      %v358 = vpop.f32.mrf.mxu0
      %v359 = vadd.f32 0.0, %v358
      %v360 = vpop.f32.mrf.mxu0
      %v361 = vpop.f32.mrf.mxu0
      %v362 = vadd.f32 0.0, %v361
      %v363 = vpop.f32.mrf.mxu0
      %364 = vdwg.mxu0
      %v381 = vunpack.c.l.b16 %v242
      %v382 = vunpack.c.l.b16 %v243
      %v383 = vunpack.c.l.b16 %v244
      %v384 = vunpack.c.l.b16 %v245
      %v385 = vunpack.c.l.b16 %v246
      %v386 = vunpack.c.l.b16 %v247
      %v387 = vunpack.c.l.b16 %v248
      %v388 = vunpack.c.l.b16 %v249
      %v389 = vunpack.c.l.b16 %v250
      %v390 = vunpack.c.l.b16 %v251
      %v391 = vunpack.c.l.b16 %v252
      %v392 = vunpack.c.l.b16 %v253
      %v393 = vunpack.c.l.b16 %v254
      %v394 = vunpack.c.l.b16 %v255
      %v395 = vunpack.c.l.b16 %v256
      %v396 = vunpack.c.l.b16 %v257
      %v397 = vpack.c.b16 %v382, %v381
      %v398 = vpack.c.b16 %v384, %v383
      %v399 = vpack.c.b16 %v386, %v385
      %v400 = vpack.c.b16 %v388, %v387
      %v401 = vpack.c.b16 %v390, %v389
      %v402 = vpack.c.b16 %v392, %v391
      %v403 = vpack.c.b16 %v394, %v393
      %v404 = vpack.c.b16 %v396, %v395
      %413 = vmatprep.subr.bf16.mxu0 0
      %414 = vmatpush1.bf16.msra.mxu0 %v404
      %415 = vmatprep.subr.bf16.mxu0 0
      %416 = vmatpush1.bf16.msra.mxu0 %v403
      %417 = vmatprep.subr.bf16.mxu0 0
      %418 = vmatpush1.bf16.msra.mxu0 %v402
      %419 = vmatprep.subr.bf16.mxu0 0
      %420 = vmatpush1.bf16.msra.mxu0 %v401
      %421 = vmatprep.subr.bf16.mxu0 0
      %422 = vmatpush1.bf16.msra.mxu0 %v400
      %423 = vmatprep.subr.bf16.mxu0 0
      %424 = vmatpush1.bf16.msra.mxu0 %v399
      %425 = vmatprep.subr.bf16.mxu0 0
      %426 = vmatpush1.bf16.msra.mxu0 %v398
      %427 = vmatprep.subr.bf16.mxu0 0
      %428 = vmatpush1.bf16.msra.mxu0 %v397
      %429 = vmatprep.subr.bf16.mxu0 0
      %430 = vmatpush2.bf16.msra.mxu0 0
      %431 = vmatprep.subr.bf16.mxu0 0
      %432 = vmatpush2.bf16.msra.mxu0 0
      %433 = vmatprep.subr.bf16.mxu0 0
      %434 = vmatpush2.bf16.msra.mxu0 0
      %435 = vmatprep.subr.bf16.mxu0 0
      %436 = vmatpush2.bf16.msra.mxu0 0
      %437 = vmatprep.subr.bf16.mxu0 0
      %438 = vmatpush2.bf16.msra.mxu0 0
      %439 = vmatprep.subr.bf16.mxu0 0
      %440 = vmatpush2.bf16.msra.mxu0 0
      %441 = vmatprep.subr.bf16.mxu0 0
      %442 = vmatpush2.bf16.msra.mxu0 0
      %443 = vmatprep.subr.bf16.mxu0 0
      %444 = vmatpush2.bf16.msra.mxu0 0
      %445 = vmatprep.mubr.bf16.mxu0 0
      %446 = vmatmul.mubr.bf16.gmra.mxu0 %v234
      %v447 = vpop.f32.mrf.mxu0
      %v448 = vadd.f32 %v359, %v447
      %v449 = vpop.f32.mrf.mxu0
      %v450 = vpop.f32.mrf.mxu0
      %v451 = vadd.f32 %v362, %v450
      %v452 = vpop.f32.mrf.mxu0
      %453 = vdwg.mxu0
      %s454 = scalar_lea.vmem %s1, 128
      %v455 = vld [vmem:[%s454] sm:$0xf]
      %v456 = vld [vmem:[%s454 + $0x4] sm:$0xf]
      %v457 = vld [vmem:[%s454 + $0x8] sm:$0xf]
      %v458 = vld [vmem:[%s454 + $0xc] sm:$0xf]
      %v459 = vld [vmem:[%s454 + $0x10] sm:$0xf]
      %v460 = vld [vmem:[%s454 + $0x14] sm:$0xf]
      %v461 = vld [vmem:[%s454 + $0x18] sm:$0xf]
      %v462 = vld [vmem:[%s454 + $0x1c] sm:$0xf]
      %v463 = vld [vmem:[%s454 + $0x20] sm:$0xf]
      %v464 = vld [vmem:[%s454 + $0x24] sm:$0xf]
      %v465 = vld [vmem:[%s454 + $0x28] sm:$0xf]
      %v466 = vld [vmem:[%s454 + $0x2c] sm:$0xf]
      %v467 = vld [vmem:[%s454 + $0x30] sm:$0xf]
      %v468 = vld [vmem:[%s454 + $0x34] sm:$0xf]
      %v469 = vld [vmem:[%s454 + $0x38] sm:$0xf]
      %v470 = vld [vmem:[%s454 + $0x3c] sm:$0xf]
      %v487 = vunpack.c.l.b16 %v455
      %v488 = vunpack.c.l.b16 %v456
      %v489 = vunpack.c.l.b16 %v457
      %v490 = vunpack.c.l.b16 %v458
      %v491 = vunpack.c.l.b16 %v459
      %v492 = vunpack.c.l.b16 %v460
      %v493 = vunpack.c.l.b16 %v461
      %v494 = vunpack.c.l.b16 %v462
      %v495 = vunpack.c.l.b16 %v463
      %v496 = vunpack.c.l.b16 %v464
      %v497 = vunpack.c.l.b16 %v465
      %v498 = vunpack.c.l.b16 %v466
      %v499 = vunpack.c.l.b16 %v467
      %v500 = vunpack.c.l.b16 %v468
      %v501 = vunpack.c.l.b16 %v469
      %v502 = vunpack.c.l.b16 %v470
      %v503 = vpack.c.b16 %v488, %v487
      %v504 = vpack.c.b16 %v490, %v489
      %v505 = vpack.c.b16 %v492, %v491
      %v506 = vpack.c.b16 %v494, %v493
      %v507 = vpack.c.b16 %v496, %v495
      %v508 = vpack.c.b16 %v498, %v497
      %v509 = vpack.c.b16 %v500, %v499
      %v510 = vpack.c.b16 %v502, %v501
      %519 = vmatprep.subr.bf16.mxu0 0
      %520 = vmatpush1.bf16.msra.mxu0 %v510
      %521 = vmatprep.subr.bf16.mxu0 0
      %522 = vmatpush1.bf16.msra.mxu0 %v509
      %523 = vmatprep.subr.bf16.mxu0 0
      %524 = vmatpush1.bf16.msra.mxu0 %v508
      %525 = vmatprep.subr.bf16.mxu0 0
      %526 = vmatpush1.bf16.msra.mxu0 %v507
      %527 = vmatprep.subr.bf16.mxu0 0
      %528 = vmatpush1.bf16.msra.mxu0 %v506
      %529 = vmatprep.subr.bf16.mxu0 0
      %530 = vmatpush1.bf16.msra.mxu0 %v505
      %531 = vmatprep.subr.bf16.mxu0 0
      %532 = vmatpush1.bf16.msra.mxu0 %v504
      %533 = vmatprep.subr.bf16.mxu0 0
      %534 = vmatpush1.bf16.msra.mxu0 %v503
      %535 = vmatprep.subr.bf16.mxu0 0
      %536 = vmatpush2.bf16.msra.mxu0 0
      %537 = vmatprep.subr.bf16.mxu0 0
      %538 = vmatpush2.bf16.msra.mxu0 0
      %539 = vmatprep.subr.bf16.mxu0 0
      %540 = vmatpush2.bf16.msra.mxu0 0
      %541 = vmatprep.subr.bf16.mxu0 0
      %542 = vmatpush2.bf16.msra.mxu0 0
      %543 = vmatprep.subr.bf16.mxu0 0
      %544 = vmatpush2.bf16.msra.mxu0 0
      %545 = vmatprep.subr.bf16.mxu0 0
      %546 = vmatpush2.bf16.msra.mxu0 0
      %547 = vmatprep.subr.bf16.mxu0 0
      %548 = vmatpush2.bf16.msra.mxu0 0
      %549 = vmatprep.subr.bf16.mxu0 0
      %550 = vmatpush2.bf16.msra.mxu0 0
      %551 = vmatprep.mubr.bf16.mxu0 0
      %552 = vmatmul.mubr.bf16.gmra.mxu0 %v241
      %v553 = vpop.f32.mrf.mxu0
      %v554 = vadd.f32 0.0, %v553
      %v555 = vpop.f32.mrf.mxu0
      %v556 = vpop.f32.mrf.mxu0
      %v557 = vadd.f32 0.0, %v556
      %v558 = vpop.f32.mrf.mxu0
      %559 = vdwg.mxu0
      %v560 = vadd.f32 %v448, %v554
      %v561 = vadd.f32 %v451, %v557
      %v562 = vpack.c.bf16 %v561, %v560
      %v564 = vunpack.c.l.b16 %v562
      %v565 = vunpack.c.h.b16 %v562
      %v566 = vpack.c.b16 %v564, %v564
      %v567 = vpack.c.b16 %v565, %v565
      %570 = vst [vmem:[%s208] sm:$0xf] %v566
      %571 = vst [vmem:[%s208 + $0x4] sm:$0xf] %v567
      %v572 = vadd.f32 %v560, %v561
      %v573 = vrot.slane %v572, 4
      %v574 = vadd.f32 %v572, %v573
      %v575 = vrot.slane %v574, 2
      %v576 = vadd.f32 %v574, %v575
      %v577 = vrot.slane %v576, 1
      %v578 = vadd.f32 %v576, %v577
      %579 = vst [vmem:[%s211] sm:$0x1] %v578
      %v580 = vmul.f32 %v560, %v560
      %v581 = vmul.f32 %v561, %v561
      %v582 = vadd.f32 %v580, %v581
      %v583 = vrot.slane %v582, 4
      %v584 = vadd.f32 %v582, %v583
      %v585 = vrot.slane %v584, 2
      %v586 = vadd.f32 %v584, %v585
      %v587 = vrot.slane %v586, 1
      %v588 = vadd.f32 %v586, %v587
      %589 = vst [vmem:[%s214] sm:$0x1] %v588
      %p590 = scmp.lt.s32.totalorder %s16, 1
      %s591 = scalar_select %p590, %s16, 1
      %s592 = smul.addr %s591, 2
      %s593 = smul.addr %s592, 4
      %s594 = scalar_lea.vmem %s2, %s593
      %p595 = scmp.lt.s32.totalorder %s16, 1
      %s596 = scalar_select %p595, %s16, 1
      %s597 = scalar_lea.vmem %s3, %s596
      %p598 = scmp.lt.s32.totalorder %s16, 1
      %s599 = scalar_select %p598, %s16, 1
      %s600 = scalar_lea.vmem %s4, %s599
      // Predicated region
      $region29: #{forward_nchw.18} parent=27 // pred_check
        %p601 = pneg %p81
      $region30: #{forward_nchw.18} parent=27 // pred_check_branch
        %603 = sbr.rel (%p601) target = $region32
      $region31: #{forward_nchw.18} parent=27 // pred_region
        _
      $region32: #{forward_nchw.18} parent=27 // pred_fallthru
        _
      // Predicated region
      $region33: #{forward_nchw.18} parent=27 // pred_check
        %p604 = pneg %p107
      $region34: #{forward_nchw.18} parent=27 // pred_check_branch
        %606 = sbr.rel (%p604) target = $region36
      $region35: #{forward_nchw.18} parent=27 // pred_region
        _
      $region36: #{forward_nchw.18} parent=27 // pred_fallthru
        _
      // Predicated region
      $region37: #{forward_nchw.18} parent=27 // pred_check
        %p607 = pneg %p133
      $region38: #{forward_nchw.18} parent=27 // pred_check_branch
        %609 = sbr.rel (%p607) target = $region40
      $region39: #{forward_nchw.18} parent=27 // pred_region
        _
      $region40: #{forward_nchw.18} parent=27 // pred_fallthru
        _
    $region28: #{forward_nchw.18} parent=5 // pred_fallthru
      _
    %p610 = scmp.le.s32.totalorder 2, %s11
    // Predicated region
    $region41: #{forward_nchw.18} parent=5 // pred_check
      %p611 = pneg %p610
    $region42: #{forward_nchw.18} parent=5 // pred_check_branch
      %613 = sbr.rel (%p611) target = $region44
    $region43: #{forward_nchw.18} parent=5 // pred_region
      %s614 = ssub.s32 %s11, 2
      // Predicated region
      $region45: #{forward_nchw.18} parent=43 // pred_check
        %p615 = pneg %p87
      $region46: #{forward_nchw.18} parent=43 // pred_check_branch
        %617 = sbr.rel (%p615) target = $region48
      $region47: #{forward_nchw.18} parent=43 // pred_region
        %p618 = scmp.lt.s32.totalorder %s17, 1
        %s619 = scalar_select %p618, %s17, 1
        %s620 = smul.addr %s619, 2
        %s621 = smul.addr %s620, 4
        %s622 = scalar_lea.vmem %s2, %s621
      $region48: #{forward_nchw.18} parent=43 // pred_fallthru
        _
      // Predicated region
      $region49: #{forward_nchw.18} parent=43 // pred_check
        %p623 = pneg %p113
      $region50: #{forward_nchw.18} parent=43 // pred_check_branch
        %625 = sbr.rel (%p623) target = $region52
      $region51: #{forward_nchw.18} parent=43 // pred_region
        %p626 = scmp.lt.s32.totalorder %s17, 1
        %s627 = scalar_select %p626, %s17, 1
        %s628 = scalar_lea.vmem %s3, %s627
      $region52: #{forward_nchw.18} parent=43 // pred_fallthru
        _
      // Predicated region
      $region53: #{forward_nchw.18} parent=43 // pred_check
        %p629 = pneg %p139
      $region54: #{forward_nchw.18} parent=43 // pred_check_branch
        %631 = sbr.rel (%p629) target = $region56
      $region55: #{forward_nchw.18} parent=43 // pred_region
        %p632 = scmp.lt.s32.totalorder %s17, 1
        %s633 = scalar_select %p632, %s17, 1
        %s634 = scalar_lea.vmem %s4, %s633
      $region56: #{forward_nchw.18} parent=43 // pred_fallthru
        _
    $region44: #{forward_nchw.18} parent=5 // pred_fallthru
      _
  $region6: #{forward_nchw.18} parent=0 // loop_footer
    %s15 = sadd.s32 1, %s11
  $region7: #{forward_nchw.18} parent=0 // loop_footer_branch
    %10 = sbr.rel target = $region3
  $region8: #{forward_nchw.18} parent=0 // loop_exit
    _

// kernel: tile.103
$region0: #{tile.103}
  #allocation0 [shape = 's32[1]{0}', space=sflag, size = 0x4, scoped, tag = 'scoped memory for tile.103']
  %s0 = inlined_call_operand.vmem [shape: f32[8], index: 0, kind: input, shape index: {}]
  %s1 = inlined_call_operand.vmem [shape: f32[8,8], index: 1, kind: output, shape index: {}]
  // Predicated region
  $region2: #{tile.103} parent=0 // pred_check
    _
  $region3: #{tile.103} parent=0 // pred_check_branch
    %3 = sbr.rel (0) target = $region5
  $region4: #{tile.103} parent=0 // pred_region
    _
  $region5: #{tile.103} parent=0 // pred_fallthru
    _
  %v4 = vld [vmem:[%s0] ss:$0 sm:$0xff]
  %5 = vst [vmem:[%s1] sm:$0xff] %v4

// kernel: tile.104
$region0: #{tile.104}
  %s0 = inlined_call_operand.vmem [shape: f32[8,8], index: 0, kind: input, shape index: {}]
  %s1 = inlined_call_operand.vmem [shape: f32[1,64], index: 1, kind: output, shape index: {}]
  $region1: #{tile.104} parent=0
    #allocation0 [shape = 'u8[4096]{0}', space=vmem, size = 0x1000, scoped, tag = 'scoped mem for output reshape']
    %v2 = vld [vmem:[%s0] sm:$0x1]
    %vm3 = vcmask 64512
    %4 = vst.msk [vmem:[#allocation0] sm:$0x1] %vm3, %v2
    %s5 = scalar_lea.vmem %s0, 7
    %v6 = vld [vmem:[%s5] sm:$0x1]
    %7 = vrot.lane.b32.xlu0 %v6, 56
    %v8 = vpop.permute.xlu0 %7
    %vm9 = vcmask 523712
    %10 = vst.msk [vmem:[#allocation0] sm:$0x1] %vm9, %v8
    %s11 = scalar_lea.vmem %s0, 6
    %v12 = vld [vmem:[%s11] sm:$0x1]
    %13 = vrot.lane.b32.xlu0 %v12, 48
    %v14 = vpop.permute.xlu0 %13
    %vm15 = vcmask 458112
    %16 = vst.msk [vmem:[#allocation0] sm:$0x1] %vm15, %v14
    %s17 = scalar_lea.vmem %s0, 5
    %v18 = vld [vmem:[%s17] sm:$0x1]
    %19 = vrot.lane.b32.xlu0 %v18, 40
    %v20 = vpop.permute.xlu0 %19
    %vm21 = vcmask 392512
    %22 = vst.msk [vmem:[#allocation0] sm:$0x1] %vm21, %v20
    %s23 = scalar_lea.vmem %s0, 4
    %v24 = vld [vmem:[%s23] sm:$0x1]
    %25 = vrot.lane.b32.xlu0 %v24, 32
    %v26 = vpop.permute.xlu0 %25
    %vm27 = vcmask 326912
    %28 = vst.msk [vmem:[#allocation0] sm:$0x1] %vm27, %v26
    %s29 = scalar_lea.vmem %s0, 3
    %v30 = vld [vmem:[%s29] sm:$0x1]
    %31 = vrot.lane.b32.xlu0 %v30, 24
    %v32 = vpop.permute.xlu0 %31
    %vm33 = vcmask 261312
    %34 = vst.msk [vmem:[#allocation0] sm:$0x1] %vm33, %v32
    %s35 = scalar_lea.vmem %s0, 2
    %v36 = vld [vmem:[%s35] sm:$0x1]
    %37 = vrot.lane.b32.xlu0 %v36, 16
    %v38 = vpop.permute.xlu0 %37
    %vm39 = vcmask 195712
    %40 = vst.msk [vmem:[#allocation0] sm:$0x1] %vm39, %v38
    %s41 = scalar_lea.vmem %s0, 1
    %v42 = vld [vmem:[%s41] sm:$0x1]
    %43 = vrot.lane.b32.xlu0 %v42, 8
    %v44 = vpop.permute.xlu0 %43
    %vm45 = vcmask 130112
    %46 = vst.msk [vmem:[#allocation0] sm:$0x1] %vm45, %v44
    %s48 = sshll.u32 1, 1
    %s49 = ssub.s32 %s48, 1
    %v51 = vld [vmem:[#allocation0] sm:%s49]
    %s52 = sshll.u32 1, 1
    %s53 = ssub.s32 %s52, 1
    %54 = vst [vmem:[%s1] sm:%s53] %v51

// kernel: forward_nchw.20
$region0: #{forward_nchw.20}
  #allocation0 [shape = 'u32[]', space=smem, size = 0x4, offset = 0x4, fixed_abs, tag = 'smem constant byte address 0x4 - core index']
  #allocation1 [shape = 'u32[144,128]{1,0:T(1,128)}', space=vmem, size = 0x12000, scoped, tag = 'internal scratch']
  %s0 = inlined_call_operand.vmem [shape: bf16[16,256], index: 0, kind: input, shape index: {}]
  %s1 = inlined_call_operand.vmem [shape: bf16[256,64], index: 1, kind: input, shape index: {}]
  %s2 = inlined_call_operand.vmem [shape: bf16[16,64], index: 2, kind: output, shape index: {0}]
  %s3 = inlined_call_operand.vmem [shape: f32[1,1,64], index: 3, kind: output, shape index: {1}]
  %s4 = inlined_call_operand.vmem [shape: f32[1,1,64], index: 4, kind: output, shape index: {2}]
  %5 = xla_tuple %s2, %s3, %s4
  %s6 = sld [smem:[#allocation0]]
  $region34: #{forward_nchw.20} parent=0
    _
  %s8 = ssub.s32 1, %s6
  %s9 = scalar_select 0, %s8, %s6
  // Predicated region
  $region2: #{forward_nchw.20} parent=0 // pred_check
    _
  $region3: #{forward_nchw.20} parent=0 // pred_check_branch
    %11 = sbr.rel (0) target = $region5
  $region4: #{forward_nchw.20} parent=0 // pred_region
    _
  $region5: #{forward_nchw.20} parent=0 // pred_fallthru
    _
  // Predicated region
  $region6: #{forward_nchw.20} parent=0 // pred_check
    _
  $region7: #{forward_nchw.20} parent=0 // pred_check_branch
    %13 = sbr.rel (0) target = $region9
  $region8: #{forward_nchw.20} parent=0 // pred_region
    _
  $region9: #{forward_nchw.20} parent=0 // pred_fallthru
    _
  %v15 = vld [vmem:[%s0] sm:$0xff]
  %v16 = vld [vmem:[%s0 + $0x8] sm:$0xff]
  %v17 = vld [vmem:[%s1] sm:$0xf]
  %v18 = vld [vmem:[%s1 + $0x4] sm:$0xf]
  %v19 = vld [vmem:[%s1 + $0x8] sm:$0xf]
  %v20 = vld [vmem:[%s1 + $0xc] sm:$0xf]
  %v21 = vld [vmem:[%s1 + $0x10] sm:$0xf]
  %v22 = vld [vmem:[%s1 + $0x14] sm:$0xf]
  %v23 = vld [vmem:[%s1 + $0x18] sm:$0xf]
  %v24 = vld [vmem:[%s1 + $0x1c] sm:$0xf]
  %v25 = vld [vmem:[%s1 + $0x20] sm:$0xf]
  %v26 = vld [vmem:[%s1 + $0x24] sm:$0xf]
  %v27 = vld [vmem:[%s1 + $0x28] sm:$0xf]
  %v28 = vld [vmem:[%s1 + $0x2c] sm:$0xf]
  %v29 = vld [vmem:[%s1 + $0x30] sm:$0xf]
  %v30 = vld [vmem:[%s1 + $0x34] sm:$0xf]
  %v31 = vld [vmem:[%s1 + $0x38] sm:$0xf]
  %v32 = vld [vmem:[%s1 + $0x3c] sm:$0xf]
  %v33 = vld [vmem:[%s1 + $0x40] sm:$0xf]
  %v34 = vld [vmem:[%s1 + $0x44] sm:$0xf]
  %v35 = vld [vmem:[%s1 + $0x48] sm:$0xf]
  %v36 = vld [vmem:[%s1 + $0x4c] sm:$0xf]
  %v37 = vld [vmem:[%s1 + $0x50] sm:$0xf]
  %v38 = vld [vmem:[%s1 + $0x54] sm:$0xf]
  %v39 = vld [vmem:[%s1 + $0x58] sm:$0xf]
  %v40 = vld [vmem:[%s1 + $0x5c] sm:$0xf]
  %v41 = vld [vmem:[%s1 + $0x60] sm:$0xf]
  %v42 = vld [vmem:[%s1 + $0x64] sm:$0xf]
  %v43 = vld [vmem:[%s1 + $0x68] sm:$0xf]
  %v44 = vld [vmem:[%s1 + $0x6c] sm:$0xf]
  %v45 = vld [vmem:[%s1 + $0x70] sm:$0xf]
  %v46 = vld [vmem:[%s1 + $0x74] sm:$0xf]
  %v47 = vld [vmem:[%s1 + $0x78] sm:$0xf]
  %v48 = vld [vmem:[%s1 + $0x7c] sm:$0xf]
  %v51 = vunpack.c.l.b16 %v15
  %v52 = vunpack.c.h.b16 %v15
  %v53 = vunpack.c.l.b16 %v16
  %v54 = vunpack.c.h.b16 %v16
  %v55 = vpack.c.b16 %v53, %v51
  %v56 = vpack.c.b16 %v54, %v52
  %v91 = vunpack.c.l.b16 %v17
  %v92 = vunpack.c.l.b16 %v18
  %v93 = vunpack.c.l.b16 %v19
  %v94 = vunpack.c.l.b16 %v20
  %v95 = vunpack.c.l.b16 %v21
  %v96 = vunpack.c.l.b16 %v22
  %v97 = vunpack.c.l.b16 %v23
  %v98 = vunpack.c.l.b16 %v24
  %v99 = vunpack.c.l.b16 %v25
  %v100 = vunpack.c.l.b16 %v26
  %v101 = vunpack.c.l.b16 %v27
  %v102 = vunpack.c.l.b16 %v28
  %v103 = vunpack.c.l.b16 %v29
  %v104 = vunpack.c.l.b16 %v30
  %v105 = vunpack.c.l.b16 %v31
  %v106 = vunpack.c.l.b16 %v32
  %v107 = vunpack.c.l.b16 %v33
  %v108 = vunpack.c.l.b16 %v34
  %v109 = vunpack.c.l.b16 %v35
  %v110 = vunpack.c.l.b16 %v36
  %v111 = vunpack.c.l.b16 %v37
  %v112 = vunpack.c.l.b16 %v38
  %v113 = vunpack.c.l.b16 %v39
  %v114 = vunpack.c.l.b16 %v40
  %v115 = vunpack.c.l.b16 %v41
  %v116 = vunpack.c.l.b16 %v42
  %v117 = vunpack.c.l.b16 %v43
  %v118 = vunpack.c.l.b16 %v44
  %v119 = vunpack.c.l.b16 %v45
  %v120 = vunpack.c.l.b16 %v46
  %v121 = vunpack.c.l.b16 %v47
  %v122 = vunpack.c.l.b16 %v48
  %v123 = vpack.c.b16 %v92, %v91
  %v124 = vpack.c.b16 %v94, %v93
  %v125 = vpack.c.b16 %v96, %v95
  %v126 = vpack.c.b16 %v98, %v97
  %v127 = vpack.c.b16 %v100, %v99
  %v128 = vpack.c.b16 %v102, %v101
  %v129 = vpack.c.b16 %v104, %v103
  %v130 = vpack.c.b16 %v106, %v105
  %v131 = vpack.c.b16 %v108, %v107
  %v132 = vpack.c.b16 %v110, %v109
  %v133 = vpack.c.b16 %v112, %v111
  %v134 = vpack.c.b16 %v114, %v113
  %v135 = vpack.c.b16 %v116, %v115
  %v136 = vpack.c.b16 %v118, %v117
  %v137 = vpack.c.b16 %v120, %v119
  %v138 = vpack.c.b16 %v122, %v121
  %155 = vmatprep.subr.bf16.mxu0 0
  %156 = vmatpush1.bf16.msra.mxu0 %v130
  %157 = vmatprep.subr.bf16.mxu0 0
  %158 = vmatpush1.bf16.msra.mxu0 %v129
  %159 = vmatprep.subr.bf16.mxu0 0
  %160 = vmatpush1.bf16.msra.mxu0 %v128
  %161 = vmatprep.subr.bf16.mxu0 0
  %162 = vmatpush1.bf16.msra.mxu0 %v127
  %163 = vmatprep.subr.bf16.mxu0 0
  %164 = vmatpush1.bf16.msra.mxu0 %v126
  %165 = vmatprep.subr.bf16.mxu0 0
  %166 = vmatpush1.bf16.msra.mxu0 %v125
  %167 = vmatprep.subr.bf16.mxu0 0
  %168 = vmatpush1.bf16.msra.mxu0 %v124
  %169 = vmatprep.subr.bf16.mxu0 0
  %170 = vmatpush1.bf16.msra.mxu0 %v123
  %171 = vmatprep.subr.bf16.mxu0 0
  %172 = vmatpush2.bf16.msra.mxu0 %v138
  %173 = vmatprep.subr.bf16.mxu0 0
  %174 = vmatpush2.bf16.msra.mxu0 %v137
  %175 = vmatprep.subr.bf16.mxu0 0
  %176 = vmatpush2.bf16.msra.mxu0 %v136
  %177 = vmatprep.subr.bf16.mxu0 0
  %178 = vmatpush2.bf16.msra.mxu0 %v135
  %179 = vmatprep.subr.bf16.mxu0 0
  %180 = vmatpush2.bf16.msra.mxu0 %v134
  %181 = vmatprep.subr.bf16.mxu0 0
  %182 = vmatpush2.bf16.msra.mxu0 %v133
  %183 = vmatprep.subr.bf16.mxu0 0
  %184 = vmatpush2.bf16.msra.mxu0 %v132
  %185 = vmatprep.subr.bf16.mxu0 0
  %186 = vmatpush2.bf16.msra.mxu0 %v131
  %187 = vmatprep.mubr.bf16.mxu0 %v56
  %188 = vmatmul.mubr.bf16.gmra.mxu0 %v55
  %v189 = vpop.f32.mrf.mxu0
  %v190 = vadd.f32 0.0, %v189
  %v191 = vpop.f32.mrf.mxu0
  %v192 = vpop.f32.mrf.mxu0
  %v193 = vadd.f32 0.0, %v192
  %v194 = vpop.f32.mrf.mxu0
  %195 = vdwg.mxu0
  %v196 = vpack.c.bf16 %v193, %v190
  %v198 = vunpack.c.l.b16 %v196
  %v199 = vunpack.c.h.b16 %v196
  %v200 = vpack.c.b16 %v198, %v198
  %v201 = vpack.c.b16 %v199, %v199
  %vm204 = vcmask 519168
  %205 = vst.msk [vmem:[%s2] sm:$0xf] %vm204, %v200
  %206 = vst.msk [vmem:[%s2 + $0x4] sm:$0xf] %vm204, %v201
  %vm207 = vcmask 523264
  %v208 = vsel %vm207, %v190, 0.0
  %v209 = vsel %vm207, %v193, 0.0
  %v210 = vadd.f32 %v208, %v209
  %v211 = vrot.slane %v210, 4
  %v212 = vadd.f32 %v210, %v211
  %v213 = vrot.slane %v212, 2
  %v214 = vadd.f32 %v212, %v213
  %v215 = vrot.slane %v214, 1
  %v216 = vadd.f32 %v214, %v215
  %vm217 = vcmask 516096
  %218 = vst.msk [vmem:[%s3] sm:$0x1] %vm217, %v216
  %v219 = vmul.f32 %v190, %v190
  %v220 = vmul.f32 %v193, %v193
  %v221 = vsel %vm207, %v219, 0.0
  %v222 = vsel %vm207, %v220, 0.0
  %v223 = vadd.f32 %v221, %v222
  %v224 = vrot.slane %v223, 4
  %v225 = vadd.f32 %v223, %v224
  %v226 = vrot.slane %v225, 2
  %v227 = vadd.f32 %v225, %v226
  %v228 = vrot.slane %v227, 1
  %v229 = vadd.f32 %v227, %v228
  %230 = vst.msk [vmem:[%s4] sm:$0x1] %vm217, %v229
  // Predicated region
  $region10: #{forward_nchw.20} parent=0 // pred_check
    _
  $region11: #{forward_nchw.20} parent=0 // pred_check_branch
    %232 = sbr.rel (0) target = $region13
  $region12: #{forward_nchw.20} parent=0 // pred_region
    _
  $region13: #{forward_nchw.20} parent=0 // pred_fallthru
    _
  // Predicated region
  $region14: #{forward_nchw.20} parent=0 // pred_check
    _
  $region15: #{forward_nchw.20} parent=0 // pred_check_branch
    %234 = sbr.rel (0) target = $region17
  $region16: #{forward_nchw.20} parent=0 // pred_region
    _
  $region17: #{forward_nchw.20} parent=0 // pred_fallthru
    _
  // Predicated region
  $region18: #{forward_nchw.20} parent=0 // pred_check
    _
  $region19: #{forward_nchw.20} parent=0 // pred_check_branch
    %236 = sbr.rel (0) target = $region21
  $region20: #{forward_nchw.20} parent=0 // pred_region
    _
  $region21: #{forward_nchw.20} parent=0 // pred_fallthru
    _
  // Predicated region
  $region22: #{forward_nchw.20} parent=0 // pred_check
    _
  $region23: #{forward_nchw.20} parent=0 // pred_check_branch
    %238 = sbr.rel (0) target = $region25
  $region24: #{forward_nchw.20} parent=0 // pred_region
    _
  $region25: #{forward_nchw.20} parent=0 // pred_fallthru
    _
  // Predicated region
  $region26: #{forward_nchw.20} parent=0 // pred_check
    _
  $region27: #{forward_nchw.20} parent=0 // pred_check_branch
    %240 = sbr.rel (0) target = $region29
  $region28: #{forward_nchw.20} parent=0 // pred_region
    _
  $region29: #{forward_nchw.20} parent=0 // pred_fallthru
    _
  // Predicated region
  $region30: #{forward_nchw.20} parent=0 // pred_check
    _
  $region31: #{forward_nchw.20} parent=0 // pred_check_branch
    %242 = sbr.rel (0) target = $region33
  $region32: #{forward_nchw.20} parent=0 // pred_region
    _
  $region33: #{forward_nchw.20} parent=0 // pred_fallthru
    _

// kernel: forward_nchw.21
$region0: #{forward_nchw.21}
  #allocation0 [shape = 'u32[]', space=smem, size = 0x4, offset = 0x4, fixed_abs, tag = 'smem constant byte address 0x4 - core index']
  #allocation1 [shape = 'u32[144,128]{1,0:T(1,128)}', space=vmem, size = 0x12000, scoped, tag = 'internal scratch']
  %s0 = inlined_call_operand.vmem [shape: bf16[16,64], index: 0, kind: input, shape index: {}]
  %s1 = inlined_call_operand.vmem [shape: f32[1,64], index: 1, kind: input, shape index: {}]
  %s2 = inlined_call_operand.vmem [shape: f32[1,64], index: 2, kind: input, shape index: {}]
  %s3 = inlined_call_operand.vmem [shape: bf16[16,64], index: 3, kind: output, shape index: {}]
  %s4 = sld [smem:[#allocation0]]
  $region22: #{forward_nchw.21} parent=0
    _
  %s6 = ssub.s32 1, %s4
  %s7 = scalar_select 0, %s6, %s4
  // Predicated region
  $region2: #{forward_nchw.21} parent=0 // pred_check
    _
  $region3: #{forward_nchw.21} parent=0 // pred_check_branch
    %9 = sbr.rel (0) target = $region5
  $region4: #{forward_nchw.21} parent=0 // pred_region
    _
  $region5: #{forward_nchw.21} parent=0 // pred_fallthru
    _
  // Predicated region
  $region6: #{forward_nchw.21} parent=0 // pred_check
    _
  $region7: #{forward_nchw.21} parent=0 // pred_check_branch
    %11 = sbr.rel (0) target = $region9
  $region8: #{forward_nchw.21} parent=0 // pred_region
    _
  $region9: #{forward_nchw.21} parent=0 // pred_fallthru
    _
  // Predicated region
  $region10: #{forward_nchw.21} parent=0 // pred_check
    _
  $region11: #{forward_nchw.21} parent=0 // pred_check_branch
    %13 = sbr.rel (0) target = $region13
  $region12: #{forward_nchw.21} parent=0 // pred_region
    _
  $region13: #{forward_nchw.21} parent=0 // pred_fallthru
    _
  %v14 = vld [vmem:[%s0] sm:$0xf]
  %v15 = vld [vmem:[%s0 + $0x4] sm:$0xf]
  %v16 = vunpack.c.l.bf16 %v14
  %v17 = vunpack.c.l.bf16 %v15
  %v18 = vld [vmem:[%s1] sm:$0x1]
  %v20 = vlaneseq
  %v21 = vshrl.u32 %v20, 7
  %v22 = vsub.s32 0, %v21
  %v23 = vrot.slane %v18, %v22
  %v25 = vsub.f32 %v16, %v23
  %v26 = vsub.f32 %v17, %v23
  %v27 = vld [vmem:[%s2] sm:$0x1]
  %v29 = vlaneseq
  %v30 = vshrl.u32 %v29, 7
  %v31 = vsub.s32 0, %v30
  %v32 = vrot.slane %v27, %v31
  %v34 = vmul.f32 %v25, %v32
  %v35 = vmul.f32 %v26, %v32
  %v36 = vmax.f32 %v34, 0.0
  %v37 = vmax.f32 %v35, 0.0
  %v38 = vpack.c.bf16 %v37, %v36
  %v40 = vunpack.c.l.b16 %v38
  %v41 = vunpack.c.h.b16 %v38
  %v42 = vpack.c.b16 %v40, %v40
  %v43 = vpack.c.b16 %v41, %v41
  %vm46 = vcmask 519168
  %47 = vst.msk [vmem:[%s3] sm:$0xf] %vm46, %v42
  %48 = vst.msk [vmem:[%s3 + $0x4] sm:$0xf] %vm46, %v43
  // Predicated region
  $region14: #{forward_nchw.21} parent=0 // pred_check
    _
  $region15: #{forward_nchw.21} parent=0 // pred_check_branch
    %50 = sbr.rel (0) target = $region17
  $region16: #{forward_nchw.21} parent=0 // pred_region
    _
  $region17: #{forward_nchw.21} parent=0 // pred_fallthru
    _
  // Predicated region
  $region18: #{forward_nchw.21} parent=0 // pred_check
    _
  $region19: #{forward_nchw.21} parent=0 // pred_check_branch
    %52 = sbr.rel (0) target = $region21
  $region20: #{forward_nchw.21} parent=0 // pred_region
    _
  $region21: #{forward_nchw.21} parent=0 // pred_fallthru
    _

// kernel: tile.113
$region0: #{tile.113}
  #allocation0 [shape = 's32[1]{0}', space=sflag, size = 0x4, scoped, tag = 'scoped memory for tile.113']
  %s0 = inlined_call_operand.vmem [shape: f32[16], index: 0, kind: input, shape index: {}]
  %s1 = inlined_call_operand.vmem [shape: f32[8,16], index: 1, kind: output, shape index: {}]
  // Predicated region
  $region2: #{tile.113} parent=0 // pred_check
    _
  $region3: #{tile.113} parent=0 // pred_check_branch
    %3 = sbr.rel (0) target = $region5
  $region4: #{tile.113} parent=0 // pred_region
    _
  $region5: #{tile.113} parent=0 // pred_fallthru
    _
  %v4 = vld [vmem:[%s0] ss:$0 sm:$0xff]
  %5 = vst [vmem:[%s1] sm:$0xff] %v4

// kernel: tile.114
$region0: #{tile.114}
  %s0 = inlined_call_operand.vmem [shape: f32[8,16], index: 0, kind: input, shape index: {}]
  %s1 = inlined_call_operand.vmem [shape: f32[1,128], index: 1, kind: output, shape index: {}]
  $region1: #{tile.114} parent=0
    #allocation0 [shape = 'u8[4096]{0}', space=vmem, size = 0x1000, scoped, tag = 'scoped mem for output reshape']
    %v2 = vld [vmem:[%s0] sm:$0x1]
    %vm3 = vcmask 130048
    %4 = vst.msk [vmem:[#allocation0] sm:$0x1] %vm3, %v2
    %s5 = scalar_lea.vmem %s0, 7
    %v6 = vld [vmem:[%s5] sm:$0x1]
    %7 = vrot.lane.b32.xlu0 %v6, 112
    %v8 = vpop.permute.xlu0 %7
    %vm9 = vcmask 1048448
    %10 = vst.msk [vmem:[#allocation0] sm:$0x1] %vm9, %v8
    %s11 = scalar_lea.vmem %s0, 6
    %v12 = vld [vmem:[%s11] sm:$0x1]
    %13 = vrot.lane.b32.xlu0 %v12, 96
    %v14 = vpop.permute.xlu0 %13
    %vm15 = vcmask 917248
    %16 = vst.msk [vmem:[#allocation0] sm:$0x1] %vm15, %v14
    %s17 = scalar_lea.vmem %s0, 5
    %v18 = vld [vmem:[%s17] sm:$0x1]
    %19 = vrot.lane.b32.xlu0 %v18, 80
    %v20 = vpop.permute.xlu0 %19
    %vm21 = vcmask 786048
    %22 = vst.msk [vmem:[#allocation0] sm:$0x1] %vm21, %v20
    %s23 = scalar_lea.vmem %s0, 4
    %v24 = vld [vmem:[%s23] sm:$0x1]
    %25 = vrot.lane.b32.xlu0 %v24, 64
    %v26 = vpop.permute.xlu0 %25
    %vm27 = vcmask 654848
    %28 = vst.msk [vmem:[#allocation0] sm:$0x1] %vm27, %v26
    %s29 = scalar_lea.vmem %s0, 3
    %v30 = vld [vmem:[%s29] sm:$0x1]
    %31 = vrot.lane.b32.xlu0 %v30, 48
    %v32 = vpop.permute.xlu0 %31
    %vm33 = vcmask 523648
    %34 = vst.msk [vmem:[#allocation0] sm:$0x1] %vm33, %v32
    %s35 = scalar_lea.vmem %s0, 2
    %v36 = vld [vmem:[%s35] sm:$0x1]
    %37 = vrot.lane.b32.xlu0 %v36, 32
    %v38 = vpop.permute.xlu0 %37
    %vm39 = vcmask 392448
    %40 = vst.msk [vmem:[#allocation0] sm:$0x1] %vm39, %v38
    %s41 = scalar_lea.vmem %s0, 1
    %v42 = vld [vmem:[%s41] sm:$0x1]
    %43 = vrot.lane.b32.xlu0 %v42, 16
    %v44 = vpop.permute.xlu0 %43
    %vm45 = vcmask 261248
    %46 = vst.msk [vmem:[#allocation0] sm:$0x1] %vm45, %v44
    %s48 = sshll.u32 1, 1
    %s49 = ssub.s32 %s48, 1
    %v51 = vld [vmem:[#allocation0] sm:%s49]
    %s52 = sshll.u32 1, 1
    %s53 = ssub.s32 %s52, 1
    %54 = vst [vmem:[%s1] sm:%s53] %v51

// kernel: forward_nchw.22
$region0: #{forward_nchw.22}
  #allocation0 [shape = 'u32[]', space=smem, size = 0x4, offset = 0x4, fixed_abs, tag = 'smem constant byte address 0x4 - core index']
  #allocation1 [shape = 'u32[144,128]{1,0:T(1,128)}', space=vmem, size = 0x12000, scoped, tag = 'internal scratch']
  %s0 = inlined_call_operand.vmem [shape: bf16[2,8,64], index: 0, kind: input, shape index: {}]
  %s1 = inlined_call_operand.vmem [shape: bf16[3,64,128], index: 1, kind: input, shape index: {}]
  %s2 = inlined_call_operand.vmem [shape: bf16[2,8,128], index: 2, kind: output, shape index: {0}]
  %s3 = inlined_call_operand.vmem [shape: f32[2,1,128], index: 3, kind: output, shape index: {1}]
  %s4 = inlined_call_operand.vmem [shape: f32[2,1,128], index: 4, kind: output, shape index: {2}]
  %5 = xla_tuple %s2, %s3, %s4
  %s6 = sld [smem:[#allocation0]]
  $region57: #{forward_nchw.22} parent=0
    _
  %s8 = ssub.s32 1, %s6
  %s9 = scalar_select 0, %s8, %s6
  loop: start=0, step=1, limit=4
  $region2: #{forward_nchw.22} parent=0 // loop_pre_header
    _
  $region3: #{forward_nchw.22} parent=0 // loop_header
    %s11 = sphi 0, %s15
    %p12 = scmp.ge.s32.totalorder %s11, 4
    %s21 = sphi 0, %s23
    %s24 = sphi 0, %s21
    %s25 = sphi 0, %s24
    %s41 = sphi 0, %s25
    %s45 = sphi 0, %s45
    %s47 = sphi 0, %s45
    %s48 = sphi 0, %s47
    %s62 = sphi 0, %s48
    %s68 = sphi 0, %s70
    %s71 = sphi 0, %s68
    %s72 = sphi 0, %s71
    %s88 = sphi 0, %s72
    %s94 = sphi 0, %s96
    %s97 = sphi 0, %s94
    %s98 = sphi 0, %s97
    %s114 = sphi 0, %s98
    %s120 = sphi 0, %s122
    %s123 = sphi 0, %s120
    %s124 = sphi 0, %s123
    %s140 = sphi 0, %s124
  $region4: #{forward_nchw.22} parent=0 // loop_header_branch
    %14 = sbr.rel (%p12) target = $region8
  $region5: #{forward_nchw.22} parent=0 // loop_body
    %s16 = ssub.s32 %s11, 1
    %s17 = ssub.s32 %s11, 2
    %s18 = sadd.s32 %s11, 1
    %s19 = ssub.s32 %s11, %s18
    %p20 = scmp.eq.s32.totalorder %s19, 0
    %s22 = sadd.s32 %s21, 1
    %s23 = scalar_select %p20, %s21, %s22
    %p26 = pneg %p20
    %p27 = scmp.eq.s32.totalorder %s11, 1
    %p28 = por %p26, %p27
    %p29 = scmp.ne.s32.totalorder %s21, %s24
    %p30 = scmp.eq.s32.totalorder %s11, 0
    %p31 = por %p29, %p30
    %p32 = scmp.ne.s32.totalorder %s21, %s24
    %p33 = scmp.eq.s32.totalorder %s16, 1
    %p34 = por %p32, %p33
    %p35 = scmp.ne.s32.totalorder %s24, %s25
    %p36 = scmp.eq.s32.totalorder %s16, 0
    %p37 = por %p35, %p36
    %p38 = scmp.ne.s32.totalorder %s24, %s25
    %p39 = scmp.eq.s32.totalorder %s17, 1
    %p40 = por %p38, %p39
    %p42 = scmp.ne.s32.totalorder %s25, %s41
    %p43 = scmp.eq.s32.totalorder %s17, 0
    %p44 = por %p42, %p43
    %s46 = sadd.s32 %s45, 1
    %p49 = scmp.eq.s32.totalorder %s11, 1
    %p50 = scmp.ne.s32.totalorder %s45, %s47
    %p51 = scmp.eq.s32.totalorder %s11, 0
    %p52 = por %p50, %p51
    %p53 = scmp.ne.s32.totalorder %s45, %s47
    %p54 = scmp.eq.s32.totalorder %s16, 1
    %p55 = por %p53, %p54
    %p56 = scmp.ne.s32.totalorder %s47, %s48
    %p57 = scmp.eq.s32.totalorder %s16, 0
    %p58 = por %p56, %p57
    %p59 = scmp.ne.s32.totalorder %s47, %s48
    %p60 = scmp.eq.s32.totalorder %s17, 1
    %p61 = por %p59, %p60
    %p63 = scmp.ne.s32.totalorder %s48, %s62
    %p64 = scmp.eq.s32.totalorder %s17, 0
    %p65 = por %p63, %p64
    %s66 = ssub.s32 %s11, %s18
    %p67 = scmp.eq.s32.totalorder %s66, 0
    %s69 = sadd.s32 %s68, 1
    %s70 = scalar_select %p67, %s68, %s69
    %p73 = pneg %p67
    %p74 = scmp.eq.s32.totalorder %s11, 1
    %p75 = por %p73, %p74
    %p76 = scmp.ne.s32.totalorder %s68, %s71
    %p77 = scmp.eq.s32.totalorder %s11, 0
    %p78 = por %p76, %p77
    %p79 = scmp.ne.s32.totalorder %s68, %s71
    %p80 = scmp.eq.s32.totalorder %s16, 1
    %p81 = por %p79, %p80
    %p82 = scmp.ne.s32.totalorder %s71, %s72
    %p83 = scmp.eq.s32.totalorder %s16, 0
    %p84 = por %p82, %p83
    %p85 = scmp.ne.s32.totalorder %s71, %s72
    %p86 = scmp.eq.s32.totalorder %s17, 1
    %p87 = por %p85, %p86
    %p89 = scmp.ne.s32.totalorder %s72, %s88
    %p90 = scmp.eq.s32.totalorder %s17, 0
    %p91 = por %p89, %p90
    %s92 = ssub.s32 %s11, %s18
    %p93 = scmp.eq.s32.totalorder %s92, 0
    %s95 = sadd.s32 %s94, 1
    %s96 = scalar_select %p93, %s94, %s95
    %p99 = pneg %p93
    %p100 = scmp.eq.s32.totalorder %s11, 1
    %p101 = por %p99, %p100
    %p102 = scmp.ne.s32.totalorder %s94, %s97
    %p103 = scmp.eq.s32.totalorder %s11, 0
    %p104 = por %p102, %p103
    %p105 = scmp.ne.s32.totalorder %s94, %s97
    %p106 = scmp.eq.s32.totalorder %s16, 1
    %p107 = por %p105, %p106
    %p108 = scmp.ne.s32.totalorder %s97, %s98
    %p109 = scmp.eq.s32.totalorder %s16, 0
    %p110 = por %p108, %p109
    %p111 = scmp.ne.s32.totalorder %s97, %s98
    %p112 = scmp.eq.s32.totalorder %s17, 1
    %p113 = por %p111, %p112
    %p115 = scmp.ne.s32.totalorder %s98, %s114
    %p116 = scmp.eq.s32.totalorder %s17, 0
    %p117 = por %p115, %p116
    %s118 = ssub.s32 %s11, %s18
    %p119 = scmp.eq.s32.totalorder %s118, 0
    %s121 = sadd.s32 %s120, 1
    %s122 = scalar_select %p119, %s120, %s121
    %p125 = pneg %p119
    %p126 = scmp.eq.s32.totalorder %s11, 1
    %p127 = por %p125, %p126
    %p128 = scmp.ne.s32.totalorder %s120, %s123
    %p129 = scmp.eq.s32.totalorder %s11, 0
    %p130 = por %p128, %p129
    %p131 = scmp.ne.s32.totalorder %s120, %s123
    %p132 = scmp.eq.s32.totalorder %s16, 1
    %p133 = por %p131, %p132
    %p134 = scmp.ne.s32.totalorder %s123, %s124
    %p135 = scmp.eq.s32.totalorder %s16, 0
    %p136 = por %p134, %p135
    %p137 = scmp.ne.s32.totalorder %s123, %s124
    %p138 = scmp.eq.s32.totalorder %s17, 1
    %p139 = por %p137, %p138
    %p141 = scmp.ne.s32.totalorder %s124, %s140
    %p142 = scmp.eq.s32.totalorder %s17, 0
    %p143 = por %p141, %p142
    %p144 = scmp.le.s32.totalorder 1, %s11
    %p145 = scmp.lt.s32.totalorder %s11, 3
    %p146 = pnand %p144, %p145
    %p147 = pneg %p146
    // Predicated region
    $region9: #{forward_nchw.22} parent=5 // pred_check
      _
    $region10: #{forward_nchw.22} parent=5 // pred_check_branch
      %149 = sbr.rel (%p146) target = $region12
    $region11: #{forward_nchw.22} parent=5 // pred_region
      %s150 = ssub.s32 %s11, 1
      // Predicated region
      $region13: #{forward_nchw.22} parent=11 // pred_check
        %p151 = pneg %p58
      $region14: #{forward_nchw.22} parent=11 // pred_check_branch
        %153 = sbr.rel (%p151) target = $region16
      $region15: #{forward_nchw.22} parent=11 // pred_region
        _
      $region16: #{forward_nchw.22} parent=11 // pred_fallthru
        _
    $region12: #{forward_nchw.22} parent=5 // pred_fallthru
      _
    %p154 = scmp.lt.s32.totalorder %s11, 2
    // Predicated region
    $region17: #{forward_nchw.22} parent=5 // pred_check
      %p155 = pneg %p154
    $region18: #{forward_nchw.22} parent=5 // pred_check_branch
      %157 = sbr.rel (%p155) target = $region20
    $region19: #{forward_nchw.22} parent=5 // pred_region
      // Predicated region
      $region21: #{forward_nchw.22} parent=19 // pred_check
        %p158 = pneg %p31
      $region22: #{forward_nchw.22} parent=19 // pred_check_branch
        %160 = sbr.rel (%p158) target = $region24
      $region23: #{forward_nchw.22} parent=19 // pred_region
        %p161 = scmp.lt.s32.totalorder %s11, 1
        %s162 = scalar_select %p161, %s11, 1
        %s163 = smul.addr %s162, 4
        %s164 = scalar_lea.vmem %s0, %s163
      $region24: #{forward_nchw.22} parent=19 // pred_fallthru
        _
    $region20: #{forward_nchw.22} parent=5 // pred_fallthru
      _
    %p165 = scmp.le.s32.totalorder 1, %s11
    %p166 = scmp.lt.s32.totalorder %s11, 3
    %p167 = pnand %p165, %p166
    %p168 = pneg %p167
    // Predicated region
    $region25: #{forward_nchw.22} parent=5 // pred_check
      _
    $region26: #{forward_nchw.22} parent=5 // pred_check_branch
      %170 = sbr.rel (%p167) target = $region28
    $region27: #{forward_nchw.22} parent=5 // pred_region
      %s171 = ssub.s32 %s11, 1
      %p172 = scmp.lt.s32.totalorder %s16, 1
      %s173 = scalar_select %p172, %s16, 1
      %s174 = smul.addr %s173, 4
      %s175 = scalar_lea.vmem %s0, %s174
      %p176 = pneg %p37
      %p177 = pneg %p34
      %p178 = pneg %p58
      %p179 = pneg %p55
      %p180 = pneg %p84
      %p181 = pneg %p81
      %p182 = scmp.lt.s32.totalorder %s16, 1
      %s183 = scalar_select %p182, %s16, 1
      %s184 = smul.addr %s183, 4
      %s185 = scalar_lea.vmem %s2, %s184
      %p186 = pneg %p110
      %p187 = pneg %p107
      %p188 = scmp.lt.s32.totalorder %s16, 1
      %s189 = scalar_select %p188, %s16, 1
      %s190 = scalar_lea.vmem %s3, %s189
      %p191 = pneg %p136
      %p192 = pneg %p133
      %p193 = scmp.lt.s32.totalorder %s16, 1
      %s194 = scalar_select %p193, %s16, 1
      %s195 = scalar_lea.vmem %s4, %s194
      %p196 = scmp.lt.s32.totalorder %s16, 1
      %s197 = scalar_select %p196, %s16, 1
      %s198 = smul.addr %s197, 4
      %s199 = scalar_lea.vmem %s0, %s198
      %p200 = scmp.lt.s32.totalorder %s16, 1
      %s201 = scalar_select %p200, %s16, 1
      %s202 = smul.addr %s201, 4
      %s203 = scalar_lea.vmem %s2, %s202
      %p204 = scmp.lt.s32.totalorder %s16, 1
      %s205 = scalar_select %p204, %s16, 1
      %s206 = scalar_lea.vmem %s3, %s205
      %p207 = scmp.lt.s32.totalorder %s16, 1
      %s208 = scalar_select %p207, %s16, 1
      %s209 = scalar_lea.vmem %s4, %s208
      %v211 = vld [vmem:[%s199] sm:$0xf]
      %v213 = vunpack.c.l.b16 %v211
      %v214 = vpack.c.b16 %v213, %v213
      %v216 = vshrl.u32 %v214, 16
      %v218 = vrot.slane %v216, 7
      %v219 = vshll.u32 %v214, 16
      %v221 = vor.u32 %v218, %v219
      %vm223 = vcmask 1040384
      %vm224 = vsmask.f32 256
      %vm225 = vmand %vm223, %vm224
      %v226 = vsel %vm225, 0, %v221
      %v227 = vrot.slane %v219, 1
      %v228 = vor.u32 %v216, %v227
      %vm230 = vcmask 1043456
      %vm231 = vsmask.f32 3328
      %vm232 = vmand %vm230, %vm231
      %v233 = vsel %vm232, %v228, 0
      %v234 = vld [vmem:[%s1] sm:$0xf]
      %v235 = vld [vmem:[%s1 + $0x4] sm:$0xf]
      %v236 = vld [vmem:[%s1 + $0x8] sm:$0xf]
      %v237 = vld [vmem:[%s1 + $0xc] sm:$0xf]
      %v238 = vld [vmem:[%s1 + $0x10] sm:$0xf]
      %v239 = vld [vmem:[%s1 + $0x14] sm:$0xf]
      %v240 = vld [vmem:[%s1 + $0x18] sm:$0xf]
      %v241 = vld [vmem:[%s1 + $0x1c] sm:$0xf]
      %s242 = scalar_lea.vmem %s1, 32
      %v243 = vld [vmem:[%s242] sm:$0xf]
      %v244 = vld [vmem:[%s242 + $0x4] sm:$0xf]
      %v245 = vld [vmem:[%s242 + $0x8] sm:$0xf]
      %v246 = vld [vmem:[%s242 + $0xc] sm:$0xf]
      %v247 = vld [vmem:[%s242 + $0x10] sm:$0xf]
      %v248 = vld [vmem:[%s242 + $0x14] sm:$0xf]
      %v249 = vld [vmem:[%s242 + $0x18] sm:$0xf]
      %v250 = vld [vmem:[%s242 + $0x1c] sm:$0xf]
      %v259 = vunpack.c.l.b16 %v243
      %v260 = vunpack.c.l.b16 %v244
      %v261 = vunpack.c.l.b16 %v245
      %v262 = vunpack.c.l.b16 %v246
      %v263 = vunpack.c.l.b16 %v247
      %v264 = vunpack.c.l.b16 %v248
      %v265 = vunpack.c.l.b16 %v249
      %v266 = vunpack.c.l.b16 %v250
      %v267 = vpack.c.b16 %v260, %v259
      %v268 = vpack.c.b16 %v262, %v261
      %v269 = vpack.c.b16 %v264, %v263
      %v270 = vpack.c.b16 %v266, %v265
      %vm275 = vcmask 523264
      %v277 = vsel %vm275, %v211, 0
      %279 = vmatprep.subr.bf16.mxu0 0
      %280 = vmatpush1.bf16.msra.mxu0 0
      %281 = vmatprep.subr.bf16.mxu0 0
      %282 = vmatpush1.bf16.msra.mxu0 0
      %283 = vmatprep.subr.bf16.mxu0 0
      %284 = vmatpush1.bf16.msra.mxu0 0
      %285 = vmatprep.subr.bf16.mxu0 0
      %286 = vmatpush1.bf16.msra.mxu0 0
      %287 = vmatprep.subr.bf16.mxu0 0
      %288 = vmatpush1.bf16.msra.mxu0 %v270
      %289 = vmatprep.subr.bf16.mxu0 0
      %290 = vmatpush1.bf16.msra.mxu0 %v269
      %291 = vmatprep.subr.bf16.mxu0 0
      %292 = vmatpush1.bf16.msra.mxu0 %v268
      %293 = vmatprep.subr.bf16.mxu0 0
      %294 = vmatpush1.bf16.msra.mxu0 %v267
      %295 = vmatprep.subr.bf16.mxu0 0
      %296 = vmatpush2.bf16.msra.mxu0 0
      %297 = vmatprep.subr.bf16.mxu0 0
      %298 = vmatpush2.bf16.msra.mxu0 0
      %299 = vmatprep.subr.bf16.mxu0 0
      %300 = vmatpush2.bf16.msra.mxu0 0
      %301 = vmatprep.subr.bf16.mxu0 0
      %302 = vmatpush2.bf16.msra.mxu0 0
      %303 = vmatprep.subr.bf16.mxu0 0
      %304 = vmatpush2.bf16.msra.mxu0 0
      %305 = vmatprep.subr.bf16.mxu0 0
      %306 = vmatpush2.bf16.msra.mxu0 0
      %307 = vmatprep.subr.bf16.mxu0 0
      %308 = vmatpush2.bf16.msra.mxu0 0
      %309 = vmatprep.subr.bf16.mxu0 0
      %310 = vmatpush2.bf16.msra.mxu0 0
      %311 = vmatprep.mubr.bf16.mxu0 0
      %312 = vmatmul.mubr.bf16.gmra.mxu0 %v277
      %v313 = vpop.f32.mrf.mxu0
      %v314 = vadd.f32 0.0, %v313
      %v315 = vpop.f32.mrf.mxu0
      %v316 = vpop.f32.mrf.mxu0
      %v317 = vpop.f32.mrf.mxu0
      %318 = vdwg.mxu0
      %v327 = vunpack.c.l.b16 %v234
      %v328 = vunpack.c.l.b16 %v235
      %v329 = vunpack.c.l.b16 %v236
      %v330 = vunpack.c.l.b16 %v237
      %v331 = vunpack.c.l.b16 %v238
      %v332 = vunpack.c.l.b16 %v239
      %v333 = vunpack.c.l.b16 %v240
      %v334 = vunpack.c.l.b16 %v241
      %v335 = vpack.c.b16 %v328, %v327
      %v336 = vpack.c.b16 %v330, %v329
      %v337 = vpack.c.b16 %v332, %v331
      %v338 = vpack.c.b16 %v334, %v333
      %v344 = vsel %vm275, %v226, 0
      %346 = vmatprep.subr.bf16.mxu0 0
      %347 = vmatpush1.bf16.msra.mxu0 0
      %348 = vmatprep.subr.bf16.mxu0 0
      %349 = vmatpush1.bf16.msra.mxu0 0
      %350 = vmatprep.subr.bf16.mxu0 0
      %351 = vmatpush1.bf16.msra.mxu0 0
      %352 = vmatprep.subr.bf16.mxu0 0
      %353 = vmatpush1.bf16.msra.mxu0 0
      %354 = vmatprep.subr.bf16.mxu0 0
      %355 = vmatpush1.bf16.msra.mxu0 %v338
      %356 = vmatprep.subr.bf16.mxu0 0
      %357 = vmatpush1.bf16.msra.mxu0 %v337
      %358 = vmatprep.subr.bf16.mxu0 0
      %359 = vmatpush1.bf16.msra.mxu0 %v336
      %360 = vmatprep.subr.bf16.mxu0 0
      %361 = vmatpush1.bf16.msra.mxu0 %v335
      %362 = vmatprep.subr.bf16.mxu0 0
      %363 = vmatpush2.bf16.msra.mxu0 0
      %364 = vmatprep.subr.bf16.mxu0 0
      %365 = vmatpush2.bf16.msra.mxu0 0
      %366 = vmatprep.subr.bf16.mxu0 0
      %367 = vmatpush2.bf16.msra.mxu0 0
      %368 = vmatprep.subr.bf16.mxu0 0
      %369 = vmatpush2.bf16.msra.mxu0 0
      %370 = vmatprep.subr.bf16.mxu0 0
      %371 = vmatpush2.bf16.msra.mxu0 0
      %372 = vmatprep.subr.bf16.mxu0 0
      %373 = vmatpush2.bf16.msra.mxu0 0
      %374 = vmatprep.subr.bf16.mxu0 0
      %375 = vmatpush2.bf16.msra.mxu0 0
      %376 = vmatprep.subr.bf16.mxu0 0
      %377 = vmatpush2.bf16.msra.mxu0 0
      %378 = vmatprep.mubr.bf16.mxu0 0
      %379 = vmatmul.mubr.bf16.gmra.mxu0 %v344
      %v380 = vpop.f32.mrf.mxu0
      %v381 = vadd.f32 %v314, %v380
      %v382 = vpop.f32.mrf.mxu0
      %v383 = vpop.f32.mrf.mxu0
      %v384 = vpop.f32.mrf.mxu0
      %385 = vdwg.mxu0
      %s386 = scalar_lea.vmem %s1, 64
      %v387 = vld [vmem:[%s386] sm:$0xf]
      %v388 = vld [vmem:[%s386 + $0x4] sm:$0xf]
      %v389 = vld [vmem:[%s386 + $0x8] sm:$0xf]
      %v390 = vld [vmem:[%s386 + $0xc] sm:$0xf]
      %v391 = vld [vmem:[%s386 + $0x10] sm:$0xf]
      %v392 = vld [vmem:[%s386 + $0x14] sm:$0xf]
      %v393 = vld [vmem:[%s386 + $0x18] sm:$0xf]
      %v394 = vld [vmem:[%s386 + $0x1c] sm:$0xf]
      %v403 = vunpack.c.l.b16 %v387
      %v404 = vunpack.c.l.b16 %v388
      %v405 = vunpack.c.l.b16 %v389
      %v406 = vunpack.c.l.b16 %v390
      %v407 = vunpack.c.l.b16 %v391
      %v408 = vunpack.c.l.b16 %v392
      %v409 = vunpack.c.l.b16 %v393
      %v410 = vunpack.c.l.b16 %v394
      %v411 = vpack.c.b16 %v404, %v403
      %v412 = vpack.c.b16 %v406, %v405
      %v413 = vpack.c.b16 %v408, %v407
      %v414 = vpack.c.b16 %v410, %v409
      %v420 = vsel %vm275, %v233, 0
      %422 = vmatprep.subr.bf16.mxu0 0
      %423 = vmatpush1.bf16.msra.mxu0 0
      %424 = vmatprep.subr.bf16.mxu0 0
      %425 = vmatpush1.bf16.msra.mxu0 0
      %426 = vmatprep.subr.bf16.mxu0 0
      %427 = vmatpush1.bf16.msra.mxu0 0
      %428 = vmatprep.subr.bf16.mxu0 0
      %429 = vmatpush1.bf16.msra.mxu0 0
      %430 = vmatprep.subr.bf16.mxu0 0
      %431 = vmatpush1.bf16.msra.mxu0 %v414
      %432 = vmatprep.subr.bf16.mxu0 0
      %433 = vmatpush1.bf16.msra.mxu0 %v413
      %434 = vmatprep.subr.bf16.mxu0 0
      %435 = vmatpush1.bf16.msra.mxu0 %v412
      %436 = vmatprep.subr.bf16.mxu0 0
      %437 = vmatpush1.bf16.msra.mxu0 %v411
      %438 = vmatprep.subr.bf16.mxu0 0
      %439 = vmatpush2.bf16.msra.mxu0 0
      %440 = vmatprep.subr.bf16.mxu0 0
      %441 = vmatpush2.bf16.msra.mxu0 0
      %442 = vmatprep.subr.bf16.mxu0 0
      %443 = vmatpush2.bf16.msra.mxu0 0
      %444 = vmatprep.subr.bf16.mxu0 0
      %445 = vmatpush2.bf16.msra.mxu0 0
      %446 = vmatprep.subr.bf16.mxu0 0
      %447 = vmatpush2.bf16.msra.mxu0 0
      %448 = vmatprep.subr.bf16.mxu0 0
      %449 = vmatpush2.bf16.msra.mxu0 0
      %450 = vmatprep.subr.bf16.mxu0 0
      %451 = vmatpush2.bf16.msra.mxu0 0
      %452 = vmatprep.subr.bf16.mxu0 0
      %453 = vmatpush2.bf16.msra.mxu0 0
      %454 = vmatprep.mubr.bf16.mxu0 0
      %455 = vmatmul.mubr.bf16.gmra.mxu0 %v420
      %v456 = vpop.f32.mrf.mxu0
      %v457 = vadd.f32 0.0, %v456
      %v458 = vpop.f32.mrf.mxu0
      %v459 = vpop.f32.mrf.mxu0
      %v460 = vpop.f32.mrf.mxu0
      %461 = vdwg.mxu0
      %v462 = vadd.f32 %v381, %v457
      %v463 = vpack.c.bf16 %v462, %v462
      %464 = vst [vmem:[%s203] sm:$0xf] %v463
      %v465 = vrot.slane %v462, 4
      %v466 = vadd.f32 %v462, %v465
      %v467 = vrot.slane %v466, 2
      %v468 = vadd.f32 %v466, %v467
      %v469 = vrot.slane %v468, 1
      %v470 = vadd.f32 %v468, %v469
      %471 = vst [vmem:[%s206] sm:$0x1] %v470
      %v472 = vmul.f32 %v462, %v462
      %v473 = vrot.slane %v472, 4
      %v474 = vadd.f32 %v472, %v473
      %v475 = vrot.slane %v474, 2
      %v476 = vadd.f32 %v474, %v475
      %v477 = vrot.slane %v476, 1
      %v478 = vadd.f32 %v476, %v477
      %479 = vst [vmem:[%s209] sm:$0x1] %v478
      %p480 = scmp.lt.s32.totalorder %s16, 1
      %s481 = scalar_select %p480, %s16, 1
      %s482 = smul.addr %s481, 4
      %s483 = scalar_lea.vmem %s2, %s482
      %p484 = scmp.lt.s32.totalorder %s16, 1
      %s485 = scalar_select %p484, %s16, 1
      %s486 = scalar_lea.vmem %s3, %s485
      %p487 = scmp.lt.s32.totalorder %s16, 1
      %s488 = scalar_select %p487, %s16, 1
      %s489 = scalar_lea.vmem %s4, %s488
      // Predicated region
      $region29: #{forward_nchw.22} parent=27 // pred_check
        %p490 = pneg %p81
      $region30: #{forward_nchw.22} parent=27 // pred_check_branch
        %492 = sbr.rel (%p490) target = $region32
      $region31: #{forward_nchw.22} parent=27 // pred_region
        _
      $region32: #{forward_nchw.22} parent=27 // pred_fallthru
        _
      // Predicated region
      $region33: #{forward_nchw.22} parent=27 // pred_check
        %p493 = pneg %p107
      $region34: #{forward_nchw.22} parent=27 // pred_check_branch
        %495 = sbr.rel (%p493) target = $region36
      $region35: #{forward_nchw.22} parent=27 // pred_region
        _
      $region36: #{forward_nchw.22} parent=27 // pred_fallthru
        _
      // Predicated region
      $region37: #{forward_nchw.22} parent=27 // pred_check
        %p496 = pneg %p133
      $region38: #{forward_nchw.22} parent=27 // pred_check_branch
        %498 = sbr.rel (%p496) target = $region40
      $region39: #{forward_nchw.22} parent=27 // pred_region
        _
      $region40: #{forward_nchw.22} parent=27 // pred_fallthru
        _
    $region28: #{forward_nchw.22} parent=5 // pred_fallthru
      _
    %p499 = scmp.le.s32.totalorder 2, %s11
    // Predicated region
    $region41: #{forward_nchw.22} parent=5 // pred_check
      %p500 = pneg %p499
    $region42: #{forward_nchw.22} parent=5 // pred_check_branch
      %502 = sbr.rel (%p500) target = $region44
    $region43: #{forward_nchw.22} parent=5 // pred_region
      %s503 = ssub.s32 %s11, 2
      // Predicated region
      $region45: #{forward_nchw.22} parent=43 // pred_check
        %p504 = pneg %p87
      $region46: #{forward_nchw.22} parent=43 // pred_check_branch
        %506 = sbr.rel (%p504) target = $region48
      $region47: #{forward_nchw.22} parent=43 // pred_region
        %p507 = scmp.lt.s32.totalorder %s17, 1
        %s508 = scalar_select %p507, %s17, 1
        %s509 = smul.addr %s508, 4
        %s510 = scalar_lea.vmem %s2, %s509
      $region48: #{forward_nchw.22} parent=43 // pred_fallthru
        _
      // Predicated region
      $region49: #{forward_nchw.22} parent=43 // pred_check
        %p511 = pneg %p113
      $region50: #{forward_nchw.22} parent=43 // pred_check_branch
        %513 = sbr.rel (%p511) target = $region52
      $region51: #{forward_nchw.22} parent=43 // pred_region
        %p514 = scmp.lt.s32.totalorder %s17, 1
        %s515 = scalar_select %p514, %s17, 1
        %s516 = scalar_lea.vmem %s3, %s515
      $region52: #{forward_nchw.22} parent=43 // pred_fallthru
        _
      // Predicated region
      $region53: #{forward_nchw.22} parent=43 // pred_check
        %p517 = pneg %p139
      $region54: #{forward_nchw.22} parent=43 // pred_check_branch
        %519 = sbr.rel (%p517) target = $region56
      $region55: #{forward_nchw.22} parent=43 // pred_region
        %p520 = scmp.lt.s32.totalorder %s17, 1
        %s521 = scalar_select %p520, %s17, 1
        %s522 = scalar_lea.vmem %s4, %s521
      $region56: #{forward_nchw.22} parent=43 // pred_fallthru
        _
    $region44: #{forward_nchw.22} parent=5 // pred_fallthru
      _
  $region6: #{forward_nchw.22} parent=0 // loop_footer
    %s15 = sadd.s32 1, %s11
  $region7: #{forward_nchw.22} parent=0 // loop_footer_branch
    %10 = sbr.rel target = $region3
  $region8: #{forward_nchw.22} parent=0 // loop_exit
    _

// kernel: forward_nchw.23
$region0: #{forward_nchw.23}
  #allocation0 [shape = 'u32[]', space=smem, size = 0x4, offset = 0x4, fixed_abs, tag = 'smem constant byte address 0x4 - core index']
  #allocation1 [shape = 'u32[144,128]{1,0:T(1,128)}', space=vmem, size = 0x12000, scoped, tag = 'internal scratch']
  %s0 = inlined_call_operand.vmem [shape: bf16[16,128], index: 0, kind: input, shape index: {}]
  %s1 = inlined_call_operand.vmem [shape: f32[1,128], index: 1, kind: input, shape index: {}]
  %s2 = inlined_call_operand.vmem [shape: f32[1,128], index: 2, kind: input, shape index: {}]
  %s3 = inlined_call_operand.vmem [shape: bf16[16,128], index: 3, kind: output, shape index: {}]
  %s4 = sld [smem:[#allocation0]]
  $region22: #{forward_nchw.23} parent=0
    _
  %s6 = ssub.s32 1, %s4
  %s7 = scalar_select 0, %s6, %s4
  // Predicated region
  $region2: #{forward_nchw.23} parent=0 // pred_check
    _
  $region3: #{forward_nchw.23} parent=0 // pred_check_branch
    %9 = sbr.rel (0) target = $region5
  $region4: #{forward_nchw.23} parent=0 // pred_region
    _
  $region5: #{forward_nchw.23} parent=0 // pred_fallthru
    _
  // Predicated region
  $region6: #{forward_nchw.23} parent=0 // pred_check
    _
  $region7: #{forward_nchw.23} parent=0 // pred_check_branch
    %11 = sbr.rel (0) target = $region9
  $region8: #{forward_nchw.23} parent=0 // pred_region
    _
  $region9: #{forward_nchw.23} parent=0 // pred_fallthru
    _
  // Predicated region
  $region10: #{forward_nchw.23} parent=0 // pred_check
    _
  $region11: #{forward_nchw.23} parent=0 // pred_check_branch
    %13 = sbr.rel (0) target = $region13
  $region12: #{forward_nchw.23} parent=0 // pred_region
    _
  $region13: #{forward_nchw.23} parent=0 // pred_fallthru
    _
  %v14 = vld [vmem:[%s0] sm:$0xf]
  %v15 = vld [vmem:[%s0 + $0x4] sm:$0xf]
  %v16 = vunpack.c.l.bf16 %v14
  %v17 = vunpack.c.l.bf16 %v15
  %v18 = vld [vmem:[%s1] sm:$0x1]
  %v20 = vlaneseq
  %v21 = vshrl.u32 %v20, 7
  %v22 = vsub.s32 0, %v21
  %v23 = vrot.slane %v18, %v22
  %v25 = vsub.f32 %v16, %v23
  %v26 = vsub.f32 %v17, %v23
  %v27 = vld [vmem:[%s2] sm:$0x1]
  %v29 = vlaneseq
  %v30 = vshrl.u32 %v29, 7
  %v31 = vsub.s32 0, %v30
  %v32 = vrot.slane %v27, %v31
  %v34 = vmul.f32 %v25, %v32
  %v35 = vmul.f32 %v26, %v32
  %v36 = vmax.f32 %v34, 0.0
  %v37 = vmax.f32 %v35, 0.0
  %v38 = vpack.c.bf16 %v37, %v36
  %v40 = vunpack.c.l.b16 %v38
  %v41 = vunpack.c.h.b16 %v38
  %v42 = vpack.c.b16 %v40, %v40
  %v43 = vpack.c.b16 %v41, %v41
  %46 = vst [vmem:[%s3] sm:$0xf] %v42
  %47 = vst [vmem:[%s3 + $0x4] sm:$0xf] %v43
  // Predicated region
  $region14: #{forward_nchw.23} parent=0 // pred_check
    _
  $region15: #{forward_nchw.23} parent=0 // pred_check_branch
    %49 = sbr.rel (0) target = $region17
  $region16: #{forward_nchw.23} parent=0 // pred_region
    _
  $region17: #{forward_nchw.23} parent=0 // pred_fallthru
    _
  // Predicated region
  $region18: #{forward_nchw.23} parent=0 // pred_check
    _
  $region19: #{forward_nchw.23} parent=0 // pred_check_branch
    %51 = sbr.rel (0) target = $region21
  $region20: #{forward_nchw.23} parent=0 // pred_region
    _
  $region21: #{forward_nchw.23} parent=0 // pred_fallthru
    _

// kernel: forward_nchw.24
$region0: #{forward_nchw.24}
  #allocation0 [shape = 'u32[]', space=smem, size = 0x4, offset = 0x4, fixed_abs, tag = 'smem constant byte address 0x4 - core index']
  #allocation1 [shape = 'u32[144,128]{1,0:T(1,128)}', space=vmem, size = 0x12000, scoped, tag = 'internal scratch']
  %s0 = inlined_call_operand.vmem [shape: bf16[2,8,128], index: 0, kind: input, shape index: {}]
  %s1 = inlined_call_operand.vmem [shape: bf16[3,128,128], index: 1, kind: input, shape index: {}]
  %s2 = inlined_call_operand.vmem [shape: bf16[2,8,128], index: 2, kind: output, shape index: {0}]
  %s3 = inlined_call_operand.vmem [shape: f32[2,1,128], index: 3, kind: output, shape index: {1}]
  %s4 = inlined_call_operand.vmem [shape: f32[2,1,128], index: 4, kind: output, shape index: {2}]
  %5 = xla_tuple %s2, %s3, %s4
  %s6 = sld [smem:[#allocation0]]
  $region57: #{forward_nchw.24} parent=0
    _
  %s8 = ssub.s32 1, %s6
  %s9 = scalar_select 0, %s8, %s6
  loop: start=0, step=1, limit=4
  $region2: #{forward_nchw.24} parent=0 // loop_pre_header
    _
  $region3: #{forward_nchw.24} parent=0 // loop_header
    %s11 = sphi 0, %s15
    %p12 = scmp.ge.s32.totalorder %s11, 4
    %s21 = sphi 0, %s23
    %s24 = sphi 0, %s21
    %s25 = sphi 0, %s24
    %s41 = sphi 0, %s25
    %s45 = sphi 0, %s45
    %s47 = sphi 0, %s45
    %s48 = sphi 0, %s47
    %s62 = sphi 0, %s48
    %s68 = sphi 0, %s70
    %s71 = sphi 0, %s68
    %s72 = sphi 0, %s71
    %s88 = sphi 0, %s72
    %s94 = sphi 0, %s96
    %s97 = sphi 0, %s94
    %s98 = sphi 0, %s97
    %s114 = sphi 0, %s98
    %s120 = sphi 0, %s122
    %s123 = sphi 0, %s120
    %s124 = sphi 0, %s123
    %s140 = sphi 0, %s124
  $region4: #{forward_nchw.24} parent=0 // loop_header_branch
    %14 = sbr.rel (%p12) target = $region8
  $region5: #{forward_nchw.24} parent=0 // loop_body
    %s16 = ssub.s32 %s11, 1
    %s17 = ssub.s32 %s11, 2
    %s18 = sadd.s32 %s11, 1
    %s19 = ssub.s32 %s11, %s18
    %p20 = scmp.eq.s32.totalorder %s19, 0
    %s22 = sadd.s32 %s21, 1
    %s23 = scalar_select %p20, %s21, %s22
    %p26 = pneg %p20
    %p27 = scmp.eq.s32.totalorder %s11, 1
    %p28 = por %p26, %p27
    %p29 = scmp.ne.s32.totalorder %s21, %s24
    %p30 = scmp.eq.s32.totalorder %s11, 0
    %p31 = por %p29, %p30
    %p32 = scmp.ne.s32.totalorder %s21, %s24
    %p33 = scmp.eq.s32.totalorder %s16, 1
    %p34 = por %p32, %p33
    %p35 = scmp.ne.s32.totalorder %s24, %s25
    %p36 = scmp.eq.s32.totalorder %s16, 0
    %p37 = por %p35, %p36
    %p38 = scmp.ne.s32.totalorder %s24, %s25
    %p39 = scmp.eq.s32.totalorder %s17, 1
    %p40 = por %p38, %p39
    %p42 = scmp.ne.s32.totalorder %s25, %s41
    %p43 = scmp.eq.s32.totalorder %s17, 0
    %p44 = por %p42, %p43
    %s46 = sadd.s32 %s45, 1
    %p49 = scmp.eq.s32.totalorder %s11, 1
    %p50 = scmp.ne.s32.totalorder %s45, %s47
    %p51 = scmp.eq.s32.totalorder %s11, 0
    %p52 = por %p50, %p51
    %p53 = scmp.ne.s32.totalorder %s45, %s47
    %p54 = scmp.eq.s32.totalorder %s16, 1
    %p55 = por %p53, %p54
    %p56 = scmp.ne.s32.totalorder %s47, %s48
    %p57 = scmp.eq.s32.totalorder %s16, 0
    %p58 = por %p56, %p57
    %p59 = scmp.ne.s32.totalorder %s47, %s48
    %p60 = scmp.eq.s32.totalorder %s17, 1
    %p61 = por %p59, %p60
    %p63 = scmp.ne.s32.totalorder %s48, %s62
    %p64 = scmp.eq.s32.totalorder %s17, 0
    %p65 = por %p63, %p64
    %s66 = ssub.s32 %s11, %s18
    %p67 = scmp.eq.s32.totalorder %s66, 0
    %s69 = sadd.s32 %s68, 1
    %s70 = scalar_select %p67, %s68, %s69
    %p73 = pneg %p67
    %p74 = scmp.eq.s32.totalorder %s11, 1
    %p75 = por %p73, %p74
    %p76 = scmp.ne.s32.totalorder %s68, %s71
    %p77 = scmp.eq.s32.totalorder %s11, 0
    %p78 = por %p76, %p77
    %p79 = scmp.ne.s32.totalorder %s68, %s71
    %p80 = scmp.eq.s32.totalorder %s16, 1
    %p81 = por %p79, %p80
    %p82 = scmp.ne.s32.totalorder %s71, %s72
    %p83 = scmp.eq.s32.totalorder %s16, 0
    %p84 = por %p82, %p83
    %p85 = scmp.ne.s32.totalorder %s71, %s72
    %p86 = scmp.eq.s32.totalorder %s17, 1
    %p87 = por %p85, %p86
    %p89 = scmp.ne.s32.totalorder %s72, %s88
    %p90 = scmp.eq.s32.totalorder %s17, 0
    %p91 = por %p89, %p90
    %s92 = ssub.s32 %s11, %s18
    %p93 = scmp.eq.s32.totalorder %s92, 0
    %s95 = sadd.s32 %s94, 1
    %s96 = scalar_select %p93, %s94, %s95
    %p99 = pneg %p93
    %p100 = scmp.eq.s32.totalorder %s11, 1
    %p101 = por %p99, %p100
    %p102 = scmp.ne.s32.totalorder %s94, %s97
    %p103 = scmp.eq.s32.totalorder %s11, 0
    %p104 = por %p102, %p103
    %p105 = scmp.ne.s32.totalorder %s94, %s97
    %p106 = scmp.eq.s32.totalorder %s16, 1
    %p107 = por %p105, %p106
    %p108 = scmp.ne.s32.totalorder %s97, %s98
    %p109 = scmp.eq.s32.totalorder %s16, 0
    %p110 = por %p108, %p109
    %p111 = scmp.ne.s32.totalorder %s97, %s98
    %p112 = scmp.eq.s32.totalorder %s17, 1
    %p113 = por %p111, %p112
    %p115 = scmp.ne.s32.totalorder %s98, %s114
    %p116 = scmp.eq.s32.totalorder %s17, 0
    %p117 = por %p115, %p116
    %s118 = ssub.s32 %s11, %s18
    %p119 = scmp.eq.s32.totalorder %s118, 0
    %s121 = sadd.s32 %s120, 1
    %s122 = scalar_select %p119, %s120, %s121
    %p125 = pneg %p119
    %p126 = scmp.eq.s32.totalorder %s11, 1
    %p127 = por %p125, %p126
    %p128 = scmp.ne.s32.totalorder %s120, %s123
    %p129 = scmp.eq.s32.totalorder %s11, 0
    %p130 = por %p128, %p129
    %p131 = scmp.ne.s32.totalorder %s120, %s123
    %p132 = scmp.eq.s32.totalorder %s16, 1
    %p133 = por %p131, %p132
    %p134 = scmp.ne.s32.totalorder %s123, %s124
    %p135 = scmp.eq.s32.totalorder %s16, 0
    %p136 = por %p134, %p135
    %p137 = scmp.ne.s32.totalorder %s123, %s124
    %p138 = scmp.eq.s32.totalorder %s17, 1
    %p139 = por %p137, %p138
    %p141 = scmp.ne.s32.totalorder %s124, %s140
    %p142 = scmp.eq.s32.totalorder %s17, 0
    %p143 = por %p141, %p142
    %p144 = scmp.le.s32.totalorder 1, %s11
    %p145 = scmp.lt.s32.totalorder %s11, 3
    %p146 = pnand %p144, %p145
    %p147 = pneg %p146
    // Predicated region
    $region9: #{forward_nchw.24} parent=5 // pred_check
      _
    $region10: #{forward_nchw.24} parent=5 // pred_check_branch
      %149 = sbr.rel (%p146) target = $region12
    $region11: #{forward_nchw.24} parent=5 // pred_region
      %s150 = ssub.s32 %s11, 1
      // Predicated region
      $region13: #{forward_nchw.24} parent=11 // pred_check
        %p151 = pneg %p58
      $region14: #{forward_nchw.24} parent=11 // pred_check_branch
        %153 = sbr.rel (%p151) target = $region16
      $region15: #{forward_nchw.24} parent=11 // pred_region
        _
      $region16: #{forward_nchw.24} parent=11 // pred_fallthru
        _
    $region12: #{forward_nchw.24} parent=5 // pred_fallthru
      _
    %p154 = scmp.lt.s32.totalorder %s11, 2
    // Predicated region
    $region17: #{forward_nchw.24} parent=5 // pred_check
      %p155 = pneg %p154
    $region18: #{forward_nchw.24} parent=5 // pred_check_branch
      %157 = sbr.rel (%p155) target = $region20
    $region19: #{forward_nchw.24} parent=5 // pred_region
      // Predicated region
      $region21: #{forward_nchw.24} parent=19 // pred_check
        %p158 = pneg %p31
      $region22: #{forward_nchw.24} parent=19 // pred_check_branch
        %160 = sbr.rel (%p158) target = $region24
      $region23: #{forward_nchw.24} parent=19 // pred_region
        %p161 = scmp.lt.s32.totalorder %s11, 1
        %s162 = scalar_select %p161, %s11, 1
        %s163 = smul.addr %s162, 4
        %s164 = scalar_lea.vmem %s0, %s163
      $region24: #{forward_nchw.24} parent=19 // pred_fallthru
        _
    $region20: #{forward_nchw.24} parent=5 // pred_fallthru
      _
    %p165 = scmp.le.s32.totalorder 1, %s11
    %p166 = scmp.lt.s32.totalorder %s11, 3
    %p167 = pnand %p165, %p166
    %p168 = pneg %p167
    // Predicated region
    $region25: #{forward_nchw.24} parent=5 // pred_check
      _
    $region26: #{forward_nchw.24} parent=5 // pred_check_branch
      %170 = sbr.rel (%p167) target = $region28
    $region27: #{forward_nchw.24} parent=5 // pred_region
      %s171 = ssub.s32 %s11, 1
      %p172 = scmp.lt.s32.totalorder %s16, 1
      %s173 = scalar_select %p172, %s16, 1
      %s174 = smul.addr %s173, 4
      %s175 = scalar_lea.vmem %s0, %s174
      %p176 = pneg %p37
      %p177 = pneg %p34
      %p178 = pneg %p58
      %p179 = pneg %p55
      %p180 = pneg %p84
      %p181 = pneg %p81
      %p182 = scmp.lt.s32.totalorder %s16, 1
      %s183 = scalar_select %p182, %s16, 1
      %s184 = smul.addr %s183, 4
      %s185 = scalar_lea.vmem %s2, %s184
      %p186 = pneg %p110
      %p187 = pneg %p107
      %p188 = scmp.lt.s32.totalorder %s16, 1
      %s189 = scalar_select %p188, %s16, 1
      %s190 = scalar_lea.vmem %s3, %s189
      %p191 = pneg %p136
      %p192 = pneg %p133
      %p193 = scmp.lt.s32.totalorder %s16, 1
      %s194 = scalar_select %p193, %s16, 1
      %s195 = scalar_lea.vmem %s4, %s194
      %p196 = scmp.lt.s32.totalorder %s16, 1
      %s197 = scalar_select %p196, %s16, 1
      %s198 = smul.addr %s197, 4
      %s199 = scalar_lea.vmem %s0, %s198
      %p200 = scmp.lt.s32.totalorder %s16, 1
      %s201 = scalar_select %p200, %s16, 1
      %s202 = smul.addr %s201, 4
      %s203 = scalar_lea.vmem %s2, %s202
      %p204 = scmp.lt.s32.totalorder %s16, 1
      %s205 = scalar_select %p204, %s16, 1
      %s206 = scalar_lea.vmem %s3, %s205
      %p207 = scmp.lt.s32.totalorder %s16, 1
      %s208 = scalar_select %p207, %s16, 1
      %s209 = scalar_lea.vmem %s4, %s208
      %v211 = vld [vmem:[%s199] sm:$0xf]
      %v213 = vunpack.c.l.b16 %v211
      %v214 = vpack.c.b16 %v213, %v213
      %v216 = vshrl.u32 %v214, 16
      %v218 = vrot.slane %v216, 7
      %v219 = vshll.u32 %v214, 16
      %v221 = vor.u32 %v218, %v219
      %vm223 = vcmask 1040384
      %vm224 = vsmask.f32 256
      %vm225 = vmand %vm223, %vm224
      %v226 = vsel %vm225, 0, %v221
      %v227 = vrot.slane %v219, 1
      %v228 = vor.u32 %v216, %v227
      %vm230 = vcmask 1043456
      %vm231 = vsmask.f32 3328
      %vm232 = vmand %vm230, %vm231
      %v233 = vsel %vm232, %v228, 0
      %v234 = vld [vmem:[%s1] sm:$0xf]
      %v235 = vld [vmem:[%s1 + $0x4] sm:$0xf]
      %v236 = vld [vmem:[%s1 + $0x8] sm:$0xf]
      %v237 = vld [vmem:[%s1 + $0xc] sm:$0xf]
      %v238 = vld [vmem:[%s1 + $0x10] sm:$0xf]
      %v239 = vld [vmem:[%s1 + $0x14] sm:$0xf]
      %v240 = vld [vmem:[%s1 + $0x18] sm:$0xf]
      %v241 = vld [vmem:[%s1 + $0x1c] sm:$0xf]
      %v242 = vld [vmem:[%s1 + $0x20] sm:$0xf]
      %v243 = vld [vmem:[%s1 + $0x24] sm:$0xf]
      %v244 = vld [vmem:[%s1 + $0x28] sm:$0xf]
      %v245 = vld [vmem:[%s1 + $0x2c] sm:$0xf]
      %v246 = vld [vmem:[%s1 + $0x30] sm:$0xf]
      %v247 = vld [vmem:[%s1 + $0x34] sm:$0xf]
      %v248 = vld [vmem:[%s1 + $0x38] sm:$0xf]
      %v249 = vld [vmem:[%s1 + $0x3c] sm:$0xf]
      %s250 = scalar_lea.vmem %s1, 64
      %v251 = vld [vmem:[%s250] sm:$0xf]
      %v252 = vld [vmem:[%s250 + $0x4] sm:$0xf]
      %v253 = vld [vmem:[%s250 + $0x8] sm:$0xf]
      %v254 = vld [vmem:[%s250 + $0xc] sm:$0xf]
      %v255 = vld [vmem:[%s250 + $0x10] sm:$0xf]
      %v256 = vld [vmem:[%s250 + $0x14] sm:$0xf]
      %v257 = vld [vmem:[%s250 + $0x18] sm:$0xf]
      %v258 = vld [vmem:[%s250 + $0x1c] sm:$0xf]
      %v259 = vld [vmem:[%s250 + $0x20] sm:$0xf]
      %v260 = vld [vmem:[%s250 + $0x24] sm:$0xf]
      %v261 = vld [vmem:[%s250 + $0x28] sm:$0xf]
      %v262 = vld [vmem:[%s250 + $0x2c] sm:$0xf]
      %v263 = vld [vmem:[%s250 + $0x30] sm:$0xf]
      %v264 = vld [vmem:[%s250 + $0x34] sm:$0xf]
      %v265 = vld [vmem:[%s250 + $0x38] sm:$0xf]
      %v266 = vld [vmem:[%s250 + $0x3c] sm:$0xf]
      %v283 = vunpack.c.l.b16 %v251
      %v284 = vunpack.c.l.b16 %v252
      %v285 = vunpack.c.l.b16 %v253
      %v286 = vunpack.c.l.b16 %v254
      %v287 = vunpack.c.l.b16 %v255
      %v288 = vunpack.c.l.b16 %v256
      %v289 = vunpack.c.l.b16 %v257
      %v290 = vunpack.c.l.b16 %v258
      %v291 = vunpack.c.l.b16 %v259
      %v292 = vunpack.c.l.b16 %v260
      %v293 = vunpack.c.l.b16 %v261
      %v294 = vunpack.c.l.b16 %v262
      %v295 = vunpack.c.l.b16 %v263
      %v296 = vunpack.c.l.b16 %v264
      %v297 = vunpack.c.l.b16 %v265
      %v298 = vunpack.c.l.b16 %v266
      %v299 = vpack.c.b16 %v284, %v283
      %v300 = vpack.c.b16 %v286, %v285
      %v301 = vpack.c.b16 %v288, %v287
      %v302 = vpack.c.b16 %v290, %v289
      %v303 = vpack.c.b16 %v292, %v291
      %v304 = vpack.c.b16 %v294, %v293
      %v305 = vpack.c.b16 %v296, %v295
      %v306 = vpack.c.b16 %v298, %v297
      %315 = vmatprep.subr.bf16.mxu0 0
      %316 = vmatpush1.bf16.msra.mxu0 %v306
      %317 = vmatprep.subr.bf16.mxu0 0
      %318 = vmatpush1.bf16.msra.mxu0 %v305
      %319 = vmatprep.subr.bf16.mxu0 0
      %320 = vmatpush1.bf16.msra.mxu0 %v304
      %321 = vmatprep.subr.bf16.mxu0 0
      %322 = vmatpush1.bf16.msra.mxu0 %v303
      %323 = vmatprep.subr.bf16.mxu0 0
      %324 = vmatpush1.bf16.msra.mxu0 %v302
      %325 = vmatprep.subr.bf16.mxu0 0
      %326 = vmatpush1.bf16.msra.mxu0 %v301
      %327 = vmatprep.subr.bf16.mxu0 0
      %328 = vmatpush1.bf16.msra.mxu0 %v300
      %329 = vmatprep.subr.bf16.mxu0 0
      %330 = vmatpush1.bf16.msra.mxu0 %v299
      %331 = vmatprep.subr.bf16.mxu0 0
      %332 = vmatpush2.bf16.msra.mxu0 0
      %333 = vmatprep.subr.bf16.mxu0 0
      %334 = vmatpush2.bf16.msra.mxu0 0
      %335 = vmatprep.subr.bf16.mxu0 0
      %336 = vmatpush2.bf16.msra.mxu0 0
      %337 = vmatprep.subr.bf16.mxu0 0
      %338 = vmatpush2.bf16.msra.mxu0 0
      %339 = vmatprep.subr.bf16.mxu0 0
      %340 = vmatpush2.bf16.msra.mxu0 0
      %341 = vmatprep.subr.bf16.mxu0 0
      %342 = vmatpush2.bf16.msra.mxu0 0
      %343 = vmatprep.subr.bf16.mxu0 0
      %344 = vmatpush2.bf16.msra.mxu0 0
      %345 = vmatprep.subr.bf16.mxu0 0
      %346 = vmatpush2.bf16.msra.mxu0 0
      %347 = vmatprep.mubr.bf16.mxu0 0
      %348 = vmatmul.mubr.bf16.gmra.mxu0 %v211
      %v349 = vpop.f32.mrf.mxu0
      %v350 = vadd.f32 0.0, %v349
      %v351 = vpop.f32.mrf.mxu0
      %v352 = vpop.f32.mrf.mxu0
      %v353 = vpop.f32.mrf.mxu0
      %354 = vdwg.mxu0
      %v371 = vunpack.c.l.b16 %v234
      %v372 = vunpack.c.l.b16 %v235
      %v373 = vunpack.c.l.b16 %v236
      %v374 = vunpack.c.l.b16 %v237
      %v375 = vunpack.c.l.b16 %v238
      %v376 = vunpack.c.l.b16 %v239
      %v377 = vunpack.c.l.b16 %v240
      %v378 = vunpack.c.l.b16 %v241
      %v379 = vunpack.c.l.b16 %v242
      %v380 = vunpack.c.l.b16 %v243
      %v381 = vunpack.c.l.b16 %v244
      %v382 = vunpack.c.l.b16 %v245
      %v383 = vunpack.c.l.b16 %v246
      %v384 = vunpack.c.l.b16 %v247
      %v385 = vunpack.c.l.b16 %v248
      %v386 = vunpack.c.l.b16 %v249
      %v387 = vpack.c.b16 %v372, %v371
      %v388 = vpack.c.b16 %v374, %v373
      %v389 = vpack.c.b16 %v376, %v375
      %v390 = vpack.c.b16 %v378, %v377
      %v391 = vpack.c.b16 %v380, %v379
      %v392 = vpack.c.b16 %v382, %v381
      %v393 = vpack.c.b16 %v384, %v383
      %v394 = vpack.c.b16 %v386, %v385
      %403 = vmatprep.subr.bf16.mxu0 0
      %404 = vmatpush1.bf16.msra.mxu0 %v394
      %405 = vmatprep.subr.bf16.mxu0 0
      %406 = vmatpush1.bf16.msra.mxu0 %v393
      %407 = vmatprep.subr.bf16.mxu0 0
      %408 = vmatpush1.bf16.msra.mxu0 %v392
      %409 = vmatprep.subr.bf16.mxu0 0
      %410 = vmatpush1.bf16.msra.mxu0 %v391
      %411 = vmatprep.subr.bf16.mxu0 0
      %412 = vmatpush1.bf16.msra.mxu0 %v390
      %413 = vmatprep.subr.bf16.mxu0 0
      %414 = vmatpush1.bf16.msra.mxu0 %v389
      %415 = vmatprep.subr.bf16.mxu0 0
      %416 = vmatpush1.bf16.msra.mxu0 %v388
      %417 = vmatprep.subr.bf16.mxu0 0
      %418 = vmatpush1.bf16.msra.mxu0 %v387
      %419 = vmatprep.subr.bf16.mxu0 0
      %420 = vmatpush2.bf16.msra.mxu0 0
      %421 = vmatprep.subr.bf16.mxu0 0
      %422 = vmatpush2.bf16.msra.mxu0 0
      %423 = vmatprep.subr.bf16.mxu0 0
      %424 = vmatpush2.bf16.msra.mxu0 0
      %425 = vmatprep.subr.bf16.mxu0 0
      %426 = vmatpush2.bf16.msra.mxu0 0
      %427 = vmatprep.subr.bf16.mxu0 0
      %428 = vmatpush2.bf16.msra.mxu0 0
      %429 = vmatprep.subr.bf16.mxu0 0
      %430 = vmatpush2.bf16.msra.mxu0 0
      %431 = vmatprep.subr.bf16.mxu0 0
      %432 = vmatpush2.bf16.msra.mxu0 0
      %433 = vmatprep.subr.bf16.mxu0 0
      %434 = vmatpush2.bf16.msra.mxu0 0
      %435 = vmatprep.mubr.bf16.mxu0 0
      %436 = vmatmul.mubr.bf16.gmra.mxu0 %v226
      %v437 = vpop.f32.mrf.mxu0
      %v438 = vadd.f32 %v350, %v437
      %v439 = vpop.f32.mrf.mxu0
      %v440 = vpop.f32.mrf.mxu0
      %v441 = vpop.f32.mrf.mxu0
      %442 = vdwg.mxu0
      %s443 = scalar_lea.vmem %s1, 128
      %v444 = vld [vmem:[%s443] sm:$0xf]
      %v445 = vld [vmem:[%s443 + $0x4] sm:$0xf]
      %v446 = vld [vmem:[%s443 + $0x8] sm:$0xf]
      %v447 = vld [vmem:[%s443 + $0xc] sm:$0xf]
      %v448 = vld [vmem:[%s443 + $0x10] sm:$0xf]
      %v449 = vld [vmem:[%s443 + $0x14] sm:$0xf]
      %v450 = vld [vmem:[%s443 + $0x18] sm:$0xf]
      %v451 = vld [vmem:[%s443 + $0x1c] sm:$0xf]
      %v452 = vld [vmem:[%s443 + $0x20] sm:$0xf]
      %v453 = vld [vmem:[%s443 + $0x24] sm:$0xf]
      %v454 = vld [vmem:[%s443 + $0x28] sm:$0xf]
      %v455 = vld [vmem:[%s443 + $0x2c] sm:$0xf]
      %v456 = vld [vmem:[%s443 + $0x30] sm:$0xf]
      %v457 = vld [vmem:[%s443 + $0x34] sm:$0xf]
      %v458 = vld [vmem:[%s443 + $0x38] sm:$0xf]
      %v459 = vld [vmem:[%s443 + $0x3c] sm:$0xf]
      %v476 = vunpack.c.l.b16 %v444
      %v477 = vunpack.c.l.b16 %v445
      %v478 = vunpack.c.l.b16 %v446
      %v479 = vunpack.c.l.b16 %v447
      %v480 = vunpack.c.l.b16 %v448
      %v481 = vunpack.c.l.b16 %v449
      %v482 = vunpack.c.l.b16 %v450
      %v483 = vunpack.c.l.b16 %v451
      %v484 = vunpack.c.l.b16 %v452
      %v485 = vunpack.c.l.b16 %v453
      %v486 = vunpack.c.l.b16 %v454
      %v487 = vunpack.c.l.b16 %v455
      %v488 = vunpack.c.l.b16 %v456
      %v489 = vunpack.c.l.b16 %v457
      %v490 = vunpack.c.l.b16 %v458
      %v491 = vunpack.c.l.b16 %v459
      %v492 = vpack.c.b16 %v477, %v476
      %v493 = vpack.c.b16 %v479, %v478
      %v494 = vpack.c.b16 %v481, %v480
      %v495 = vpack.c.b16 %v483, %v482
      %v496 = vpack.c.b16 %v485, %v484
      %v497 = vpack.c.b16 %v487, %v486
      %v498 = vpack.c.b16 %v489, %v488
      %v499 = vpack.c.b16 %v491, %v490
      %508 = vmatprep.subr.bf16.mxu0 0
      %509 = vmatpush1.bf16.msra.mxu0 %v499
      %510 = vmatprep.subr.bf16.mxu0 0
      %511 = vmatpush1.bf16.msra.mxu0 %v498
      %512 = vmatprep.subr.bf16.mxu0 0
      %513 = vmatpush1.bf16.msra.mxu0 %v497
      %514 = vmatprep.subr.bf16.mxu0 0
      %515 = vmatpush1.bf16.msra.mxu0 %v496
      %516 = vmatprep.subr.bf16.mxu0 0
      %517 = vmatpush1.bf16.msra.mxu0 %v495
      %518 = vmatprep.subr.bf16.mxu0 0
      %519 = vmatpush1.bf16.msra.mxu0 %v494
      %520 = vmatprep.subr.bf16.mxu0 0
      %521 = vmatpush1.bf16.msra.mxu0 %v493
      %522 = vmatprep.subr.bf16.mxu0 0
      %523 = vmatpush1.bf16.msra.mxu0 %v492
      %524 = vmatprep.subr.bf16.mxu0 0
      %525 = vmatpush2.bf16.msra.mxu0 0
      %526 = vmatprep.subr.bf16.mxu0 0
      %527 = vmatpush2.bf16.msra.mxu0 0
      %528 = vmatprep.subr.bf16.mxu0 0
      %529 = vmatpush2.bf16.msra.mxu0 0
      %530 = vmatprep.subr.bf16.mxu0 0
      %531 = vmatpush2.bf16.msra.mxu0 0
      %532 = vmatprep.subr.bf16.mxu0 0
      %533 = vmatpush2.bf16.msra.mxu0 0
      %534 = vmatprep.subr.bf16.mxu0 0
      %535 = vmatpush2.bf16.msra.mxu0 0
      %536 = vmatprep.subr.bf16.mxu0 0
      %537 = vmatpush2.bf16.msra.mxu0 0
      %538 = vmatprep.subr.bf16.mxu0 0
      %539 = vmatpush2.bf16.msra.mxu0 0
      %540 = vmatprep.mubr.bf16.mxu0 0
      %541 = vmatmul.mubr.bf16.gmra.mxu0 %v233
      %v542 = vpop.f32.mrf.mxu0
      %v543 = vadd.f32 0.0, %v542
      %v544 = vpop.f32.mrf.mxu0
      %v545 = vpop.f32.mrf.mxu0
      %v546 = vpop.f32.mrf.mxu0
      %547 = vdwg.mxu0
      %v548 = vadd.f32 %v438, %v543
      %v549 = vpack.c.bf16 %v548, %v548
      %550 = vst [vmem:[%s203] sm:$0xf] %v549
      %v551 = vrot.slane %v548, 4
      %v552 = vadd.f32 %v548, %v551
      %v553 = vrot.slane %v552, 2
      %v554 = vadd.f32 %v552, %v553
      %v555 = vrot.slane %v554, 1
      %v556 = vadd.f32 %v554, %v555
      %557 = vst [vmem:[%s206] sm:$0x1] %v556
      %v558 = vmul.f32 %v548, %v548
      %v559 = vrot.slane %v558, 4
      %v560 = vadd.f32 %v558, %v559
      %v561 = vrot.slane %v560, 2
      %v562 = vadd.f32 %v560, %v561
      %v563 = vrot.slane %v562, 1
      %v564 = vadd.f32 %v562, %v563
      %565 = vst [vmem:[%s209] sm:$0x1] %v564
      %p566 = scmp.lt.s32.totalorder %s16, 1
      %s567 = scalar_select %p566, %s16, 1
      %s568 = smul.addr %s567, 4
      %s569 = scalar_lea.vmem %s2, %s568
      %p570 = scmp.lt.s32.totalorder %s16, 1
      %s571 = scalar_select %p570, %s16, 1
      %s572 = scalar_lea.vmem %s3, %s571
      %p573 = scmp.lt.s32.totalorder %s16, 1
      %s574 = scalar_select %p573, %s16, 1
      %s575 = scalar_lea.vmem %s4, %s574
      // Predicated region
      $region29: #{forward_nchw.24} parent=27 // pred_check
        %p576 = pneg %p81
      $region30: #{forward_nchw.24} parent=27 // pred_check_branch
        %578 = sbr.rel (%p576) target = $region32
      $region31: #{forward_nchw.24} parent=27 // pred_region
        _
      $region32: #{forward_nchw.24} parent=27 // pred_fallthru
        _
      // Predicated region
      $region33: #{forward_nchw.24} parent=27 // pred_check
        %p579 = pneg %p107
      $region34: #{forward_nchw.24} parent=27 // pred_check_branch
        %581 = sbr.rel (%p579) target = $region36
      $region35: #{forward_nchw.24} parent=27 // pred_region
        _
      $region36: #{forward_nchw.24} parent=27 // pred_fallthru
        _
      // Predicated region
      $region37: #{forward_nchw.24} parent=27 // pred_check
        %p582 = pneg %p133
      $region38: #{forward_nchw.24} parent=27 // pred_check_branch
        %584 = sbr.rel (%p582) target = $region40
      $region39: #{forward_nchw.24} parent=27 // pred_region
        _
      $region40: #{forward_nchw.24} parent=27 // pred_fallthru
        _
    $region28: #{forward_nchw.24} parent=5 // pred_fallthru
      _
    %p585 = scmp.le.s32.totalorder 2, %s11
    // Predicated region
    $region41: #{forward_nchw.24} parent=5 // pred_check
      %p586 = pneg %p585
    $region42: #{forward_nchw.24} parent=5 // pred_check_branch
      %588 = sbr.rel (%p586) target = $region44
    $region43: #{forward_nchw.24} parent=5 // pred_region
      %s589 = ssub.s32 %s11, 2
      // Predicated region
      $region45: #{forward_nchw.24} parent=43 // pred_check
        %p590 = pneg %p87
      $region46: #{forward_nchw.24} parent=43 // pred_check_branch
        %592 = sbr.rel (%p590) target = $region48
      $region47: #{forward_nchw.24} parent=43 // pred_region
        %p593 = scmp.lt.s32.totalorder %s17, 1
        %s594 = scalar_select %p593, %s17, 1
        %s595 = smul.addr %s594, 4
        %s596 = scalar_lea.vmem %s2, %s595
      $region48: #{forward_nchw.24} parent=43 // pred_fallthru
        _
      // Predicated region
      $region49: #{forward_nchw.24} parent=43 // pred_check
        %p597 = pneg %p113
      $region50: #{forward_nchw.24} parent=43 // pred_check_branch
        %599 = sbr.rel (%p597) target = $region52
      $region51: #{forward_nchw.24} parent=43 // pred_region
        %p600 = scmp.lt.s32.totalorder %s17, 1
        %s601 = scalar_select %p600, %s17, 1
        %s602 = scalar_lea.vmem %s3, %s601
      $region52: #{forward_nchw.24} parent=43 // pred_fallthru
        _
      // Predicated region
      $region53: #{forward_nchw.24} parent=43 // pred_check
        %p603 = pneg %p139
      $region54: #{forward_nchw.24} parent=43 // pred_check_branch
        %605 = sbr.rel (%p603) target = $region56
      $region55: #{forward_nchw.24} parent=43 // pred_region
        %p606 = scmp.lt.s32.totalorder %s17, 1
        %s607 = scalar_select %p606, %s17, 1
        %s608 = scalar_lea.vmem %s4, %s607
      $region56: #{forward_nchw.24} parent=43 // pred_fallthru
        _
    $region44: #{forward_nchw.24} parent=5 // pred_fallthru
      _
  $region6: #{forward_nchw.24} parent=0 // loop_footer
    %s15 = sadd.s32 1, %s11
  $region7: #{forward_nchw.24} parent=0 // loop_footer_branch
    %10 = sbr.rel target = $region3
  $region8: #{forward_nchw.24} parent=0 // loop_exit
    _

// kernel: forward_nchw.26
$region0: #{forward_nchw.26}
  #allocation0 [shape = 'u32[]', space=smem, size = 0x4, offset = 0x4, fixed_abs, tag = 'smem constant byte address 0x4 - core index']
  #allocation1 [shape = 'u32[144,128]{1,0:T(1,128)}', space=vmem, size = 0x12000, scoped, tag = 'internal scratch']
  %s0 = inlined_call_operand.vmem [shape: bf16[16,128], index: 0, kind: input, shape index: {}]
  %s1 = inlined_call_operand.vmem [shape: bf16[128,256], index: 1, kind: input, shape index: {}]
  %s2 = inlined_call_operand.vmem [shape: bf16[16,256], index: 2, kind: output, shape index: {0}]
  %s3 = inlined_call_operand.vmem [shape: f32[1,1,256], index: 3, kind: output, shape index: {1}]
  %s4 = inlined_call_operand.vmem [shape: f32[1,1,256], index: 4, kind: output, shape index: {2}]
  %5 = xla_tuple %s2, %s3, %s4
  %s6 = sld [smem:[#allocation0]]
  $region34: #{forward_nchw.26} parent=0
    _
  %s8 = ssub.s32 1, %s6
  %s9 = scalar_select 0, %s8, %s6
  // Predicated region
  $region2: #{forward_nchw.26} parent=0 // pred_check
    _
  $region3: #{forward_nchw.26} parent=0 // pred_check_branch
    %11 = sbr.rel (0) target = $region5
  $region4: #{forward_nchw.26} parent=0 // pred_region
    _
  $region5: #{forward_nchw.26} parent=0 // pred_fallthru
    _
  // Predicated region
  $region6: #{forward_nchw.26} parent=0 // pred_check
    _
  $region7: #{forward_nchw.26} parent=0 // pred_check_branch
    %13 = sbr.rel (0) target = $region9
  $region8: #{forward_nchw.26} parent=0 // pred_region
    _
  $region9: #{forward_nchw.26} parent=0 // pred_fallthru
    _
  %v15 = vld [vmem:[%s0] sm:$0xf]
  %v16 = vld [vmem:[%s0 + $0x4] sm:$0xf]
  %v17 = vld [vmem:[%s1] sm:$0xff]
  %v18 = vld [vmem:[%s1 + $0x8] sm:$0xff]
  %v19 = vld [vmem:[%s1 + $0x10] sm:$0xff]
  %v20 = vld [vmem:[%s1 + $0x18] sm:$0xff]
  %v21 = vld [vmem:[%s1 + $0x20] sm:$0xff]
  %v22 = vld [vmem:[%s1 + $0x28] sm:$0xff]
  %v23 = vld [vmem:[%s1 + $0x30] sm:$0xff]
  %v24 = vld [vmem:[%s1 + $0x38] sm:$0xff]
  %v25 = vld [vmem:[%s1 + $0x40] sm:$0xff]
  %v26 = vld [vmem:[%s1 + $0x48] sm:$0xff]
  %v27 = vld [vmem:[%s1 + $0x50] sm:$0xff]
  %v28 = vld [vmem:[%s1 + $0x58] sm:$0xff]
  %v29 = vld [vmem:[%s1 + $0x60] sm:$0xff]
  %v30 = vld [vmem:[%s1 + $0x68] sm:$0xff]
  %v31 = vld [vmem:[%s1 + $0x70] sm:$0xff]
  %v32 = vld [vmem:[%s1 + $0x78] sm:$0xff]
  %v35 = vunpack.c.l.b16 %v15
  %v36 = vunpack.c.l.b16 %v16
  %v37 = vpack.c.b16 %v36, %v35
  %v55 = vunpack.c.l.b16 %v17
  %v56 = vunpack.c.h.b16 %v17
  %v57 = vunpack.c.l.b16 %v18
  %v58 = vunpack.c.h.b16 %v18
  %v59 = vunpack.c.l.b16 %v19
  %v60 = vunpack.c.h.b16 %v19
  %v61 = vunpack.c.l.b16 %v20
  %v62 = vunpack.c.h.b16 %v20
  %v63 = vunpack.c.l.b16 %v21
  %v64 = vunpack.c.h.b16 %v21
  %v65 = vunpack.c.l.b16 %v22
  %v66 = vunpack.c.h.b16 %v22
  %v67 = vunpack.c.l.b16 %v23
  %v68 = vunpack.c.h.b16 %v23
  %v69 = vunpack.c.l.b16 %v24
  %v70 = vunpack.c.h.b16 %v24
  %v71 = vunpack.c.l.b16 %v25
  %v72 = vunpack.c.h.b16 %v25
  %v73 = vunpack.c.l.b16 %v26
  %v74 = vunpack.c.h.b16 %v26
  %v75 = vunpack.c.l.b16 %v27
  %v76 = vunpack.c.h.b16 %v27
  %v77 = vunpack.c.l.b16 %v28
  %v78 = vunpack.c.h.b16 %v28
  %v79 = vunpack.c.l.b16 %v29
  %v80 = vunpack.c.h.b16 %v29
  %v81 = vunpack.c.l.b16 %v30
  %v82 = vunpack.c.h.b16 %v30
  %v83 = vunpack.c.l.b16 %v31
  %v84 = vunpack.c.h.b16 %v31
  %v85 = vunpack.c.l.b16 %v32
  %v86 = vunpack.c.h.b16 %v32
  %v87 = vpack.c.b16 %v57, %v55
  %v88 = vpack.c.b16 %v58, %v56
  %v89 = vpack.c.b16 %v61, %v59
  %v90 = vpack.c.b16 %v62, %v60
  %v91 = vpack.c.b16 %v65, %v63
  %v92 = vpack.c.b16 %v66, %v64
  %v93 = vpack.c.b16 %v69, %v67
  %v94 = vpack.c.b16 %v70, %v68
  %v95 = vpack.c.b16 %v73, %v71
  %v96 = vpack.c.b16 %v74, %v72
  %v97 = vpack.c.b16 %v77, %v75
  %v98 = vpack.c.b16 %v78, %v76
  %v99 = vpack.c.b16 %v81, %v79
  %v100 = vpack.c.b16 %v82, %v80
  %v101 = vpack.c.b16 %v85, %v83
  %v102 = vpack.c.b16 %v86, %v84
  %119 = vmatprep.subr.bf16.mxu0 %v102
  %120 = vmatpush1.bf16.msra.mxu0 %v101
  %121 = vmatprep.subr.bf16.mxu0 %v100
  %122 = vmatpush1.bf16.msra.mxu0 %v99
  %123 = vmatprep.subr.bf16.mxu0 %v98
  %124 = vmatpush1.bf16.msra.mxu0 %v97
  %125 = vmatprep.subr.bf16.mxu0 %v96
  %126 = vmatpush1.bf16.msra.mxu0 %v95
  %127 = vmatprep.subr.bf16.mxu0 %v94
  %128 = vmatpush1.bf16.msra.mxu0 %v93
  %129 = vmatprep.subr.bf16.mxu0 %v92
  %130 = vmatpush1.bf16.msra.mxu0 %v91
  %131 = vmatprep.subr.bf16.mxu0 %v90
  %132 = vmatpush1.bf16.msra.mxu0 %v89
  %133 = vmatprep.subr.bf16.mxu0 %v88
  %134 = vmatpush1.bf16.msra.mxu0 %v87
  %135 = vmatprep.subr.bf16.mxu0 0
  %136 = vmatpush2.bf16.msra.mxu0 0
  %137 = vmatprep.subr.bf16.mxu0 0
  %138 = vmatpush2.bf16.msra.mxu0 0
  %139 = vmatprep.subr.bf16.mxu0 0
  %140 = vmatpush2.bf16.msra.mxu0 0
  %141 = vmatprep.subr.bf16.mxu0 0
  %142 = vmatpush2.bf16.msra.mxu0 0
  %143 = vmatprep.subr.bf16.mxu0 0
  %144 = vmatpush2.bf16.msra.mxu0 0
  %145 = vmatprep.subr.bf16.mxu0 0
  %146 = vmatpush2.bf16.msra.mxu0 0
  %147 = vmatprep.subr.bf16.mxu0 0
  %148 = vmatpush2.bf16.msra.mxu0 0
  %149 = vmatprep.subr.bf16.mxu0 0
  %150 = vmatpush2.bf16.msra.mxu0 0
  %151 = vmatprep.mubr.bf16.mxu0 0
  %152 = vmatmul.mubr.bf16.gmra.mxu0 %v37
  %v153 = vpop.f32.mrf.mxu0
  %v154 = vadd.f32 0.0, %v153
  %v155 = vpop.f32.mrf.mxu0
  %v156 = vadd.f32 0.0, %v155
  %v157 = vpop.f32.mrf.mxu0
  %v158 = vadd.f32 0.0, %v157
  %v159 = vpop.f32.mrf.mxu0
  %v160 = vadd.f32 0.0, %v159
  %161 = vdwg.mxu0
  %v162 = vpack.c.bf16 %v158, %v154
  %v163 = vpack.c.bf16 %v160, %v156
  %v166 = vunpack.c.l.b16 %v162
  %v167 = vunpack.c.l.b16 %v163
  %v168 = vunpack.c.h.b16 %v162
  %v169 = vunpack.c.h.b16 %v163
  %v170 = vpack.c.b16 %v167, %v166
  %v171 = vpack.c.b16 %v169, %v168
  %174 = vst [vmem:[%s2] sm:$0xff] %v170
  %175 = vst [vmem:[%s2 + $0x8] sm:$0xff] %v171
  %v176 = vadd.f32 %v154, %v158
  %v177 = vrot.slane %v176, 4
  %v178 = vadd.f32 %v176, %v177
  %v179 = vrot.slane %v178, 2
  %v180 = vadd.f32 %v178, %v179
  %v181 = vrot.slane %v180, 1
  %v182 = vadd.f32 %v180, %v181
  %v183 = vadd.f32 %v156, %v160
  %v184 = vrot.slane %v183, 4
  %v185 = vadd.f32 %v183, %v184
  %v186 = vrot.slane %v185, 2
  %v187 = vadd.f32 %v185, %v186
  %v188 = vrot.slane %v187, 1
  %v189 = vadd.f32 %v187, %v188
  %v192 = vcombine.low %v182, %v189
  %v194 = vunpack.c.l.s4 1966171168
  %v195 = vunpack.c.0.s8 %v194
  %v196 = vlaneseq
  %v197 = vshrl.u32 %v196, 7
  %v198 = vsub.s32 %v195, %v197
  %v199 = vrot.slane %v192, %v198
  %v201 = vunpack.c.l.s4 1966171168
  %v202 = vunpack.c.0.s8 %v201
  %v203 = vlaneseq
  %v204 = vshrl.u32 %v203, 7
  %v205 = vsub.s32 %v202, %v204
  %v206 = vrot.slane %v199, %v205
  %v208 = vlaneseq
  %vm209 = vcmp.ge.s32.totalorder %v208, 0
  %vm210 = vcmp.lt.s32.totalorder %v208, 256
  %vm211 = vmand %vm209, %vm210
  %212 = vst.msk [vmem:[%s3] sm:$0x3] %vm211, %v206
  %v213 = vmul.f32 %v154, %v154
  %v214 = vmul.f32 %v156, %v156
  %v215 = vmul.f32 %v158, %v158
  %v216 = vmul.f32 %v160, %v160
  %v217 = vadd.f32 %v213, %v215
  %v218 = vrot.slane %v217, 4
  %v219 = vadd.f32 %v217, %v218
  %v220 = vrot.slane %v219, 2
  %v221 = vadd.f32 %v219, %v220
  %v222 = vrot.slane %v221, 1
  %v223 = vadd.f32 %v221, %v222
  %v224 = vadd.f32 %v214, %v216
  %v225 = vrot.slane %v224, 4
  %v226 = vadd.f32 %v224, %v225
  %v227 = vrot.slane %v226, 2
  %v228 = vadd.f32 %v226, %v227
  %v229 = vrot.slane %v228, 1
  %v230 = vadd.f32 %v228, %v229
  %v233 = vcombine.low %v223, %v230
  %v235 = vunpack.c.l.s4 1966171168
  %v236 = vunpack.c.0.s8 %v235
  %v237 = vlaneseq
  %v238 = vshrl.u32 %v237, 7
  %v239 = vsub.s32 %v236, %v238
  %v240 = vrot.slane %v233, %v239
  %v242 = vunpack.c.l.s4 1966171168
  %v243 = vunpack.c.0.s8 %v242
  %v244 = vlaneseq
  %v245 = vshrl.u32 %v244, 7
  %v246 = vsub.s32 %v243, %v245
  %v247 = vrot.slane %v240, %v246
  %249 = vst.msk [vmem:[%s4] sm:$0x3] %vm211, %v247
  // Predicated region
  $region10: #{forward_nchw.26} parent=0 // pred_check
    _
  $region11: #{forward_nchw.26} parent=0 // pred_check_branch
    %251 = sbr.rel (0) target = $region13
  $region12: #{forward_nchw.26} parent=0 // pred_region
    _
  $region13: #{forward_nchw.26} parent=0 // pred_fallthru
    _
  // Predicated region
  $region14: #{forward_nchw.26} parent=0 // pred_check
    _
  $region15: #{forward_nchw.26} parent=0 // pred_check_branch
    %253 = sbr.rel (0) target = $region17
  $region16: #{forward_nchw.26} parent=0 // pred_region
    _
  $region17: #{forward_nchw.26} parent=0 // pred_fallthru
    _
  // Predicated region
  $region18: #{forward_nchw.26} parent=0 // pred_check
    _
  $region19: #{forward_nchw.26} parent=0 // pred_check_branch
    %255 = sbr.rel (0) target = $region21
  $region20: #{forward_nchw.26} parent=0 // pred_region
    _
  $region21: #{forward_nchw.26} parent=0 // pred_fallthru
    _
  // Predicated region
  $region22: #{forward_nchw.26} parent=0 // pred_check
    _
  $region23: #{forward_nchw.26} parent=0 // pred_check_branch
    %257 = sbr.rel (0) target = $region25
  $region24: #{forward_nchw.26} parent=0 // pred_region
    _
  $region25: #{forward_nchw.26} parent=0 // pred_fallthru
    _
  // Predicated region
  $region26: #{forward_nchw.26} parent=0 // pred_check
    _
  $region27: #{forward_nchw.26} parent=0 // pred_check_branch
    %259 = sbr.rel (0) target = $region29
  $region28: #{forward_nchw.26} parent=0 // pred_region
    _
  $region29: #{forward_nchw.26} parent=0 // pred_fallthru
    _
  // Predicated region
  $region30: #{forward_nchw.26} parent=0 // pred_check
    _
  $region31: #{forward_nchw.26} parent=0 // pred_check_branch
    %261 = sbr.rel (0) target = $region33
  $region32: #{forward_nchw.26} parent=0 // pred_region
    _
  $region33: #{forward_nchw.26} parent=0 // pred_fallthru
    _

// kernel: forward_nchw.28
$region0: #{forward_nchw.28}
  #allocation0 [shape = 'u32[]', space=smem, size = 0x4, offset = 0x4, fixed_abs, tag = 'smem constant byte address 0x4 - core index']
  #allocation1 [shape = 'u32[144,128]{1,0:T(1,128)}', space=vmem, size = 0x12000, scoped, tag = 'internal scratch']
  %s0 = inlined_call_operand.vmem [shape: bf16[2,16,256], index: 0, kind: input, shape index: {}]
  %s1 = inlined_call_operand.vmem [shape: bf16[3,256,128], index: 1, kind: input, shape index: {}]
  %s2 = inlined_call_operand.vmem [shape: bf16[2,16,128], index: 2, kind: output, shape index: {0}]
  %s3 = inlined_call_operand.vmem [shape: f32[2,1,128], index: 3, kind: output, shape index: {1}]
  %s4 = inlined_call_operand.vmem [shape: f32[2,1,128], index: 4, kind: output, shape index: {2}]
  %5 = xla_tuple %s2, %s3, %s4
  %s6 = sld [smem:[#allocation0]]
  $region57: #{forward_nchw.28} parent=0
    _
  %s8 = ssub.s32 1, %s6
  %s9 = scalar_select 0, %s8, %s6
  loop: start=0, step=1, limit=4
  $region2: #{forward_nchw.28} parent=0 // loop_pre_header
    _
  $region3: #{forward_nchw.28} parent=0 // loop_header
    %s11 = sphi 0, %s15
    %p12 = scmp.ge.s32.totalorder %s11, 4
    %s21 = sphi 0, %s23
    %s24 = sphi 0, %s21
    %s25 = sphi 0, %s24
    %s41 = sphi 0, %s25
    %s45 = sphi 0, %s45
    %s47 = sphi 0, %s45
    %s48 = sphi 0, %s47
    %s62 = sphi 0, %s48
    %s68 = sphi 0, %s70
    %s71 = sphi 0, %s68
    %s72 = sphi 0, %s71
    %s88 = sphi 0, %s72
    %s94 = sphi 0, %s96
    %s97 = sphi 0, %s94
    %s98 = sphi 0, %s97
    %s114 = sphi 0, %s98
    %s120 = sphi 0, %s122
    %s123 = sphi 0, %s120
    %s124 = sphi 0, %s123
    %s140 = sphi 0, %s124
  $region4: #{forward_nchw.28} parent=0 // loop_header_branch
    %14 = sbr.rel (%p12) target = $region8
  $region5: #{forward_nchw.28} parent=0 // loop_body
    %s16 = ssub.s32 %s11, 1
    %s17 = ssub.s32 %s11, 2
    %s18 = sadd.s32 %s11, 1
    %s19 = ssub.s32 %s11, %s18
    %p20 = scmp.eq.s32.totalorder %s19, 0
    %s22 = sadd.s32 %s21, 1
    %s23 = scalar_select %p20, %s21, %s22
    %p26 = pneg %p20
    %p27 = scmp.eq.s32.totalorder %s11, 1
    %p28 = por %p26, %p27
    %p29 = scmp.ne.s32.totalorder %s21, %s24
    %p30 = scmp.eq.s32.totalorder %s11, 0
    %p31 = por %p29, %p30
    %p32 = scmp.ne.s32.totalorder %s21, %s24
    %p33 = scmp.eq.s32.totalorder %s16, 1
    %p34 = por %p32, %p33
    %p35 = scmp.ne.s32.totalorder %s24, %s25
    %p36 = scmp.eq.s32.totalorder %s16, 0
    %p37 = por %p35, %p36
    %p38 = scmp.ne.s32.totalorder %s24, %s25
    %p39 = scmp.eq.s32.totalorder %s17, 1
    %p40 = por %p38, %p39
    %p42 = scmp.ne.s32.totalorder %s25, %s41
    %p43 = scmp.eq.s32.totalorder %s17, 0
    %p44 = por %p42, %p43
    %s46 = sadd.s32 %s45, 1
    %p49 = scmp.eq.s32.totalorder %s11, 1
    %p50 = scmp.ne.s32.totalorder %s45, %s47
    %p51 = scmp.eq.s32.totalorder %s11, 0
    %p52 = por %p50, %p51
    %p53 = scmp.ne.s32.totalorder %s45, %s47
    %p54 = scmp.eq.s32.totalorder %s16, 1
    %p55 = por %p53, %p54
    %p56 = scmp.ne.s32.totalorder %s47, %s48
    %p57 = scmp.eq.s32.totalorder %s16, 0
    %p58 = por %p56, %p57
    %p59 = scmp.ne.s32.totalorder %s47, %s48
    %p60 = scmp.eq.s32.totalorder %s17, 1
    %p61 = por %p59, %p60
    %p63 = scmp.ne.s32.totalorder %s48, %s62
    %p64 = scmp.eq.s32.totalorder %s17, 0
    %p65 = por %p63, %p64
    %s66 = ssub.s32 %s11, %s18
    %p67 = scmp.eq.s32.totalorder %s66, 0
    %s69 = sadd.s32 %s68, 1
    %s70 = scalar_select %p67, %s68, %s69
    %p73 = pneg %p67
    %p74 = scmp.eq.s32.totalorder %s11, 1
    %p75 = por %p73, %p74
    %p76 = scmp.ne.s32.totalorder %s68, %s71
    %p77 = scmp.eq.s32.totalorder %s11, 0
    %p78 = por %p76, %p77
    %p79 = scmp.ne.s32.totalorder %s68, %s71
    %p80 = scmp.eq.s32.totalorder %s16, 1
    %p81 = por %p79, %p80
    %p82 = scmp.ne.s32.totalorder %s71, %s72
    %p83 = scmp.eq.s32.totalorder %s16, 0
    %p84 = por %p82, %p83
    %p85 = scmp.ne.s32.totalorder %s71, %s72
    %p86 = scmp.eq.s32.totalorder %s17, 1
    %p87 = por %p85, %p86
    %p89 = scmp.ne.s32.totalorder %s72, %s88
    %p90 = scmp.eq.s32.totalorder %s17, 0
    %p91 = por %p89, %p90
    %s92 = ssub.s32 %s11, %s18
    %p93 = scmp.eq.s32.totalorder %s92, 0
    %s95 = sadd.s32 %s94, 1
    %s96 = scalar_select %p93, %s94, %s95
    %p99 = pneg %p93
    %p100 = scmp.eq.s32.totalorder %s11, 1
    %p101 = por %p99, %p100
    %p102 = scmp.ne.s32.totalorder %s94, %s97
    %p103 = scmp.eq.s32.totalorder %s11, 0
    %p104 = por %p102, %p103
    %p105 = scmp.ne.s32.totalorder %s94, %s97
    %p106 = scmp.eq.s32.totalorder %s16, 1
    %p107 = por %p105, %p106
    %p108 = scmp.ne.s32.totalorder %s97, %s98
    %p109 = scmp.eq.s32.totalorder %s16, 0
    %p110 = por %p108, %p109
    %p111 = scmp.ne.s32.totalorder %s97, %s98
    %p112 = scmp.eq.s32.totalorder %s17, 1
    %p113 = por %p111, %p112
    %p115 = scmp.ne.s32.totalorder %s98, %s114
    %p116 = scmp.eq.s32.totalorder %s17, 0
    %p117 = por %p115, %p116
    %s118 = ssub.s32 %s11, %s18
    %p119 = scmp.eq.s32.totalorder %s118, 0
    %s121 = sadd.s32 %s120, 1
    %s122 = scalar_select %p119, %s120, %s121
    %p125 = pneg %p119
    %p126 = scmp.eq.s32.totalorder %s11, 1
    %p127 = por %p125, %p126
    %p128 = scmp.ne.s32.totalorder %s120, %s123
    %p129 = scmp.eq.s32.totalorder %s11, 0
    %p130 = por %p128, %p129
    %p131 = scmp.ne.s32.totalorder %s120, %s123
    %p132 = scmp.eq.s32.totalorder %s16, 1
    %p133 = por %p131, %p132
    %p134 = scmp.ne.s32.totalorder %s123, %s124
    %p135 = scmp.eq.s32.totalorder %s16, 0
    %p136 = por %p134, %p135
    %p137 = scmp.ne.s32.totalorder %s123, %s124
    %p138 = scmp.eq.s32.totalorder %s17, 1
    %p139 = por %p137, %p138
    %p141 = scmp.ne.s32.totalorder %s124, %s140
    %p142 = scmp.eq.s32.totalorder %s17, 0
    %p143 = por %p141, %p142
    %p144 = scmp.le.s32.totalorder 1, %s11
    %p145 = scmp.lt.s32.totalorder %s11, 3
    %p146 = pnand %p144, %p145
    %p147 = pneg %p146
    // Predicated region
    $region9: #{forward_nchw.28} parent=5 // pred_check
      _
    $region10: #{forward_nchw.28} parent=5 // pred_check_branch
      %149 = sbr.rel (%p146) target = $region12
    $region11: #{forward_nchw.28} parent=5 // pred_region
      %s150 = ssub.s32 %s11, 1
      // Predicated region
      $region13: #{forward_nchw.28} parent=11 // pred_check
        %p151 = pneg %p58
      $region14: #{forward_nchw.28} parent=11 // pred_check_branch
        %153 = sbr.rel (%p151) target = $region16
      $region15: #{forward_nchw.28} parent=11 // pred_region
        _
      $region16: #{forward_nchw.28} parent=11 // pred_fallthru
        _
    $region12: #{forward_nchw.28} parent=5 // pred_fallthru
      _
    %p154 = scmp.lt.s32.totalorder %s11, 2
    // Predicated region
    $region17: #{forward_nchw.28} parent=5 // pred_check
      %p155 = pneg %p154
    $region18: #{forward_nchw.28} parent=5 // pred_check_branch
      %157 = sbr.rel (%p155) target = $region20
    $region19: #{forward_nchw.28} parent=5 // pred_region
      // Predicated region
      $region21: #{forward_nchw.28} parent=19 // pred_check
        %p158 = pneg %p31
      $region22: #{forward_nchw.28} parent=19 // pred_check_branch
        %160 = sbr.rel (%p158) target = $region24
      $region23: #{forward_nchw.28} parent=19 // pred_region
        %p161 = scmp.lt.s32.totalorder %s11, 1
        %s162 = scalar_select %p161, %s11, 1
        %s163 = smul.addr %s162, 4
        %s164 = smul.addr %s163, 4
        %s165 = scalar_lea.vmem %s0, %s164
      $region24: #{forward_nchw.28} parent=19 // pred_fallthru
        _
    $region20: #{forward_nchw.28} parent=5 // pred_fallthru
      _
    %p166 = scmp.le.s32.totalorder 1, %s11
    %p167 = scmp.lt.s32.totalorder %s11, 3
    %p168 = pnand %p166, %p167
    %p169 = pneg %p168
    // Predicated region
    $region25: #{forward_nchw.28} parent=5 // pred_check
      _
    $region26: #{forward_nchw.28} parent=5 // pred_check_branch
      %171 = sbr.rel (%p168) target = $region28
    $region27: #{forward_nchw.28} parent=5 // pred_region
      %s172 = ssub.s32 %s11, 1
      %p173 = scmp.lt.s32.totalorder %s16, 1
      %s174 = scalar_select %p173, %s16, 1
      %s175 = smul.addr %s174, 4
      %s176 = smul.addr %s175, 4
      %s177 = scalar_lea.vmem %s0, %s176
      %p178 = pneg %p37
      %p179 = pneg %p34
      %p180 = pneg %p58
      %p181 = pneg %p55
      %p182 = pneg %p84
      %p183 = pneg %p81
      %p184 = scmp.lt.s32.totalorder %s16, 1
      %s185 = scalar_select %p184, %s16, 1
      %s186 = smul.addr %s185, 2
      %s187 = smul.addr %s186, 4
      %s188 = scalar_lea.vmem %s2, %s187
      %p189 = pneg %p110
      %p190 = pneg %p107
      %p191 = scmp.lt.s32.totalorder %s16, 1
      %s192 = scalar_select %p191, %s16, 1
      %s193 = scalar_lea.vmem %s3, %s192
      %p194 = pneg %p136
      %p195 = pneg %p133
      %p196 = scmp.lt.s32.totalorder %s16, 1
      %s197 = scalar_select %p196, %s16, 1
      %s198 = scalar_lea.vmem %s4, %s197
      %p199 = scmp.lt.s32.totalorder %s16, 1
      %s200 = scalar_select %p199, %s16, 1
      %s201 = smul.addr %s200, 4
      %s202 = smul.addr %s201, 4
      %s203 = scalar_lea.vmem %s0, %s202
      %p204 = scmp.lt.s32.totalorder %s16, 1
      %s205 = scalar_select %p204, %s16, 1
      %s206 = smul.addr %s205, 2
      %s207 = smul.addr %s206, 4
      %s208 = scalar_lea.vmem %s2, %s207
      %p209 = scmp.lt.s32.totalorder %s16, 1
      %s210 = scalar_select %p209, %s16, 1
      %s211 = scalar_lea.vmem %s3, %s210
      %p212 = scmp.lt.s32.totalorder %s16, 1
      %s213 = scalar_select %p212, %s16, 1
      %s214 = scalar_lea.vmem %s4, %s213
      %v216 = vld [vmem:[%s203] sm:$0xff]
      %v217 = vld [vmem:[%s203 + $0x8] sm:$0xff]
      %v220 = vunpack.c.l.b16 %v216
      %v221 = vunpack.c.h.b16 %v216
      %v222 = vunpack.c.l.b16 %v217
      %v223 = vunpack.c.h.b16 %v217
      %v224 = vpack.c.b16 %v222, %v220
      %v225 = vpack.c.b16 %v223, %v221
      %v227 = vshrl.u32 %v224, 16
      %v229 = vrot.slane %v227, 7
      %v230 = vshll.u32 %v224, 16
      %v232 = vor.u32 %v229, %v230
      %v234 = vshrl.u32 %v225, 16
      %v236 = vrot.slane %v234, 7
      %v237 = vshll.u32 %v225, 16
      %v239 = vor.u32 %v236, %v237
      %vm242 = vcmask 1040384
      %vm243 = vsmask.f32 256
      %vm244 = vmand %vm242, %vm243
      %v245 = vsel %vm244, 0, %v232
      %v246 = vsel %vm244, 0, %v239
      %v247 = vrot.slane %v230, 1
      %v248 = vor.u32 %v227, %v247
      %v249 = vrot.slane %v237, 1
      %v250 = vor.u32 %v234, %v249
      %vm253 = vcmask 1047552
      %vm254 = vsmask.f32 7424
      %vm255 = vmand %vm253, %vm254
      %v256 = vsel %vm255, %v248, 0
      %v257 = vsel %vm255, %v250, 0
      %v258 = vld [vmem:[%s1] sm:$0xf]
      %v259 = vld [vmem:[%s1 + $0x4] sm:$0xf]
      %v260 = vld [vmem:[%s1 + $0x8] sm:$0xf]
      %v261 = vld [vmem:[%s1 + $0xc] sm:$0xf]
      %v262 = vld [vmem:[%s1 + $0x10] sm:$0xf]
      %v263 = vld [vmem:[%s1 + $0x14] sm:$0xf]
      %v264 = vld [vmem:[%s1 + $0x18] sm:$0xf]
      %v265 = vld [vmem:[%s1 + $0x1c] sm:$0xf]
      %v266 = vld [vmem:[%s1 + $0x20] sm:$0xf]
      %v267 = vld [vmem:[%s1 + $0x24] sm:$0xf]
      %v268 = vld [vmem:[%s1 + $0x28] sm:$0xf]
      %v269 = vld [vmem:[%s1 + $0x2c] sm:$0xf]
      %v270 = vld [vmem:[%s1 + $0x30] sm:$0xf]
      %v271 = vld [vmem:[%s1 + $0x34] sm:$0xf]
      %v272 = vld [vmem:[%s1 + $0x38] sm:$0xf]
      %v273 = vld [vmem:[%s1 + $0x3c] sm:$0xf]
      %v274 = vld [vmem:[%s1 + $0x40] sm:$0xf]
      %v275 = vld [vmem:[%s1 + $0x44] sm:$0xf]
      %v276 = vld [vmem:[%s1 + $0x48] sm:$0xf]
      %v277 = vld [vmem:[%s1 + $0x4c] sm:$0xf]
      %v278 = vld [vmem:[%s1 + $0x50] sm:$0xf]
      %v279 = vld [vmem:[%s1 + $0x54] sm:$0xf]
      %v280 = vld [vmem:[%s1 + $0x58] sm:$0xf]
      %v281 = vld [vmem:[%s1 + $0x5c] sm:$0xf]
      %v282 = vld [vmem:[%s1 + $0x60] sm:$0xf]
      %v283 = vld [vmem:[%s1 + $0x64] sm:$0xf]
      %v284 = vld [vmem:[%s1 + $0x68] sm:$0xf]
      %v285 = vld [vmem:[%s1 + $0x6c] sm:$0xf]
      %v286 = vld [vmem:[%s1 + $0x70] sm:$0xf]
      %v287 = vld [vmem:[%s1 + $0x74] sm:$0xf]
      %v288 = vld [vmem:[%s1 + $0x78] sm:$0xf]
      %v289 = vld [vmem:[%s1 + $0x7c] sm:$0xf]
      %s290 = scalar_lea.vmem %s1, 128
      %v291 = vld [vmem:[%s290] sm:$0xf]
      %v292 = vld [vmem:[%s290 + $0x4] sm:$0xf]
      %v293 = vld [vmem:[%s290 + $0x8] sm:$0xf]
      %v294 = vld [vmem:[%s290 + $0xc] sm:$0xf]
      %v295 = vld [vmem:[%s290 + $0x10] sm:$0xf]
      %v296 = vld [vmem:[%s290 + $0x14] sm:$0xf]
      %v297 = vld [vmem:[%s290 + $0x18] sm:$0xf]
      %v298 = vld [vmem:[%s290 + $0x1c] sm:$0xf]
      %v299 = vld [vmem:[%s290 + $0x20] sm:$0xf]
      %v300 = vld [vmem:[%s290 + $0x24] sm:$0xf]
      %v301 = vld [vmem:[%s290 + $0x28] sm:$0xf]
      %v302 = vld [vmem:[%s290 + $0x2c] sm:$0xf]
      %v303 = vld [vmem:[%s290 + $0x30] sm:$0xf]
      %v304 = vld [vmem:[%s290 + $0x34] sm:$0xf]
      %v305 = vld [vmem:[%s290 + $0x38] sm:$0xf]
      %v306 = vld [vmem:[%s290 + $0x3c] sm:$0xf]
      %v307 = vld [vmem:[%s290 + $0x40] sm:$0xf]
      %v308 = vld [vmem:[%s290 + $0x44] sm:$0xf]
      %v309 = vld [vmem:[%s290 + $0x48] sm:$0xf]
      %v310 = vld [vmem:[%s290 + $0x4c] sm:$0xf]
      %v311 = vld [vmem:[%s290 + $0x50] sm:$0xf]
      %v312 = vld [vmem:[%s290 + $0x54] sm:$0xf]
      %v313 = vld [vmem:[%s290 + $0x58] sm:$0xf]
      %v314 = vld [vmem:[%s290 + $0x5c] sm:$0xf]
      %v315 = vld [vmem:[%s290 + $0x60] sm:$0xf]
      %v316 = vld [vmem:[%s290 + $0x64] sm:$0xf]
      %v317 = vld [vmem:[%s290 + $0x68] sm:$0xf]
      %v318 = vld [vmem:[%s290 + $0x6c] sm:$0xf]
      %v319 = vld [vmem:[%s290 + $0x70] sm:$0xf]
      %v320 = vld [vmem:[%s290 + $0x74] sm:$0xf]
      %v321 = vld [vmem:[%s290 + $0x78] sm:$0xf]
      %v322 = vld [vmem:[%s290 + $0x7c] sm:$0xf]
      %v357 = vunpack.c.l.b16 %v291
      %v358 = vunpack.c.l.b16 %v292
      %v359 = vunpack.c.l.b16 %v293
      %v360 = vunpack.c.l.b16 %v294
      %v361 = vunpack.c.l.b16 %v295
      %v362 = vunpack.c.l.b16 %v296
      %v363 = vunpack.c.l.b16 %v297
      %v364 = vunpack.c.l.b16 %v298
      %v365 = vunpack.c.l.b16 %v299
      %v366 = vunpack.c.l.b16 %v300
      %v367 = vunpack.c.l.b16 %v301
      %v368 = vunpack.c.l.b16 %v302
      %v369 = vunpack.c.l.b16 %v303
      %v370 = vunpack.c.l.b16 %v304
      %v371 = vunpack.c.l.b16 %v305
      %v372 = vunpack.c.l.b16 %v306
      %v373 = vunpack.c.l.b16 %v307
      %v374 = vunpack.c.l.b16 %v308
      %v375 = vunpack.c.l.b16 %v309
      %v376 = vunpack.c.l.b16 %v310
      %v377 = vunpack.c.l.b16 %v311
      %v378 = vunpack.c.l.b16 %v312
      %v379 = vunpack.c.l.b16 %v313
      %v380 = vunpack.c.l.b16 %v314
      %v381 = vunpack.c.l.b16 %v315
      %v382 = vunpack.c.l.b16 %v316
      %v383 = vunpack.c.l.b16 %v317
      %v384 = vunpack.c.l.b16 %v318
      %v385 = vunpack.c.l.b16 %v319
      %v386 = vunpack.c.l.b16 %v320
      %v387 = vunpack.c.l.b16 %v321
      %v388 = vunpack.c.l.b16 %v322
      %v389 = vpack.c.b16 %v358, %v357
      %v390 = vpack.c.b16 %v360, %v359
      %v391 = vpack.c.b16 %v362, %v361
      %v392 = vpack.c.b16 %v364, %v363
      %v393 = vpack.c.b16 %v366, %v365
      %v394 = vpack.c.b16 %v368, %v367
      %v395 = vpack.c.b16 %v370, %v369
      %v396 = vpack.c.b16 %v372, %v371
      %v397 = vpack.c.b16 %v374, %v373
      %v398 = vpack.c.b16 %v376, %v375
      %v399 = vpack.c.b16 %v378, %v377
      %v400 = vpack.c.b16 %v380, %v379
      %v401 = vpack.c.b16 %v382, %v381
      %v402 = vpack.c.b16 %v384, %v383
      %v403 = vpack.c.b16 %v386, %v385
      %v404 = vpack.c.b16 %v388, %v387
      %421 = vmatprep.subr.bf16.mxu0 0
      %422 = vmatpush1.bf16.msra.mxu0 %v396
      %423 = vmatprep.subr.bf16.mxu0 0
      %424 = vmatpush1.bf16.msra.mxu0 %v395
      %425 = vmatprep.subr.bf16.mxu0 0
      %426 = vmatpush1.bf16.msra.mxu0 %v394
      %427 = vmatprep.subr.bf16.mxu0 0
      %428 = vmatpush1.bf16.msra.mxu0 %v393
      %429 = vmatprep.subr.bf16.mxu0 0
      %430 = vmatpush1.bf16.msra.mxu0 %v392
      %431 = vmatprep.subr.bf16.mxu0 0
      %432 = vmatpush1.bf16.msra.mxu0 %v391
      %433 = vmatprep.subr.bf16.mxu0 0
      %434 = vmatpush1.bf16.msra.mxu0 %v390
      %435 = vmatprep.subr.bf16.mxu0 0
      %436 = vmatpush1.bf16.msra.mxu0 %v389
      %437 = vmatprep.subr.bf16.mxu0 0
      %438 = vmatpush2.bf16.msra.mxu0 %v404
      %439 = vmatprep.subr.bf16.mxu0 0
      %440 = vmatpush2.bf16.msra.mxu0 %v403
      %441 = vmatprep.subr.bf16.mxu0 0
      %442 = vmatpush2.bf16.msra.mxu0 %v402
      %443 = vmatprep.subr.bf16.mxu0 0
      %444 = vmatpush2.bf16.msra.mxu0 %v401
      %445 = vmatprep.subr.bf16.mxu0 0
      %446 = vmatpush2.bf16.msra.mxu0 %v400
      %447 = vmatprep.subr.bf16.mxu0 0
      %448 = vmatpush2.bf16.msra.mxu0 %v399
      %449 = vmatprep.subr.bf16.mxu0 0
      %450 = vmatpush2.bf16.msra.mxu0 %v398
      %451 = vmatprep.subr.bf16.mxu0 0
      %452 = vmatpush2.bf16.msra.mxu0 %v397
      %453 = vmatprep.mubr.bf16.mxu0 %v225
      %454 = vmatmul.mubr.bf16.gmra.mxu0 %v224
      %v455 = vpop.f32.mrf.mxu0
      %v456 = vadd.f32 0.0, %v455
      %v457 = vpop.f32.mrf.mxu0
      %v458 = vpop.f32.mrf.mxu0
      %v459 = vadd.f32 0.0, %v458
      %v460 = vpop.f32.mrf.mxu0
      %461 = vdwg.mxu0
      %v494 = vunpack.c.l.b16 %v258
      %v495 = vunpack.c.l.b16 %v259
      %v496 = vunpack.c.l.b16 %v260
      %v497 = vunpack.c.l.b16 %v261
      %v498 = vunpack.c.l.b16 %v262
      %v499 = vunpack.c.l.b16 %v263
      %v500 = vunpack.c.l.b16 %v264
      %v501 = vunpack.c.l.b16 %v265
      %v502 = vunpack.c.l.b16 %v266
      %v503 = vunpack.c.l.b16 %v267
      %v504 = vunpack.c.l.b16 %v268
      %v505 = vunpack.c.l.b16 %v269
      %v506 = vunpack.c.l.b16 %v270
      %v507 = vunpack.c.l.b16 %v271
      %v508 = vunpack.c.l.b16 %v272
      %v509 = vunpack.c.l.b16 %v273
      %v510 = vunpack.c.l.b16 %v274
      %v511 = vunpack.c.l.b16 %v275
      %v512 = vunpack.c.l.b16 %v276
      %v513 = vunpack.c.l.b16 %v277
      %v514 = vunpack.c.l.b16 %v278
      %v515 = vunpack.c.l.b16 %v279
      %v516 = vunpack.c.l.b16 %v280
      %v517 = vunpack.c.l.b16 %v281
      %v518 = vunpack.c.l.b16 %v282
      %v519 = vunpack.c.l.b16 %v283
      %v520 = vunpack.c.l.b16 %v284
      %v521 = vunpack.c.l.b16 %v285
      %v522 = vunpack.c.l.b16 %v286
      %v523 = vunpack.c.l.b16 %v287
      %v524 = vunpack.c.l.b16 %v288
      %v525 = vunpack.c.l.b16 %v289
      %v526 = vpack.c.b16 %v495, %v494
      %v527 = vpack.c.b16 %v497, %v496
      %v528 = vpack.c.b16 %v499, %v498
      %v529 = vpack.c.b16 %v501, %v500
      %v530 = vpack.c.b16 %v503, %v502
      %v531 = vpack.c.b16 %v505, %v504
      %v532 = vpack.c.b16 %v507, %v506
      %v533 = vpack.c.b16 %v509, %v508
      %v534 = vpack.c.b16 %v511, %v510
      %v535 = vpack.c.b16 %v513, %v512
      %v536 = vpack.c.b16 %v515, %v514
      %v537 = vpack.c.b16 %v517, %v516
      %v538 = vpack.c.b16 %v519, %v518
      %v539 = vpack.c.b16 %v521, %v520
      %v540 = vpack.c.b16 %v523, %v522
      %v541 = vpack.c.b16 %v525, %v524
      %558 = vmatprep.subr.bf16.mxu0 0
      %559 = vmatpush1.bf16.msra.mxu0 %v533
      %560 = vmatprep.subr.bf16.mxu0 0
      %561 = vmatpush1.bf16.msra.mxu0 %v532
      %562 = vmatprep.subr.bf16.mxu0 0
      %563 = vmatpush1.bf16.msra.mxu0 %v531
      %564 = vmatprep.subr.bf16.mxu0 0
      %565 = vmatpush1.bf16.msra.mxu0 %v530
      %566 = vmatprep.subr.bf16.mxu0 0
      %567 = vmatpush1.bf16.msra.mxu0 %v529
      %568 = vmatprep.subr.bf16.mxu0 0
      %569 = vmatpush1.bf16.msra.mxu0 %v528
      %570 = vmatprep.subr.bf16.mxu0 0
      %571 = vmatpush1.bf16.msra.mxu0 %v527
      %572 = vmatprep.subr.bf16.mxu0 0
      %573 = vmatpush1.bf16.msra.mxu0 %v526
      %574 = vmatprep.subr.bf16.mxu0 0
      %575 = vmatpush2.bf16.msra.mxu0 %v541
      %576 = vmatprep.subr.bf16.mxu0 0
      %577 = vmatpush2.bf16.msra.mxu0 %v540
      %578 = vmatprep.subr.bf16.mxu0 0
      %579 = vmatpush2.bf16.msra.mxu0 %v539
      %580 = vmatprep.subr.bf16.mxu0 0
      %581 = vmatpush2.bf16.msra.mxu0 %v538
      %582 = vmatprep.subr.bf16.mxu0 0
      %583 = vmatpush2.bf16.msra.mxu0 %v537
      %584 = vmatprep.subr.bf16.mxu0 0
      %585 = vmatpush2.bf16.msra.mxu0 %v536
      %586 = vmatprep.subr.bf16.mxu0 0
      %587 = vmatpush2.bf16.msra.mxu0 %v535
      %588 = vmatprep.subr.bf16.mxu0 0
      %589 = vmatpush2.bf16.msra.mxu0 %v534
      %590 = vmatprep.mubr.bf16.mxu0 %v246
      %591 = vmatmul.mubr.bf16.gmra.mxu0 %v245
      %v592 = vpop.f32.mrf.mxu0
      %v593 = vadd.f32 %v456, %v592
      %v594 = vpop.f32.mrf.mxu0
      %v595 = vpop.f32.mrf.mxu0
      %v596 = vadd.f32 %v459, %v595
      %v597 = vpop.f32.mrf.mxu0
      %598 = vdwg.mxu0
      %s599 = scalar_lea.vmem %s1, 256
      %v600 = vld [vmem:[%s599] sm:$0xf]
      %v601 = vld [vmem:[%s599 + $0x4] sm:$0xf]
      %v602 = vld [vmem:[%s599 + $0x8] sm:$0xf]
      %v603 = vld [vmem:[%s599 + $0xc] sm:$0xf]
      %v604 = vld [vmem:[%s599 + $0x10] sm:$0xf]
      %v605 = vld [vmem:[%s599 + $0x14] sm:$0xf]
      %v606 = vld [vmem:[%s599 + $0x18] sm:$0xf]
      %v607 = vld [vmem:[%s599 + $0x1c] sm:$0xf]
      %v608 = vld [vmem:[%s599 + $0x20] sm:$0xf]
      %v609 = vld [vmem:[%s599 + $0x24] sm:$0xf]
      %v610 = vld [vmem:[%s599 + $0x28] sm:$0xf]
      %v611 = vld [vmem:[%s599 + $0x2c] sm:$0xf]
      %v612 = vld [vmem:[%s599 + $0x30] sm:$0xf]
      %v613 = vld [vmem:[%s599 + $0x34] sm:$0xf]
      %v614 = vld [vmem:[%s599 + $0x38] sm:$0xf]
      %v615 = vld [vmem:[%s599 + $0x3c] sm:$0xf]
      %v616 = vld [vmem:[%s599 + $0x40] sm:$0xf]
      %v617 = vld [vmem:[%s599 + $0x44] sm:$0xf]
      %v618 = vld [vmem:[%s599 + $0x48] sm:$0xf]
      %v619 = vld [vmem:[%s599 + $0x4c] sm:$0xf]
      %v620 = vld [vmem:[%s599 + $0x50] sm:$0xf]
      %v621 = vld [vmem:[%s599 + $0x54] sm:$0xf]
      %v622 = vld [vmem:[%s599 + $0x58] sm:$0xf]
      %v623 = vld [vmem:[%s599 + $0x5c] sm:$0xf]
      %v624 = vld [vmem:[%s599 + $0x60] sm:$0xf]
      %v625 = vld [vmem:[%s599 + $0x64] sm:$0xf]
      %v626 = vld [vmem:[%s599 + $0x68] sm:$0xf]
      %v627 = vld [vmem:[%s599 + $0x6c] sm:$0xf]
      %v628 = vld [vmem:[%s599 + $0x70] sm:$0xf]
      %v629 = vld [vmem:[%s599 + $0x74] sm:$0xf]
      %v630 = vld [vmem:[%s599 + $0x78] sm:$0xf]
      %v631 = vld [vmem:[%s599 + $0x7c] sm:$0xf]
      %v664 = vunpack.c.l.b16 %v600
      %v665 = vunpack.c.l.b16 %v601
      %v666 = vunpack.c.l.b16 %v602
      %v667 = vunpack.c.l.b16 %v603
      %v668 = vunpack.c.l.b16 %v604
      %v669 = vunpack.c.l.b16 %v605
      %v670 = vunpack.c.l.b16 %v606
      %v671 = vunpack.c.l.b16 %v607
      %v672 = vunpack.c.l.b16 %v608
      %v673 = vunpack.c.l.b16 %v609
      %v674 = vunpack.c.l.b16 %v610
      %v675 = vunpack.c.l.b16 %v611
      %v676 = vunpack.c.l.b16 %v612
      %v677 = vunpack.c.l.b16 %v613
      %v678 = vunpack.c.l.b16 %v614
      %v679 = vunpack.c.l.b16 %v615
      %v680 = vunpack.c.l.b16 %v616
      %v681 = vunpack.c.l.b16 %v617
      %v682 = vunpack.c.l.b16 %v618
      %v683 = vunpack.c.l.b16 %v619
      %v684 = vunpack.c.l.b16 %v620
      %v685 = vunpack.c.l.b16 %v621
      %v686 = vunpack.c.l.b16 %v622
      %v687 = vunpack.c.l.b16 %v623
      %v688 = vunpack.c.l.b16 %v624
      %v689 = vunpack.c.l.b16 %v625
      %v690 = vunpack.c.l.b16 %v626
      %v691 = vunpack.c.l.b16 %v627
      %v692 = vunpack.c.l.b16 %v628
      %v693 = vunpack.c.l.b16 %v629
      %v694 = vunpack.c.l.b16 %v630
      %v695 = vunpack.c.l.b16 %v631
      %v696 = vpack.c.b16 %v665, %v664
      %v697 = vpack.c.b16 %v667, %v666
      %v698 = vpack.c.b16 %v669, %v668
      %v699 = vpack.c.b16 %v671, %v670
      %v700 = vpack.c.b16 %v673, %v672
      %v701 = vpack.c.b16 %v675, %v674
      %v702 = vpack.c.b16 %v677, %v676
      %v703 = vpack.c.b16 %v679, %v678
      %v704 = vpack.c.b16 %v681, %v680
      %v705 = vpack.c.b16 %v683, %v682
      %v706 = vpack.c.b16 %v685, %v684
      %v707 = vpack.c.b16 %v687, %v686
      %v708 = vpack.c.b16 %v689, %v688
      %v709 = vpack.c.b16 %v691, %v690
      %v710 = vpack.c.b16 %v693, %v692
      %v711 = vpack.c.b16 %v695, %v694
      %728 = vmatprep.subr.bf16.mxu0 0
      %729 = vmatpush1.bf16.msra.mxu0 %v703
      %730 = vmatprep.subr.bf16.mxu0 0
      %731 = vmatpush1.bf16.msra.mxu0 %v702
      %732 = vmatprep.subr.bf16.mxu0 0
      %733 = vmatpush1.bf16.msra.mxu0 %v701
      %734 = vmatprep.subr.bf16.mxu0 0
      %735 = vmatpush1.bf16.msra.mxu0 %v700
      %736 = vmatprep.subr.bf16.mxu0 0
      %737 = vmatpush1.bf16.msra.mxu0 %v699
      %738 = vmatprep.subr.bf16.mxu0 0
      %739 = vmatpush1.bf16.msra.mxu0 %v698
      %740 = vmatprep.subr.bf16.mxu0 0
      %741 = vmatpush1.bf16.msra.mxu0 %v697
      %742 = vmatprep.subr.bf16.mxu0 0
      %743 = vmatpush1.bf16.msra.mxu0 %v696
      %744 = vmatprep.subr.bf16.mxu0 0
      %745 = vmatpush2.bf16.msra.mxu0 %v711
      %746 = vmatprep.subr.bf16.mxu0 0
      %747 = vmatpush2.bf16.msra.mxu0 %v710
      %748 = vmatprep.subr.bf16.mxu0 0
      %749 = vmatpush2.bf16.msra.mxu0 %v709
      %750 = vmatprep.subr.bf16.mxu0 0
      %751 = vmatpush2.bf16.msra.mxu0 %v708
      %752 = vmatprep.subr.bf16.mxu0 0
      %753 = vmatpush2.bf16.msra.mxu0 %v707
      %754 = vmatprep.subr.bf16.mxu0 0
      %755 = vmatpush2.bf16.msra.mxu0 %v706
      %756 = vmatprep.subr.bf16.mxu0 0
      %757 = vmatpush2.bf16.msra.mxu0 %v705
      %758 = vmatprep.subr.bf16.mxu0 0
      %759 = vmatpush2.bf16.msra.mxu0 %v704
      %760 = vmatprep.mubr.bf16.mxu0 %v257
      %761 = vmatmul.mubr.bf16.gmra.mxu0 %v256
      %v762 = vpop.f32.mrf.mxu0
      %v763 = vadd.f32 0.0, %v762
      %v764 = vpop.f32.mrf.mxu0
      %v765 = vpop.f32.mrf.mxu0
      %v766 = vadd.f32 0.0, %v765
      %v767 = vpop.f32.mrf.mxu0
      %768 = vdwg.mxu0
      %v769 = vadd.f32 %v593, %v763
      %v770 = vadd.f32 %v596, %v766
      %v771 = vpack.c.bf16 %v770, %v769
      %v773 = vunpack.c.l.b16 %v771
      %v774 = vunpack.c.h.b16 %v771
      %v775 = vpack.c.b16 %v773, %v773
      %v776 = vpack.c.b16 %v774, %v774
      %779 = vst [vmem:[%s208] sm:$0xf] %v775
      %780 = vst [vmem:[%s208 + $0x4] sm:$0xf] %v776
      %v781 = vadd.f32 %v769, %v770
      %v782 = vrot.slane %v781, 4
      %v783 = vadd.f32 %v781, %v782
      %v784 = vrot.slane %v783, 2
      %v785 = vadd.f32 %v783, %v784
      %v786 = vrot.slane %v785, 1
      %v787 = vadd.f32 %v785, %v786
      %788 = vst [vmem:[%s211] sm:$0x1] %v787
      %v789 = vmul.f32 %v769, %v769
      %v790 = vmul.f32 %v770, %v770
      %v791 = vadd.f32 %v789, %v790
      %v792 = vrot.slane %v791, 4
      %v793 = vadd.f32 %v791, %v792
      %v794 = vrot.slane %v793, 2
      %v795 = vadd.f32 %v793, %v794
      %v796 = vrot.slane %v795, 1
      %v797 = vadd.f32 %v795, %v796
      %798 = vst [vmem:[%s214] sm:$0x1] %v797
      %p799 = scmp.lt.s32.totalorder %s16, 1
      %s800 = scalar_select %p799, %s16, 1
      %s801 = smul.addr %s800, 2
      %s802 = smul.addr %s801, 4
      %s803 = scalar_lea.vmem %s2, %s802
      %p804 = scmp.lt.s32.totalorder %s16, 1
      %s805 = scalar_select %p804, %s16, 1
      %s806 = scalar_lea.vmem %s3, %s805
      %p807 = scmp.lt.s32.totalorder %s16, 1
      %s808 = scalar_select %p807, %s16, 1
      %s809 = scalar_lea.vmem %s4, %s808
      // Predicated region
      $region29: #{forward_nchw.28} parent=27 // pred_check
        %p810 = pneg %p81
      $region30: #{forward_nchw.28} parent=27 // pred_check_branch
        %812 = sbr.rel (%p810) target = $region32
      $region31: #{forward_nchw.28} parent=27 // pred_region
        _
      $region32: #{forward_nchw.28} parent=27 // pred_fallthru
        _
      // Predicated region
      $region33: #{forward_nchw.28} parent=27 // pred_check
        %p813 = pneg %p107
      $region34: #{forward_nchw.28} parent=27 // pred_check_branch
        %815 = sbr.rel (%p813) target = $region36
      $region35: #{forward_nchw.28} parent=27 // pred_region
        _
      $region36: #{forward_nchw.28} parent=27 // pred_fallthru
        _
      // Predicated region
      $region37: #{forward_nchw.28} parent=27 // pred_check
        %p816 = pneg %p133
      $region38: #{forward_nchw.28} parent=27 // pred_check_branch
        %818 = sbr.rel (%p816) target = $region40
      $region39: #{forward_nchw.28} parent=27 // pred_region
        _
      $region40: #{forward_nchw.28} parent=27 // pred_fallthru
        _
    $region28: #{forward_nchw.28} parent=5 // pred_fallthru
      _
    %p819 = scmp.le.s32.totalorder 2, %s11
    // Predicated region
    $region41: #{forward_nchw.28} parent=5 // pred_check
      %p820 = pneg %p819
    $region42: #{forward_nchw.28} parent=5 // pred_check_branch
      %822 = sbr.rel (%p820) target = $region44
    $region43: #{forward_nchw.28} parent=5 // pred_region
      %s823 = ssub.s32 %s11, 2
      // Predicated region
      $region45: #{forward_nchw.28} parent=43 // pred_check
        %p824 = pneg %p87
      $region46: #{forward_nchw.28} parent=43 // pred_check_branch
        %826 = sbr.rel (%p824) target = $region48
      $region47: #{forward_nchw.28} parent=43 // pred_region
        %p827 = scmp.lt.s32.totalorder %s17, 1
        %s828 = scalar_select %p827, %s17, 1
        %s829 = smul.addr %s828, 2
        %s830 = smul.addr %s829, 4
        %s831 = scalar_lea.vmem %s2, %s830
      $region48: #{forward_nchw.28} parent=43 // pred_fallthru
        _
      // Predicated region
      $region49: #{forward_nchw.28} parent=43 // pred_check
        %p832 = pneg %p113
      $region50: #{forward_nchw.28} parent=43 // pred_check_branch
        %834 = sbr.rel (%p832) target = $region52
      $region51: #{forward_nchw.28} parent=43 // pred_region
        %p835 = scmp.lt.s32.totalorder %s17, 1
        %s836 = scalar_select %p835, %s17, 1
        %s837 = scalar_lea.vmem %s3, %s836
      $region52: #{forward_nchw.28} parent=43 // pred_fallthru
        _
      // Predicated region
      $region53: #{forward_nchw.28} parent=43 // pred_check
        %p838 = pneg %p139
      $region54: #{forward_nchw.28} parent=43 // pred_check_branch
        %840 = sbr.rel (%p838) target = $region56
      $region55: #{forward_nchw.28} parent=43 // pred_region
        %p841 = scmp.lt.s32.totalorder %s17, 1
        %s842 = scalar_select %p841, %s17, 1
        %s843 = scalar_lea.vmem %s4, %s842
      $region56: #{forward_nchw.28} parent=43 // pred_fallthru
        _
    $region44: #{forward_nchw.28} parent=5 // pred_fallthru
      _
  $region6: #{forward_nchw.28} parent=0 // loop_footer
    %s15 = sadd.s32 1, %s11
  $region7: #{forward_nchw.28} parent=0 // loop_footer_branch
    %10 = sbr.rel target = $region3
  $region8: #{forward_nchw.28} parent=0 // loop_exit
    _

</llo_original>
